<compile_context>
chip_gen: v7x
topology: tpu7x:2x2x1
jax: 0.10.0
libtpu: 0.0.40
codegen_flags: <defaults>
</compile_context>

<pallas_src>
import math

import jax
import jax.numpy as jnp
from jax.experimental import pallas as pl
from jax.experimental.pallas import tpu as pltpu

# ----------------------------- config ---------------------------------------
VOCAB = 100
TYPE_VOCAB = 2
MAX_POS = 16
HIDDEN = 32
N_LAYERS = 2
N_HEADS = 2
HEAD_DIM = HIDDEN // N_HEADS
INTERMEDIATE = 64
LN_EPS = 1e-12
BATCH = 2
SEQ = 8


# ----------------------------- helpers --------------------------------------
def _gelu(x):
    # TODO(synk): HF BERT's default act is the erf-GELU; tanh approximation used
    # here (max abs diff ~1e-3) to avoid relying on an erf lowering in Mosaic.
    c = math.sqrt(2.0 / math.pi)
    return 0.5 * x * (1.0 + jnp.tanh(c * (x + 0.044715 * x * x * x)))


def _layernorm(x, g, b):
    mu = jnp.mean(x, axis=-1, keepdims=True)
    var = jnp.mean((x - mu) ** 2, axis=-1, keepdims=True)
    return (x - mu) * jax.lax.rsqrt(var + LN_EPS) * g + b


# ----------------------------- fused Pallas kernel ---------------------------
def _fused_bert_kernel(emb_ref, mask_ref, eg_ref, eb_ref,
                       wqkv_ref, bqkv_ref, wo_ref, bo_ref,
                       ln1g_ref, ln1b_ref, w1_ref, b1_ref,
                       w2_ref, b2_ref, ln2g_ref, ln2b_ref,
                       rw_ref, rb_ref, out_ref):
    B, S = mask_ref.shape
    scale = 1.0 / math.sqrt(HEAD_DIM)

    mask = mask_ref[...]                                   # [B, S] additive bias
    h = _layernorm(emb_ref[...], eg_ref[...], eb_ref[...]) # [B*S, H], VMEM-resident

    for l in range(N_LAYERS):                              # unrolled (N_LAYERS=2)
        # --- fused QKV projection: one [B*S, H] @ [H, 3H] matmul ---
        qkv = jnp.dot(h, wqkv_ref[l],
                      preferred_element_type=jnp.float32) + bqkv_ref[l]
        q = qkv[:, 0 * HIDDEN:1 * HIDDEN]
        k = qkv[:, 1 * HIDDEN:2 * HIDDEN]
        v = qkv[:, 2 * HIDDEN:3 * HIDDEN]

        # --- attention: per (batch, head) 8x16 tiles, fully on-chip ---
        batch_outs = []
        for b in range(B):
            r0 = b * S
            bias = mask[b:b + 1, :]                        # [1, S] -> bcast over queries
            head_outs = []
            for hh in range(N_HEADS):
                c0 = hh * HEAD_DIM
                qh = q[r0:r0 + S, c0:c0 + HEAD_DIM]        # [S, Dh]
                kh = k[r0:r0 + S, c0:c0 + HEAD_DIM]
                vh = v[r0:r0 + S, c0:c0 + HEAD_DIM]
                s = jax.lax.dot_general(
                    qh, kh, (((1,), (1,)), ((), ())),
                    preferred_element_type=jnp.float32) * scale + bias
                m = jnp.max(s, axis=-1, keepdims=True)
                p = jnp.exp(s - m)
                p = p * pl.reciprocal(jnp.sum(p, axis=-1, keepdims=True),
                                      approx=True)
                head_outs.append(jnp.dot(p, vh,
                                         preferred_element_type=jnp.float32))
            batch_outs.append(jnp.concatenate(head_outs, axis=-1))   # [S, H]
        attn = jnp.concatenate(batch_outs, axis=0)                   # [B*S, H]

        attn_out = jnp.dot(attn, wo_ref[l],
                           preferred_element_type=jnp.float32) + bo_ref[l]
        h = _layernorm(h + attn_out, ln1g_ref[l], ln1b_ref[l])

        # --- feed-forward ---
        ffn = jnp.dot(h, w1_ref[l],
                      preferred_element_type=jnp.float32) + b1_ref[l]
        ffn = _gelu(ffn)
        ffn = jnp.dot(ffn, w2_ref[l],
                      preferred_element_type=jnp.float32) + b2_ref[l]
        h = _layernorm(h + ffn, ln2g_ref[l], ln2b_ref[l])

    # --- regression head on the [CLS] rows (row b*S is batch b's CLS) ---
    cls = jnp.concatenate([h[b * S:b * S + 1, :] for b in range(B)], axis=0)  # [B, H]
    out_ref[...] = jnp.dot(cls, rw_ref[...],
                           preferred_element_type=jnp.float32) + rb_ref[...]


def fused_forward(emb, mask_bias, p):
    """emb: [B*S, H] f32, mask_bias: [B, S] f32 (0 / -1e9). Returns [B, 1]."""
    B = mask_bias.shape[0]
    args = (emb, mask_bias, p["emb_ln_g"], p["emb_ln_b"],
            p["wqkv"], p["bqkv"], p["wo"], p["bo"],
            p["ln1_g"], p["ln1_b"], p["w1"], p["b1"],
            p["w2"], p["b2"], p["ln2_g"], p["ln2_b"],
            p["reg_w"], p["reg_b"])
    return pl.pallas_call(
        _fused_bert_kernel,
        out_shape=jax.ShapeDtypeStruct((B, 1), jnp.float32),
        in_specs=[pl.BlockSpec(memory_space=pltpu.MemorySpace.VMEM)
                  for _ in args],
        out_specs=pl.BlockSpec(memory_space=pltpu.MemorySpace.VMEM),
    )(*args)


# ----------------------------- parameters -----------------------------------
def init_params(key):
    def nrm(k, shape, std=0.02):
        return (std * jax.random.normal(k, shape)).astype(jnp.float32)

    keys = iter(jax.random.split(key, 16))
    p = {
        "word_emb": nrm(next(keys), (VOCAB, HIDDEN)),
        "pos_emb": nrm(next(keys), (MAX_POS, HIDDEN)),
        "type_emb": nrm(next(keys), (TYPE_VOCAB, HIDDEN)),
        "emb_ln_g": jnp.ones((1, HIDDEN), jnp.float32),
        "emb_ln_b": jnp.zeros((1, HIDDEN), jnp.float32),
        # per-layer weights stacked with a leading layer axis; Wq/Wk/Wv fused
        "wqkv": nrm(next(keys), (N_LAYERS, HIDDEN, 3 * HIDDEN)),
        "bqkv": jnp.zeros((N_LAYERS, 1, 3 * HIDDEN), jnp.float32),
        "wo": nrm(next(keys), (N_LAYERS, HIDDEN, HIDDEN)),
        "bo": jnp.zeros((N_LAYERS, 1, HIDDEN), jnp.float32),
        "ln1_g": jnp.ones((N_LAYERS, 1, HIDDEN), jnp.float32),
        "ln1_b": jnp.zeros((N_LAYERS, 1, HIDDEN), jnp.float32),
        "w1": nrm(next(keys), (N_LAYERS, HIDDEN, INTERMEDIATE)),
        "b1": jnp.zeros((N_LAYERS, 1, INTERMEDIATE), jnp.float32),
        "w2": nrm(next(keys), (N_LAYERS, INTERMEDIATE, HIDDEN)),
        "b2": jnp.zeros((N_LAYERS, 1, HIDDEN), jnp.float32),
        "ln2_g": jnp.ones((N_LAYERS, 1, HIDDEN), jnp.float32),
        "ln2_b": jnp.zeros((N_LAYERS, 1, HIDDEN), jnp.float32),
        "reg_w": nrm(next(keys), (HIDDEN, 1)),
        "reg_b": jnp.zeros((1, 1), jnp.float32),
    }
    return p


# ----------------------------- forward pass ----------------------------------
def regression_model_forward(params, input_ids, attention_mask=None, token_type_ids=None):
    B, S = input_ids.shape
    if attention_mask is None:
        attention_mask = jnp.ones((B, S), jnp.int32)
    if token_type_ids is None:
        token_type_ids = jnp.zeros((B, S), jnp.int32)

    # embedding gathers are XLA glue; everything else is the fused Pallas kernel
    emb = (jnp.take(params["word_emb"], input_ids, axis=0)
           + params["pos_emb"][None, :S, :]
           + jnp.take(params["type_emb"], token_type_ids, axis=0)).reshape(B * S, HIDDEN)
    mask_bias = (1.0 - attention_mask.astype(jnp.float32)) * -1e9      # [B, S]
    return fused_forward(emb, mask_bias, params)


# ----------------------------- pure-JAX reference ----------------------------
def _reference_forward(params, input_ids, attention_mask, token_type_ids):
    B, S = input_ids.shape
    emb = (jnp.take(params["word_emb"], input_ids, axis=0)
           + params["pos_emb"][None, :S, :]
           + jnp.take(params["type_emb"], token_type_ids, axis=0)).reshape(B * S, HIDDEN)
    h = _layernorm(emb, params["emb_ln_g"], params["emb_ln_b"])
    bias = (1.0 - attention_mask.astype(jnp.float32)) * -1e9           # [B, S]
    for l in range(N_LAYERS):
        qkv = h @ params["wqkv"][l] + params["bqkv"][l]
        q, k, v = jnp.split(qkv, 3, axis=-1)

        def heads(t):
            return t.reshape(B, S, N_HEADS, HEAD_DIM).transpose(0, 2, 1, 3)

        s = jnp.einsum("bhqd,bhkd->bhqk", heads(q), heads(k)) / math.sqrt(HEAD_DIM)
        s = s + bias[:, None, None, :]
        p = jax.nn.softmax(s, axis=-1)
        o = jnp.einsum("bhqk,bhkd->bhqd", p, heads(v)).transpose(0, 2, 1, 3)
        o = o.reshape(B * S, HIDDEN)
        h = _layernorm(h + o @ params["wo"][l] + params["bo"][l],
                       params["ln1_g"][l], params["ln1_b"][l])
        f = _gelu(h @ params["w1"][l] + params["b1"][l]) @ params["w2"][l] + params["b2"][l]
        h = _layernorm(h + f, params["ln2_g"][l], params["ln2_b"][l])
    cls = h.reshape(B, S, HIDDEN)[:, 0, :]
    return cls @ params["reg_w"] + params["reg_b"]


# ----------------------------- main ------------------------------------------
if __name__ == "__main__":
    key = jax.random.PRNGKey(0)
    pkey, dkey = jax.random.split(key)
    params = init_params(pkey)

    input_ids = jax.random.randint(dkey, (BATCH, SEQ), 0, VOCAB, dtype=jnp.int32)
    attention_mask = jnp.ones((BATCH, SEQ), jnp.int32).at[1, SEQ - 2:].set(0)
    token_type_ids = jnp.zeros((BATCH, SEQ), jnp.int32)

    score = jax.jit(regression_model_forward)(params, input_ids, attention_mask, token_type_ids)
    score = jax.block_until_ready(score)
    assert score.shape == (BATCH, 1) and score.dtype == jnp.float32

    ref = jax.block_until_ready(
        _reference_forward(params, input_ids, attention_mask, token_type_ids))
    assert jnp.allclose(score, ref, rtol=5e-2, atol=5e-3), (score, ref)

    print("KERNEL_OK")
</pallas_src>

<mosaic_0001>
module attributes {stable_mosaic.version = 11 : i64} {
  func.func @_fused_bert_kernel(%arg0: memref<16x32xf32, #tpu.memory_space<vmem>>, %arg1: memref<2x8xf32, #tpu.memory_space<vmem>>, %arg2: memref<1x32xf32, #tpu.memory_space<vmem>>, %arg3: memref<1x32xf32, #tpu.memory_space<vmem>>, %arg4: memref<2x32x96xf32, #tpu.memory_space<vmem>>, %arg5: memref<2x1x96xf32, #tpu.memory_space<vmem>>, %arg6: memref<2x32x32xf32, #tpu.memory_space<vmem>>, %arg7: memref<2x1x32xf32, #tpu.memory_space<vmem>>, %arg8: memref<2x1x32xf32, #tpu.memory_space<vmem>>, %arg9: memref<2x1x32xf32, #tpu.memory_space<vmem>>, %arg10: memref<2x32x64xf32, #tpu.memory_space<vmem>>, %arg11: memref<2x1x64xf32, #tpu.memory_space<vmem>>, %arg12: memref<2x64x32xf32, #tpu.memory_space<vmem>>, %arg13: memref<2x1x32xf32, #tpu.memory_space<vmem>>, %arg14: memref<2x1x32xf32, #tpu.memory_space<vmem>>, %arg15: memref<2x1x32xf32, #tpu.memory_space<vmem>>, %arg16: memref<32x1xf32, #tpu.memory_space<vmem>>, %arg17: memref<1x1xf32, #tpu.memory_space<vmem>>, %arg18: memref<2x1xf32, #tpu.memory_space<vmem>>) attributes {dimension_semantics = [], scalar_prefetch = 0 : i64, scratch_operands = 0 : i64, tpu.core_type = #tpu.core_type<tc>} {
    %c0 = arith.constant 0 : index
    %c0_0 = arith.constant 0 : index
    %0 = vector.load %arg1[%c0, %c0_0] : memref<2x8xf32, #tpu.memory_space<vmem>>, vector<2x8xf32>
    %c0_1 = arith.constant 0 : index
    %c0_2 = arith.constant 0 : index
    %1 = vector.load %arg0[%c0_1, %c0_2] : memref<16x32xf32, #tpu.memory_space<vmem>>, vector<16x32xf32>
    %c0_3 = arith.constant 0 : index
    %c0_4 = arith.constant 0 : index
    %2 = vector.load %arg2[%c0_3, %c0_4] : memref<1x32xf32, #tpu.memory_space<vmem>>, vector<1x32xf32>
    %c0_5 = arith.constant 0 : index
    %c0_6 = arith.constant 0 : index
    %3 = vector.load %arg3[%c0_5, %c0_6] : memref<1x32xf32, #tpu.memory_space<vmem>>, vector<1x32xf32>
    %cst = arith.constant dense<0.000000e+00> : vector<16xf32>
    %4 = vector.multi_reduction <add>, %1, %cst [1] : vector<16x32xf32> to vector<16xf32>
    %5 = vector.shape_cast %4 : vector<16xf32> to vector<16x1xf32>
    %cst_7 = arith.constant 3.200000e+01 : f32
    %6 = vector.broadcast %cst_7 : f32 to vector<16x1xf32>
    %7 = arith.divf %5, %6 : vector<16x1xf32>
    %8 = vector.broadcast %7 : vector<16x1xf32> to vector<16x32xf32>
    %9 = arith.subf %1, %8 : vector<16x32xf32>
    %10 = arith.mulf %9, %9 : vector<16x32xf32>
    %cst_8 = arith.constant dense<0.000000e+00> : vector<16xf32>
    %11 = vector.multi_reduction <add>, %10, %cst_8 [1] : vector<16x32xf32> to vector<16xf32>
    %12 = vector.shape_cast %11 : vector<16xf32> to vector<16x1xf32>
    %cst_9 = arith.constant 3.200000e+01 : f32
    %13 = vector.broadcast %cst_9 : f32 to vector<16x1xf32>
    %14 = arith.divf %12, %13 : vector<16x1xf32>
    %15 = vector.broadcast %7 : vector<16x1xf32> to vector<16x32xf32>
    %16 = arith.subf %1, %15 : vector<16x32xf32>
    %cst_10 = arith.constant 9.99999996E-13 : f32
    %17 = vector.broadcast %cst_10 : f32 to vector<16x1xf32>
    %18 = arith.addf %14, %17 : vector<16x1xf32>
    %19 = math.rsqrt %18 : vector<16x1xf32>
    %20 = vector.broadcast %19 : vector<16x1xf32> to vector<16x32xf32>
    %21 = arith.mulf %16, %20 : vector<16x32xf32>
    %22 = vector.broadcast %2 : vector<1x32xf32> to vector<16x32xf32>
    %23 = arith.mulf %21, %22 : vector<16x32xf32>
    %24 = vector.broadcast %3 : vector<1x32xf32> to vector<16x32xf32>
    %25 = arith.addf %23, %24 : vector<16x32xf32>
    %c0_11 = arith.constant 0 : index
    %c0_12 = arith.constant 0 : index
    %c0_13 = arith.constant 0 : index
    %26 = vector.load %arg4[%c0_11, %c0_12, %c0_13] : memref<2x32x96xf32, #tpu.memory_space<vmem>>, vector<1x32x96xf32>
    %27 = vector.shape_cast %26 : vector<1x32x96xf32> to vector<32x96xf32>
    %cst_14 = arith.constant dense<0.000000e+00> : vector<16x96xf32>
    %28 = tpu.matmul %25, %27, %cst_14 {dimension_numbers = #tpu.dot_dimension_numbers<[1], [0], [0], [1], [0, 0, 1, 1], [], []>} : vector<16x32xf32>, vector<32x96xf32>, vector<16x96xf32> -> vector<16x96xf32>
    %c0_15 = arith.constant 0 : index
    %c0_16 = arith.constant 0 : index
    %c0_17 = arith.constant 0 : index
    %29 = vector.load %arg5[%c0_15, %c0_16, %c0_17] : memref<2x1x96xf32, #tpu.memory_space<vmem>>, vector<1x1x96xf32>
    %30 = vector.shape_cast %29 : vector<1x1x96xf32> to vector<1x96xf32>
    %31 = vector.broadcast %30 : vector<1x96xf32> to vector<16x96xf32>
    %32 = arith.addf %28, %31 : vector<16x96xf32>
    %33 = vector.extract_strided_slice %32 {offsets = [0, 0], sizes = [16, 32], strides = [1, 1]} : vector<16x96xf32> to vector<16x32xf32>
    %34 = vector.extract_strided_slice %32 {offsets = [0, 32], sizes = [16, 32], strides = [1, 1]} : vector<16x96xf32> to vector<16x32xf32>
    %35 = vector.extract_strided_slice %32 {offsets = [0, 64], sizes = [16, 32], strides = [1, 1]} : vector<16x96xf32> to vector<16x32xf32>
    %36 = vector.extract_strided_slice %0 {offsets = [0, 0], sizes = [1, 8], strides = [1, 1]} : vector<2x8xf32> to vector<1x8xf32>
    %37 = vector.extract_strided_slice %33 {offsets = [0, 0], sizes = [8, 16], strides = [1, 1]} : vector<16x32xf32> to vector<8x16xf32>
    %38 = vector.extract_strided_slice %34 {offsets = [0, 0], sizes = [8, 16], strides = [1, 1]} : vector<16x32xf32> to vector<8x16xf32>
    %39 = vector.extract_strided_slice %35 {offsets = [0, 0], sizes = [8, 16], strides = [1, 1]} : vector<16x32xf32> to vector<8x16xf32>
    %cst_18 = arith.constant dense<0.000000e+00> : vector<8x8xf32>
    %40 = tpu.matmul %37, %38, %cst_18 {dimension_numbers = #tpu.dot_dimension_numbers<[1], [1], [0], [0], [0, 0, 1, 0], [], []>} : vector<8x16xf32>, vector<8x16xf32>, vector<8x8xf32> -> vector<8x8xf32>
    %cst_19 = arith.constant 2.500000e-01 : f32
    %41 = vector.broadcast %cst_19 : f32 to vector<8x8xf32>
    %42 = arith.mulf %40, %41 : vector<8x8xf32>
    %43 = vector.broadcast %36 : vector<1x8xf32> to vector<8x8xf32>
    %44 = arith.addf %42, %43 : vector<8x8xf32>
    %cst_20 = arith.constant dense<0xFF800000> : vector<8xf32>
    %45 = vector.multi_reduction <maximumf>, %44, %cst_20 [1] : vector<8x8xf32> to vector<8xf32>
    %46 = vector.shape_cast %45 : vector<8xf32> to vector<8x1xf32>
    %47 = vector.broadcast %46 : vector<8x1xf32> to vector<8x8xf32>
    %48 = arith.subf %44, %47 : vector<8x8xf32>
    %49 = math.exp %48 : vector<8x8xf32>
    %cst_21 = arith.constant dense<0.000000e+00> : vector<8xf32>
    %50 = vector.multi_reduction <add>, %49, %cst_21 [1] : vector<8x8xf32> to vector<8xf32>
    %51 = vector.shape_cast %50 : vector<8xf32> to vector<8x1xf32>
    %52 = tpu.reciprocal %51 {approx = true} : vector<8x1xf32> -> vector<8x1xf32>
    %53 = vector.broadcast %52 : vector<8x1xf32> to vector<8x8xf32>
    %54 = arith.mulf %49, %53 : vector<8x8xf32>
    %cst_22 = arith.constant dense<0.000000e+00> : vector<8x16xf32>
    %55 = tpu.matmul %54, %39, %cst_22 {dimension_numbers = #tpu.dot_dimension_numbers<[1], [0], [0], [1], [0, 0, 1, 1], [], []>} : vector<8x8xf32>, vector<8x16xf32>, vector<8x16xf32> -> vector<8x16xf32>
    %56 = vector.extract_strided_slice %33 {offsets = [0, 16], sizes = [8, 16], strides = [1, 1]} : vector<16x32xf32> to vector<8x16xf32>
    %57 = vector.extract_strided_slice %34 {offsets = [0, 16], sizes = [8, 16], strides = [1, 1]} : vector<16x32xf32> to vector<8x16xf32>
    %58 = vector.extract_strided_slice %35 {offsets = [0, 16], sizes = [8, 16], strides = [1, 1]} : vector<16x32xf32> to vector<8x16xf32>
    %cst_23 = arith.constant dense<0.000000e+00> : vector<8x8xf32>
    %59 = tpu.matmul %56, %57, %cst_23 {dimension_numbers = #tpu.dot_dimension_numbers<[1], [1], [0], [0], [0, 0, 1, 0], [], []>} : vector<8x16xf32>, vector<8x16xf32>, vector<8x8xf32> -> vector<8x8xf32>
    %cst_24 = arith.constant 2.500000e-01 : f32
    %60 = vector.broadcast %cst_24 : f32 to vector<8x8xf32>
    %61 = arith.mulf %59, %60 : vector<8x8xf32>
    %62 = vector.broadcast %36 : vector<1x8xf32> to vector<8x8xf32>
    %63 = arith.addf %61, %62 : vector<8x8xf32>
    %cst_25 = arith.constant dense<0xFF800000> : vector<8xf32>
    %64 = vector.multi_reduction <maximumf>, %63, %cst_25 [1] : vector<8x8xf32> to vector<8xf32>
    %65 = vector.shape_cast %64 : vector<8xf32> to vector<8x1xf32>
    %66 = vector.broadcast %65 : vector<8x1xf32> to vector<8x8xf32>
    %67 = arith.subf %63, %66 : vector<8x8xf32>
    %68 = math.exp %67 : vector<8x8xf32>
    %cst_26 = arith.constant dense<0.000000e+00> : vector<8xf32>
    %69 = vector.multi_reduction <add>, %68, %cst_26 [1] : vector<8x8xf32> to vector<8xf32>
    %70 = vector.shape_cast %69 : vector<8xf32> to vector<8x1xf32>
    %71 = tpu.reciprocal %70 {approx = true} : vector<8x1xf32> -> vector<8x1xf32>
    %72 = vector.broadcast %71 : vector<8x1xf32> to vector<8x8xf32>
    %73 = arith.mulf %68, %72 : vector<8x8xf32>
    %cst_27 = arith.constant dense<0.000000e+00> : vector<8x16xf32>
    %74 = tpu.matmul %73, %58, %cst_27 {dimension_numbers = #tpu.dot_dimension_numbers<[1], [0], [0], [1], [0, 0, 1, 1], [], []>} : vector<8x8xf32>, vector<8x16xf32>, vector<8x16xf32> -> vector<8x16xf32>
    %75 = tpu.concatenate %55, %74 in 1 : vector<8x16xf32>, vector<8x16xf32> -> vector<8x32xf32>
    %76 = vector.extract_strided_slice %0 {offsets = [1, 0], sizes = [1, 8], strides = [1, 1]} : vector<2x8xf32> to vector<1x8xf32>
    %77 = vector.extract_strided_slice %33 {offsets = [8, 0], sizes = [8, 16], strides = [1, 1]} : vector<16x32xf32> to vector<8x16xf32>
    %78 = vector.extract_strided_slice %34 {offsets = [8, 0], sizes = [8, 16], strides = [1, 1]} : vector<16x32xf32> to vector<8x16xf32>
    %79 = vector.extract_strided_slice %35 {offsets = [8, 0], sizes = [8, 16], strides = [1, 1]} : vector<16x32xf32> to vector<8x16xf32>
    %cst_28 = arith.constant dense<0.000000e+00> : vector<8x8xf32>
    %80 = tpu.matmul %77, %78, %cst_28 {dimension_numbers = #tpu.dot_dimension_numbers<[1], [1], [0], [0], [0, 0, 1, 0], [], []>} : vector<8x16xf32>, vector<8x16xf32>, vector<8x8xf32> -> vector<8x8xf32>
    %cst_29 = arith.constant 2.500000e-01 : f32
    %81 = vector.broadcast %cst_29 : f32 to vector<8x8xf32>
    %82 = arith.mulf %80, %81 : vector<8x8xf32>
    %83 = vector.broadcast %76 : vector<1x8xf32> to vector<8x8xf32>
    %84 = arith.addf %82, %83 : vector<8x8xf32>
    %cst_30 = arith.constant dense<0xFF800000> : vector<8xf32>
    %85 = vector.multi_reduction <maximumf>, %84, %cst_30 [1] : vector<8x8xf32> to vector<8xf32>
    %86 = vector.shape_cast %85 : vector<8xf32> to vector<8x1xf32>
    %87 = vector.broadcast %86 : vector<8x1xf32> to vector<8x8xf32>
    %88 = arith.subf %84, %87 : vector<8x8xf32>
    %89 = math.exp %88 : vector<8x8xf32>
    %cst_31 = arith.constant dense<0.000000e+00> : vector<8xf32>
    %90 = vector.multi_reduction <add>, %89, %cst_31 [1] : vector<8x8xf32> to vector<8xf32>
    %91 = vector.shape_cast %90 : vector<8xf32> to vector<8x1xf32>
    %92 = tpu.reciprocal %91 {approx = true} : vector<8x1xf32> -> vector<8x1xf32>
    %93 = vector.broadcast %92 : vector<8x1xf32> to vector<8x8xf32>
    %94 = arith.mulf %89, %93 : vector<8x8xf32>
    %cst_32 = arith.constant dense<0.000000e+00> : vector<8x16xf32>
    %95 = tpu.matmul %94, %79, %cst_32 {dimension_numbers = #tpu.dot_dimension_numbers<[1], [0], [0], [1], [0, 0, 1, 1], [], []>} : vector<8x8xf32>, vector<8x16xf32>, vector<8x16xf32> -> vector<8x16xf32>
    %96 = vector.extract_strided_slice %33 {offsets = [8, 16], sizes = [8, 16], strides = [1, 1]} : vector<16x32xf32> to vector<8x16xf32>
    %97 = vector.extract_strided_slice %34 {offsets = [8, 16], sizes = [8, 16], strides = [1, 1]} : vector<16x32xf32> to vector<8x16xf32>
    %98 = vector.extract_strided_slice %35 {offsets = [8, 16], sizes = [8, 16], strides = [1, 1]} : vector<16x32xf32> to vector<8x16xf32>
    %cst_33 = arith.constant dense<0.000000e+00> : vector<8x8xf32>
    %99 = tpu.matmul %96, %97, %cst_33 {dimension_numbers = #tpu.dot_dimension_numbers<[1], [1], [0], [0], [0, 0, 1, 0], [], []>} : vector<8x16xf32>, vector<8x16xf32>, vector<8x8xf32> -> vector<8x8xf32>
    %cst_34 = arith.constant 2.500000e-01 : f32
    %100 = vector.broadcast %cst_34 : f32 to vector<8x8xf32>
    %101 = arith.mulf %99, %100 : vector<8x8xf32>
    %102 = vector.broadcast %76 : vector<1x8xf32> to vector<8x8xf32>
    %103 = arith.addf %101, %102 : vector<8x8xf32>
    %cst_35 = arith.constant dense<0xFF800000> : vector<8xf32>
    %104 = vector.multi_reduction <maximumf>, %103, %cst_35 [1] : vector<8x8xf32> to vector<8xf32>
    %105 = vector.shape_cast %104 : vector<8xf32> to vector<8x1xf32>
    %106 = vector.broadcast %105 : vector<8x1xf32> to vector<8x8xf32>
    %107 = arith.subf %103, %106 : vector<8x8xf32>
    %108 = math.exp %107 : vector<8x8xf32>
    %cst_36 = arith.constant dense<0.000000e+00> : vector<8xf32>
    %109 = vector.multi_reduction <add>, %108, %cst_36 [1] : vector<8x8xf32> to vector<8xf32>
    %110 = vector.shape_cast %109 : vector<8xf32> to vector<8x1xf32>
    %111 = tpu.reciprocal %110 {approx = true} : vector<8x1xf32> -> vector<8x1xf32>
    %112 = vector.broadcast %111 : vector<8x1xf32> to vector<8x8xf32>
    %113 = arith.mulf %108, %112 : vector<8x8xf32>
    %cst_37 = arith.constant dense<0.000000e+00> : vector<8x16xf32>
    %114 = tpu.matmul %113, %98, %cst_37 {dimension_numbers = #tpu.dot_dimension_numbers<[1], [0], [0], [1], [0, 0, 1, 1], [], []>} : vector<8x8xf32>, vector<8x16xf32>, vector<8x16xf32> -> vector<8x16xf32>
    %115 = tpu.concatenate %95, %114 in 1 : vector<8x16xf32>, vector<8x16xf32> -> vector<8x32xf32>
    %116 = tpu.concatenate %75, %115 in 0 : vector<8x32xf32>, vector<8x32xf32> -> vector<16x32xf32>
    %c0_38 = arith.constant 0 : index
    %c0_39 = arith.constant 0 : index
    %c0_40 = arith.constant 0 : index
    %117 = vector.load %arg6[%c0_38, %c0_39, %c0_40] : memref<2x32x32xf32, #tpu.memory_space<vmem>>, vector<1x32x32xf32>
    %118 = vector.shape_cast %117 : vector<1x32x32xf32> to vector<32x32xf32>
    %cst_41 = arith.constant dense<0.000000e+00> : vector<16x32xf32>
    %119 = tpu.matmul %116, %118, %cst_41 {dimension_numbers = #tpu.dot_dimension_numbers<[1], [0], [0], [1], [0, 0, 1, 1], [], []>} : vector<16x32xf32>, vector<32x32xf32>, vector<16x32xf32> -> vector<16x32xf32>
    %c0_42 = arith.constant 0 : index
    %c0_43 = arith.constant 0 : index
    %c0_44 = arith.constant 0 : index
    %120 = vector.load %arg7[%c0_42, %c0_43, %c0_44] : memref<2x1x32xf32, #tpu.memory_space<vmem>>, vector<1x1x32xf32>
    %121 = vector.shape_cast %120 : vector<1x1x32xf32> to vector<1x32xf32>
    %122 = vector.broadcast %121 : vector<1x32xf32> to vector<16x32xf32>
    %123 = arith.addf %119, %122 : vector<16x32xf32>
    %124 = arith.addf %25, %123 : vector<16x32xf32>
    %c0_45 = arith.constant 0 : index
    %c0_46 = arith.constant 0 : index
    %c0_47 = arith.constant 0 : index
    %125 = vector.load %arg8[%c0_45, %c0_46, %c0_47] : memref<2x1x32xf32, #tpu.memory_space<vmem>>, vector<1x1x32xf32>
    %126 = vector.shape_cast %125 : vector<1x1x32xf32> to vector<1x32xf32>
    %c0_48 = arith.constant 0 : index
    %c0_49 = arith.constant 0 : index
    %c0_50 = arith.constant 0 : index
    %127 = vector.load %arg9[%c0_48, %c0_49, %c0_50] : memref<2x1x32xf32, #tpu.memory_space<vmem>>, vector<1x1x32xf32>
    %128 = vector.shape_cast %127 : vector<1x1x32xf32> to vector<1x32xf32>
    %cst_51 = arith.constant dense<0.000000e+00> : vector<16xf32>
    %129 = vector.multi_reduction <add>, %124, %cst_51 [1] : vector<16x32xf32> to vector<16xf32>
    %130 = vector.shape_cast %129 : vector<16xf32> to vector<16x1xf32>
    %cst_52 = arith.constant 3.200000e+01 : f32
    %131 = vector.broadcast %cst_52 : f32 to vector<16x1xf32>
    %132 = arith.divf %130, %131 : vector<16x1xf32>
    %133 = vector.broadcast %132 : vector<16x1xf32> to vector<16x32xf32>
    %134 = arith.subf %124, %133 : vector<16x32xf32>
    %135 = arith.mulf %134, %134 : vector<16x32xf32>
    %cst_53 = arith.constant dense<0.000000e+00> : vector<16xf32>
    %136 = vector.multi_reduction <add>, %135, %cst_53 [1] : vector<16x32xf32> to vector<16xf32>
    %137 = vector.shape_cast %136 : vector<16xf32> to vector<16x1xf32>
    %cst_54 = arith.constant 3.200000e+01 : f32
    %138 = vector.broadcast %cst_54 : f32 to vector<16x1xf32>
    %139 = arith.divf %137, %138 : vector<16x1xf32>
    %140 = vector.broadcast %132 : vector<16x1xf32> to vector<16x32xf32>
    %141 = arith.subf %124, %140 : vector<16x32xf32>
    %cst_55 = arith.constant 9.99999996E-13 : f32
    %142 = vector.broadcast %cst_55 : f32 to vector<16x1xf32>
    %143 = arith.addf %139, %142 : vector<16x1xf32>
    %144 = math.rsqrt %143 : vector<16x1xf32>
    %145 = vector.broadcast %144 : vector<16x1xf32> to vector<16x32xf32>
    %146 = arith.mulf %141, %145 : vector<16x32xf32>
    %147 = vector.broadcast %126 : vector<1x32xf32> to vector<16x32xf32>
    %148 = arith.mulf %146, %147 : vector<16x32xf32>
    %149 = vector.broadcast %128 : vector<1x32xf32> to vector<16x32xf32>
    %150 = arith.addf %148, %149 : vector<16x32xf32>
    %c0_56 = arith.constant 0 : index
    %c0_57 = arith.constant 0 : index
    %c0_58 = arith.constant 0 : index
    %151 = vector.load %arg10[%c0_56, %c0_57, %c0_58] : memref<2x32x64xf32, #tpu.memory_space<vmem>>, vector<1x32x64xf32>
    %152 = vector.shape_cast %151 : vector<1x32x64xf32> to vector<32x64xf32>
    %cst_59 = arith.constant dense<0.000000e+00> : vector<16x64xf32>
    %153 = tpu.matmul %150, %152, %cst_59 {dimension_numbers = #tpu.dot_dimension_numbers<[1], [0], [0], [1], [0, 0, 1, 1], [], []>} : vector<16x32xf32>, vector<32x64xf32>, vector<16x64xf32> -> vector<16x64xf32>
    %c0_60 = arith.constant 0 : index
    %c0_61 = arith.constant 0 : index
    %c0_62 = arith.constant 0 : index
    %154 = vector.load %arg11[%c0_60, %c0_61, %c0_62] : memref<2x1x64xf32, #tpu.memory_space<vmem>>, vector<1x1x64xf32>
    %155 = vector.shape_cast %154 : vector<1x1x64xf32> to vector<1x64xf32>
    %156 = vector.broadcast %155 : vector<1x64xf32> to vector<16x64xf32>
    %157 = arith.addf %153, %156 : vector<16x64xf32>
    %cst_63 = arith.constant 5.000000e-01 : f32
    %158 = vector.broadcast %cst_63 : f32 to vector<16x64xf32>
    %159 = arith.mulf %158, %157 : vector<16x64xf32>
    %cst_64 = arith.constant 4.471500e-02 : f32
    %160 = vector.broadcast %cst_64 : f32 to vector<16x64xf32>
    %161 = arith.mulf %160, %157 : vector<16x64xf32>
    %162 = arith.mulf %161, %157 : vector<16x64xf32>
    %163 = arith.mulf %162, %157 : vector<16x64xf32>
    %164 = arith.addf %157, %163 : vector<16x64xf32>
    %cst_65 = arith.constant 0.797884583 : f32
    %165 = vector.broadcast %cst_65 : f32 to vector<16x64xf32>
    %166 = arith.mulf %165, %164 : vector<16x64xf32>
    %167 = math.tanh %166 : vector<16x64xf32>
    %cst_66 = arith.constant 1.000000e+00 : f32
    %168 = vector.broadcast %cst_66 : f32 to vector<16x64xf32>
    %169 = arith.addf %168, %167 : vector<16x64xf32>
    %170 = arith.mulf %159, %169 : vector<16x64xf32>
    %c0_67 = arith.constant 0 : index
    %c0_68 = arith.constant 0 : index
    %c0_69 = arith.constant 0 : index
    %171 = vector.load %arg12[%c0_67, %c0_68, %c0_69] : memref<2x64x32xf32, #tpu.memory_space<vmem>>, vector<1x64x32xf32>
    %172 = vector.shape_cast %171 : vector<1x64x32xf32> to vector<64x32xf32>
    %cst_70 = arith.constant dense<0.000000e+00> : vector<16x32xf32>
    %173 = tpu.matmul %170, %172, %cst_70 {dimension_numbers = #tpu.dot_dimension_numbers<[1], [0], [0], [1], [0, 0, 1, 1], [], []>} : vector<16x64xf32>, vector<64x32xf32>, vector<16x32xf32> -> vector<16x32xf32>
    %c0_71 = arith.constant 0 : index
    %c0_72 = arith.constant 0 : index
    %c0_73 = arith.constant 0 : index
    %174 = vector.load %arg13[%c0_71, %c0_72, %c0_73] : memref<2x1x32xf32, #tpu.memory_space<vmem>>, vector<1x1x32xf32>
    %175 = vector.shape_cast %174 : vector<1x1x32xf32> to vector<1x32xf32>
    %176 = vector.broadcast %175 : vector<1x32xf32> to vector<16x32xf32>
    %177 = arith.addf %173, %176 : vector<16x32xf32>
    %178 = arith.addf %150, %177 : vector<16x32xf32>
    %c0_74 = arith.constant 0 : index
    %c0_75 = arith.constant 0 : index
    %c0_76 = arith.constant 0 : index
    %179 = vector.load %arg14[%c0_74, %c0_75, %c0_76] : memref<2x1x32xf32, #tpu.memory_space<vmem>>, vector<1x1x32xf32>
    %180 = vector.shape_cast %179 : vector<1x1x32xf32> to vector<1x32xf32>
    %c0_77 = arith.constant 0 : index
    %c0_78 = arith.constant 0 : index
    %c0_79 = arith.constant 0 : index
    %181 = vector.load %arg15[%c0_77, %c0_78, %c0_79] : memref<2x1x32xf32, #tpu.memory_space<vmem>>, vector<1x1x32xf32>
    %182 = vector.shape_cast %181 : vector<1x1x32xf32> to vector<1x32xf32>
    %cst_80 = arith.constant dense<0.000000e+00> : vector<16xf32>
    %183 = vector.multi_reduction <add>, %178, %cst_80 [1] : vector<16x32xf32> to vector<16xf32>
    %184 = vector.shape_cast %183 : vector<16xf32> to vector<16x1xf32>
    %cst_81 = arith.constant 3.200000e+01 : f32
    %185 = vector.broadcast %cst_81 : f32 to vector<16x1xf32>
    %186 = arith.divf %184, %185 : vector<16x1xf32>
    %187 = vector.broadcast %186 : vector<16x1xf32> to vector<16x32xf32>
    %188 = arith.subf %178, %187 : vector<16x32xf32>
    %189 = arith.mulf %188, %188 : vector<16x32xf32>
    %cst_82 = arith.constant dense<0.000000e+00> : vector<16xf32>
    %190 = vector.multi_reduction <add>, %189, %cst_82 [1] : vector<16x32xf32> to vector<16xf32>
    %191 = vector.shape_cast %190 : vector<16xf32> to vector<16x1xf32>
    %cst_83 = arith.constant 3.200000e+01 : f32
    %192 = vector.broadcast %cst_83 : f32 to vector<16x1xf32>
    %193 = arith.divf %191, %192 : vector<16x1xf32>
    %194 = vector.broadcast %186 : vector<16x1xf32> to vector<16x32xf32>
    %195 = arith.subf %178, %194 : vector<16x32xf32>
    %cst_84 = arith.constant 9.99999996E-13 : f32
    %196 = vector.broadcast %cst_84 : f32 to vector<16x1xf32>
    %197 = arith.addf %193, %196 : vector<16x1xf32>
    %198 = math.rsqrt %197 : vector<16x1xf32>
    %199 = vector.broadcast %198 : vector<16x1xf32> to vector<16x32xf32>
    %200 = arith.mulf %195, %199 : vector<16x32xf32>
    %201 = vector.broadcast %180 : vector<1x32xf32> to vector<16x32xf32>
    %202 = arith.mulf %200, %201 : vector<16x32xf32>
    %203 = vector.broadcast %182 : vector<1x32xf32> to vector<16x32xf32>
    %204 = arith.addf %202, %203 : vector<16x32xf32>
    %c1 = arith.constant 1 : index
    %c0_85 = arith.constant 0 : index
    %c0_86 = arith.constant 0 : index
    %205 = vector.load %arg4[%c1, %c0_85, %c0_86] : memref<2x32x96xf32, #tpu.memory_space<vmem>>, vector<1x32x96xf32>
    %206 = vector.shape_cast %205 : vector<1x32x96xf32> to vector<32x96xf32>
    %cst_87 = arith.constant dense<0.000000e+00> : vector<16x96xf32>
    %207 = tpu.matmul %204, %206, %cst_87 {dimension_numbers = #tpu.dot_dimension_numbers<[1], [0], [0], [1], [0, 0, 1, 1], [], []>} : vector<16x32xf32>, vector<32x96xf32>, vector<16x96xf32> -> vector<16x96xf32>
    %c1_88 = arith.constant 1 : index
    %c0_89 = arith.constant 0 : index
    %c0_90 = arith.constant 0 : index
    %208 = vector.load %arg5[%c1_88, %c0_89, %c0_90] : memref<2x1x96xf32, #tpu.memory_space<vmem>>, vector<1x1x96xf32>
    %209 = vector.shape_cast %208 : vector<1x1x96xf32> to vector<1x96xf32>
    %210 = vector.broadcast %209 : vector<1x96xf32> to vector<16x96xf32>
    %211 = arith.addf %207, %210 : vector<16x96xf32>
    %212 = vector.extract_strided_slice %211 {offsets = [0, 0], sizes = [16, 32], strides = [1, 1]} : vector<16x96xf32> to vector<16x32xf32>
    %213 = vector.extract_strided_slice %211 {offsets = [0, 32], sizes = [16, 32], strides = [1, 1]} : vector<16x96xf32> to vector<16x32xf32>
    %214 = vector.extract_strided_slice %211 {offsets = [0, 64], sizes = [16, 32], strides = [1, 1]} : vector<16x96xf32> to vector<16x32xf32>
    %215 = vector.extract_strided_slice %0 {offsets = [0, 0], sizes = [1, 8], strides = [1, 1]} : vector<2x8xf32> to vector<1x8xf32>
    %216 = vector.extract_strided_slice %212 {offsets = [0, 0], sizes = [8, 16], strides = [1, 1]} : vector<16x32xf32> to vector<8x16xf32>
    %217 = vector.extract_strided_slice %213 {offsets = [0, 0], sizes = [8, 16], strides = [1, 1]} : vector<16x32xf32> to vector<8x16xf32>
    %218 = vector.extract_strided_slice %214 {offsets = [0, 0], sizes = [8, 16], strides = [1, 1]} : vector<16x32xf32> to vector<8x16xf32>
    %cst_91 = arith.constant dense<0.000000e+00> : vector<8x8xf32>
    %219 = tpu.matmul %216, %217, %cst_91 {dimension_numbers = #tpu.dot_dimension_numbers<[1], [1], [0], [0], [0, 0, 1, 0], [], []>} : vector<8x16xf32>, vector<8x16xf32>, vector<8x8xf32> -> vector<8x8xf32>
    %cst_92 = arith.constant 2.500000e-01 : f32
    %220 = vector.broadcast %cst_92 : f32 to vector<8x8xf32>
    %221 = arith.mulf %219, %220 : vector<8x8xf32>
    %222 = vector.broadcast %215 : vector<1x8xf32> to vector<8x8xf32>
    %223 = arith.addf %221, %222 : vector<8x8xf32>
    %cst_93 = arith.constant dense<0xFF800000> : vector<8xf32>
    %224 = vector.multi_reduction <maximumf>, %223, %cst_93 [1] : vector<8x8xf32> to vector<8xf32>
    %225 = vector.shape_cast %224 : vector<8xf32> to vector<8x1xf32>
    %226 = vector.broadcast %225 : vector<8x1xf32> to vector<8x8xf32>
    %227 = arith.subf %223, %226 : vector<8x8xf32>
    %228 = math.exp %227 : vector<8x8xf32>
    %cst_94 = arith.constant dense<0.000000e+00> : vector<8xf32>
    %229 = vector.multi_reduction <add>, %228, %cst_94 [1] : vector<8x8xf32> to vector<8xf32>
    %230 = vector.shape_cast %229 : vector<8xf32> to vector<8x1xf32>
    %231 = tpu.reciprocal %230 {approx = true} : vector<8x1xf32> -> vector<8x1xf32>
    %232 = vector.broadcast %231 : vector<8x1xf32> to vector<8x8xf32>
    %233 = arith.mulf %228, %232 : vector<8x8xf32>
    %cst_95 = arith.constant dense<0.000000e+00> : vector<8x16xf32>
    %234 = tpu.matmul %233, %218, %cst_95 {dimension_numbers = #tpu.dot_dimension_numbers<[1], [0], [0], [1], [0, 0, 1, 1], [], []>} : vector<8x8xf32>, vector<8x16xf32>, vector<8x16xf32> -> vector<8x16xf32>
    %235 = vector.extract_strided_slice %212 {offsets = [0, 16], sizes = [8, 16], strides = [1, 1]} : vector<16x32xf32> to vector<8x16xf32>
    %236 = vector.extract_strided_slice %213 {offsets = [0, 16], sizes = [8, 16], strides = [1, 1]} : vector<16x32xf32> to vector<8x16xf32>
    %237 = vector.extract_strided_slice %214 {offsets = [0, 16], sizes = [8, 16], strides = [1, 1]} : vector<16x32xf32> to vector<8x16xf32>
    %cst_96 = arith.constant dense<0.000000e+00> : vector<8x8xf32>
    %238 = tpu.matmul %235, %236, %cst_96 {dimension_numbers = #tpu.dot_dimension_numbers<[1], [1], [0], [0], [0, 0, 1, 0], [], []>} : vector<8x16xf32>, vector<8x16xf32>, vector<8x8xf32> -> vector<8x8xf32>
    %cst_97 = arith.constant 2.500000e-01 : f32
    %239 = vector.broadcast %cst_97 : f32 to vector<8x8xf32>
    %240 = arith.mulf %238, %239 : vector<8x8xf32>
    %241 = vector.broadcast %215 : vector<1x8xf32> to vector<8x8xf32>
    %242 = arith.addf %240, %241 : vector<8x8xf32>
    %cst_98 = arith.constant dense<0xFF800000> : vector<8xf32>
    %243 = vector.multi_reduction <maximumf>, %242, %cst_98 [1] : vector<8x8xf32> to vector<8xf32>
    %244 = vector.shape_cast %243 : vector<8xf32> to vector<8x1xf32>
    %245 = vector.broadcast %244 : vector<8x1xf32> to vector<8x8xf32>
    %246 = arith.subf %242, %245 : vector<8x8xf32>
    %247 = math.exp %246 : vector<8x8xf32>
    %cst_99 = arith.constant dense<0.000000e+00> : vector<8xf32>
    %248 = vector.multi_reduction <add>, %247, %cst_99 [1] : vector<8x8xf32> to vector<8xf32>
    %249 = vector.shape_cast %248 : vector<8xf32> to vector<8x1xf32>
    %250 = tpu.reciprocal %249 {approx = true} : vector<8x1xf32> -> vector<8x1xf32>
    %251 = vector.broadcast %250 : vector<8x1xf32> to vector<8x8xf32>
    %252 = arith.mulf %247, %251 : vector<8x8xf32>
    %cst_100 = arith.constant dense<0.000000e+00> : vector<8x16xf32>
    %253 = tpu.matmul %252, %237, %cst_100 {dimension_numbers = #tpu.dot_dimension_numbers<[1], [0], [0], [1], [0, 0, 1, 1], [], []>} : vector<8x8xf32>, vector<8x16xf32>, vector<8x16xf32> -> vector<8x16xf32>
    %254 = tpu.concatenate %234, %253 in 1 : vector<8x16xf32>, vector<8x16xf32> -> vector<8x32xf32>
    %255 = vector.extract_strided_slice %0 {offsets = [1, 0], sizes = [1, 8], strides = [1, 1]} : vector<2x8xf32> to vector<1x8xf32>
    %256 = vector.extract_strided_slice %212 {offsets = [8, 0], sizes = [8, 16], strides = [1, 1]} : vector<16x32xf32> to vector<8x16xf32>
    %257 = vector.extract_strided_slice %213 {offsets = [8, 0], sizes = [8, 16], strides = [1, 1]} : vector<16x32xf32> to vector<8x16xf32>
    %258 = vector.extract_strided_slice %214 {offsets = [8, 0], sizes = [8, 16], strides = [1, 1]} : vector<16x32xf32> to vector<8x16xf32>
    %cst_101 = arith.constant dense<0.000000e+00> : vector<8x8xf32>
    %259 = tpu.matmul %256, %257, %cst_101 {dimension_numbers = #tpu.dot_dimension_numbers<[1], [1], [0], [0], [0, 0, 1, 0], [], []>} : vector<8x16xf32>, vector<8x16xf32>, vector<8x8xf32> -> vector<8x8xf32>
    %cst_102 = arith.constant 2.500000e-01 : f32
    %260 = vector.broadcast %cst_102 : f32 to vector<8x8xf32>
    %261 = arith.mulf %259, %260 : vector<8x8xf32>
    %262 = vector.broadcast %255 : vector<1x8xf32> to vector<8x8xf32>
    %263 = arith.addf %261, %262 : vector<8x8xf32>
    %cst_103 = arith.constant dense<0xFF800000> : vector<8xf32>
    %264 = vector.multi_reduction <maximumf>, %263, %cst_103 [1] : vector<8x8xf32> to vector<8xf32>
    %265 = vector.shape_cast %264 : vector<8xf32> to vector<8x1xf32>
    %266 = vector.broadcast %265 : vector<8x1xf32> to vector<8x8xf32>
    %267 = arith.subf %263, %266 : vector<8x8xf32>
    %268 = math.exp %267 : vector<8x8xf32>
    %cst_104 = arith.constant dense<0.000000e+00> : vector<8xf32>
    %269 = vector.multi_reduction <add>, %268, %cst_104 [1] : vector<8x8xf32> to vector<8xf32>
    %270 = vector.shape_cast %269 : vector<8xf32> to vector<8x1xf32>
    %271 = tpu.reciprocal %270 {approx = true} : vector<8x1xf32> -> vector<8x1xf32>
    %272 = vector.broadcast %271 : vector<8x1xf32> to vector<8x8xf32>
    %273 = arith.mulf %268, %272 : vector<8x8xf32>
    %cst_105 = arith.constant dense<0.000000e+00> : vector<8x16xf32>
    %274 = tpu.matmul %273, %258, %cst_105 {dimension_numbers = #tpu.dot_dimension_numbers<[1], [0], [0], [1], [0, 0, 1, 1], [], []>} : vector<8x8xf32>, vector<8x16xf32>, vector<8x16xf32> -> vector<8x16xf32>
    %275 = vector.extract_strided_slice %212 {offsets = [8, 16], sizes = [8, 16], strides = [1, 1]} : vector<16x32xf32> to vector<8x16xf32>
    %276 = vector.extract_strided_slice %213 {offsets = [8, 16], sizes = [8, 16], strides = [1, 1]} : vector<16x32xf32> to vector<8x16xf32>
    %277 = vector.extract_strided_slice %214 {offsets = [8, 16], sizes = [8, 16], strides = [1, 1]} : vector<16x32xf32> to vector<8x16xf32>
    %cst_106 = arith.constant dense<0.000000e+00> : vector<8x8xf32>
    %278 = tpu.matmul %275, %276, %cst_106 {dimension_numbers = #tpu.dot_dimension_numbers<[1], [1], [0], [0], [0, 0, 1, 0], [], []>} : vector<8x16xf32>, vector<8x16xf32>, vector<8x8xf32> -> vector<8x8xf32>
    %cst_107 = arith.constant 2.500000e-01 : f32
    %279 = vector.broadcast %cst_107 : f32 to vector<8x8xf32>
    %280 = arith.mulf %278, %279 : vector<8x8xf32>
    %281 = vector.broadcast %255 : vector<1x8xf32> to vector<8x8xf32>
    %282 = arith.addf %280, %281 : vector<8x8xf32>
    %cst_108 = arith.constant dense<0xFF800000> : vector<8xf32>
    %283 = vector.multi_reduction <maximumf>, %282, %cst_108 [1] : vector<8x8xf32> to vector<8xf32>
    %284 = vector.shape_cast %283 : vector<8xf32> to vector<8x1xf32>
    %285 = vector.broadcast %284 : vector<8x1xf32> to vector<8x8xf32>
    %286 = arith.subf %282, %285 : vector<8x8xf32>
    %287 = math.exp %286 : vector<8x8xf32>
    %cst_109 = arith.constant dense<0.000000e+00> : vector<8xf32>
    %288 = vector.multi_reduction <add>, %287, %cst_109 [1] : vector<8x8xf32> to vector<8xf32>
    %289 = vector.shape_cast %288 : vector<8xf32> to vector<8x1xf32>
    %290 = tpu.reciprocal %289 {approx = true} : vector<8x1xf32> -> vector<8x1xf32>
    %291 = vector.broadcast %290 : vector<8x1xf32> to vector<8x8xf32>
    %292 = arith.mulf %287, %291 : vector<8x8xf32>
    %cst_110 = arith.constant dense<0.000000e+00> : vector<8x16xf32>
    %293 = tpu.matmul %292, %277, %cst_110 {dimension_numbers = #tpu.dot_dimension_numbers<[1], [0], [0], [1], [0, 0, 1, 1], [], []>} : vector<8x8xf32>, vector<8x16xf32>, vector<8x16xf32> -> vector<8x16xf32>
    %294 = tpu.concatenate %274, %293 in 1 : vector<8x16xf32>, vector<8x16xf32> -> vector<8x32xf32>
    %295 = tpu.concatenate %254, %294 in 0 : vector<8x32xf32>, vector<8x32xf32> -> vector<16x32xf32>
    %c1_111 = arith.constant 1 : index
    %c0_112 = arith.constant 0 : index
    %c0_113 = arith.constant 0 : index
    %296 = vector.load %arg6[%c1_111, %c0_112, %c0_113] : memref<2x32x32xf32, #tpu.memory_space<vmem>>, vector<1x32x32xf32>
    %297 = vector.shape_cast %296 : vector<1x32x32xf32> to vector<32x32xf32>
    %cst_114 = arith.constant dense<0.000000e+00> : vector<16x32xf32>
    %298 = tpu.matmul %295, %297, %cst_114 {dimension_numbers = #tpu.dot_dimension_numbers<[1], [0], [0], [1], [0, 0, 1, 1], [], []>} : vector<16x32xf32>, vector<32x32xf32>, vector<16x32xf32> -> vector<16x32xf32>
    %c1_115 = arith.constant 1 : index
    %c0_116 = arith.constant 0 : index
    %c0_117 = arith.constant 0 : index
    %299 = vector.load %arg7[%c1_115, %c0_116, %c0_117] : memref<2x1x32xf32, #tpu.memory_space<vmem>>, vector<1x1x32xf32>
    %300 = vector.shape_cast %299 : vector<1x1x32xf32> to vector<1x32xf32>
    %301 = vector.broadcast %300 : vector<1x32xf32> to vector<16x32xf32>
    %302 = arith.addf %298, %301 : vector<16x32xf32>
    %303 = arith.addf %204, %302 : vector<16x32xf32>
    %c1_118 = arith.constant 1 : index
    %c0_119 = arith.constant 0 : index
    %c0_120 = arith.constant 0 : index
    %304 = vector.load %arg8[%c1_118, %c0_119, %c0_120] : memref<2x1x32xf32, #tpu.memory_space<vmem>>, vector<1x1x32xf32>
    %305 = vector.shape_cast %304 : vector<1x1x32xf32> to vector<1x32xf32>
    %c1_121 = arith.constant 1 : index
    %c0_122 = arith.constant 0 : index
    %c0_123 = arith.constant 0 : index
    %306 = vector.load %arg9[%c1_121, %c0_122, %c0_123] : memref<2x1x32xf32, #tpu.memory_space<vmem>>, vector<1x1x32xf32>
    %307 = vector.shape_cast %306 : vector<1x1x32xf32> to vector<1x32xf32>
    %cst_124 = arith.constant dense<0.000000e+00> : vector<16xf32>
    %308 = vector.multi_reduction <add>, %303, %cst_124 [1] : vector<16x32xf32> to vector<16xf32>
    %309 = vector.shape_cast %308 : vector<16xf32> to vector<16x1xf32>
    %cst_125 = arith.constant 3.200000e+01 : f32
    %310 = vector.broadcast %cst_125 : f32 to vector<16x1xf32>
    %311 = arith.divf %309, %310 : vector<16x1xf32>
    %312 = vector.broadcast %311 : vector<16x1xf32> to vector<16x32xf32>
    %313 = arith.subf %303, %312 : vector<16x32xf32>
    %314 = arith.mulf %313, %313 : vector<16x32xf32>
    %cst_126 = arith.constant dense<0.000000e+00> : vector<16xf32>
    %315 = vector.multi_reduction <add>, %314, %cst_126 [1] : vector<16x32xf32> to vector<16xf32>
    %316 = vector.shape_cast %315 : vector<16xf32> to vector<16x1xf32>
    %cst_127 = arith.constant 3.200000e+01 : f32
    %317 = vector.broadcast %cst_127 : f32 to vector<16x1xf32>
    %318 = arith.divf %316, %317 : vector<16x1xf32>
    %319 = vector.broadcast %311 : vector<16x1xf32> to vector<16x32xf32>
    %320 = arith.subf %303, %319 : vector<16x32xf32>
    %cst_128 = arith.constant 9.99999996E-13 : f32
    %321 = vector.broadcast %cst_128 : f32 to vector<16x1xf32>
    %322 = arith.addf %318, %321 : vector<16x1xf32>
    %323 = math.rsqrt %322 : vector<16x1xf32>
    %324 = vector.broadcast %323 : vector<16x1xf32> to vector<16x32xf32>
    %325 = arith.mulf %320, %324 : vector<16x32xf32>
    %326 = vector.broadcast %305 : vector<1x32xf32> to vector<16x32xf32>
    %327 = arith.mulf %325, %326 : vector<16x32xf32>
    %328 = vector.broadcast %307 : vector<1x32xf32> to vector<16x32xf32>
    %329 = arith.addf %327, %328 : vector<16x32xf32>
    %c1_129 = arith.constant 1 : index
    %c0_130 = arith.constant 0 : index
    %c0_131 = arith.constant 0 : index
    %330 = vector.load %arg10[%c1_129, %c0_130, %c0_131] : memref<2x32x64xf32, #tpu.memory_space<vmem>>, vector<1x32x64xf32>
    %331 = vector.shape_cast %330 : vector<1x32x64xf32> to vector<32x64xf32>
    %cst_132 = arith.constant dense<0.000000e+00> : vector<16x64xf32>
    %332 = tpu.matmul %329, %331, %cst_132 {dimension_numbers = #tpu.dot_dimension_numbers<[1], [0], [0], [1], [0, 0, 1, 1], [], []>} : vector<16x32xf32>, vector<32x64xf32>, vector<16x64xf32> -> vector<16x64xf32>
    %c1_133 = arith.constant 1 : index
    %c0_134 = arith.constant 0 : index
    %c0_135 = arith.constant 0 : index
    %333 = vector.load %arg11[%c1_133, %c0_134, %c0_135] : memref<2x1x64xf32, #tpu.memory_space<vmem>>, vector<1x1x64xf32>
    %334 = vector.shape_cast %333 : vector<1x1x64xf32> to vector<1x64xf32>
    %335 = vector.broadcast %334 : vector<1x64xf32> to vector<16x64xf32>
    %336 = arith.addf %332, %335 : vector<16x64xf32>
    %cst_136 = arith.constant 5.000000e-01 : f32
    %337 = vector.broadcast %cst_136 : f32 to vector<16x64xf32>
    %338 = arith.mulf %337, %336 : vector<16x64xf32>
    %cst_137 = arith.constant 4.471500e-02 : f32
    %339 = vector.broadcast %cst_137 : f32 to vector<16x64xf32>
    %340 = arith.mulf %339, %336 : vector<16x64xf32>
    %341 = arith.mulf %340, %336 : vector<16x64xf32>
    %342 = arith.mulf %341, %336 : vector<16x64xf32>
    %343 = arith.addf %336, %342 : vector<16x64xf32>
    %cst_138 = arith.constant 0.797884583 : f32
    %344 = vector.broadcast %cst_138 : f32 to vector<16x64xf32>
    %345 = arith.mulf %344, %343 : vector<16x64xf32>
    %346 = math.tanh %345 : vector<16x64xf32>
    %cst_139 = arith.constant 1.000000e+00 : f32
    %347 = vector.broadcast %cst_139 : f32 to vector<16x64xf32>
    %348 = arith.addf %347, %346 : vector<16x64xf32>
    %349 = arith.mulf %338, %348 : vector<16x64xf32>
    %c1_140 = arith.constant 1 : index
    %c0_141 = arith.constant 0 : index
    %c0_142 = arith.constant 0 : index
    %350 = vector.load %arg12[%c1_140, %c0_141, %c0_142] : memref<2x64x32xf32, #tpu.memory_space<vmem>>, vector<1x64x32xf32>
    %351 = vector.shape_cast %350 : vector<1x64x32xf32> to vector<64x32xf32>
    %cst_143 = arith.constant dense<0.000000e+00> : vector<16x32xf32>
    %352 = tpu.matmul %349, %351, %cst_143 {dimension_numbers = #tpu.dot_dimension_numbers<[1], [0], [0], [1], [0, 0, 1, 1], [], []>} : vector<16x64xf32>, vector<64x32xf32>, vector<16x32xf32> -> vector<16x32xf32>
    %c1_144 = arith.constant 1 : index
    %c0_145 = arith.constant 0 : index
    %c0_146 = arith.constant 0 : index
    %353 = vector.load %arg13[%c1_144, %c0_145, %c0_146] : memref<2x1x32xf32, #tpu.memory_space<vmem>>, vector<1x1x32xf32>
    %354 = vector.shape_cast %353 : vector<1x1x32xf32> to vector<1x32xf32>
    %355 = vector.broadcast %354 : vector<1x32xf32> to vector<16x32xf32>
    %356 = arith.addf %352, %355 : vector<16x32xf32>
    %357 = arith.addf %329, %356 : vector<16x32xf32>
    %c1_147 = arith.constant 1 : index
    %c0_148 = arith.constant 0 : index
    %c0_149 = arith.constant 0 : index
    %358 = vector.load %arg14[%c1_147, %c0_148, %c0_149] : memref<2x1x32xf32, #tpu.memory_space<vmem>>, vector<1x1x32xf32>
    %359 = vector.shape_cast %358 : vector<1x1x32xf32> to vector<1x32xf32>
    %c1_150 = arith.constant 1 : index
    %c0_151 = arith.constant 0 : index
    %c0_152 = arith.constant 0 : index
    %360 = vector.load %arg15[%c1_150, %c0_151, %c0_152] : memref<2x1x32xf32, #tpu.memory_space<vmem>>, vector<1x1x32xf32>
    %361 = vector.shape_cast %360 : vector<1x1x32xf32> to vector<1x32xf32>
    %cst_153 = arith.constant dense<0.000000e+00> : vector<16xf32>
    %362 = vector.multi_reduction <add>, %357, %cst_153 [1] : vector<16x32xf32> to vector<16xf32>
    %363 = vector.shape_cast %362 : vector<16xf32> to vector<16x1xf32>
    %cst_154 = arith.constant 3.200000e+01 : f32
    %364 = vector.broadcast %cst_154 : f32 to vector<16x1xf32>
    %365 = arith.divf %363, %364 : vector<16x1xf32>
    %366 = vector.broadcast %365 : vector<16x1xf32> to vector<16x32xf32>
    %367 = arith.subf %357, %366 : vector<16x32xf32>
    %368 = arith.mulf %367, %367 : vector<16x32xf32>
    %cst_155 = arith.constant dense<0.000000e+00> : vector<16xf32>
    %369 = vector.multi_reduction <add>, %368, %cst_155 [1] : vector<16x32xf32> to vector<16xf32>
    %370 = vector.shape_cast %369 : vector<16xf32> to vector<16x1xf32>
    %cst_156 = arith.constant 3.200000e+01 : f32
    %371 = vector.broadcast %cst_156 : f32 to vector<16x1xf32>
    %372 = arith.divf %370, %371 : vector<16x1xf32>
    %373 = vector.broadcast %365 : vector<16x1xf32> to vector<16x32xf32>
    %374 = arith.subf %357, %373 : vector<16x32xf32>
    %cst_157 = arith.constant 9.99999996E-13 : f32
    %375 = vector.broadcast %cst_157 : f32 to vector<16x1xf32>
    %376 = arith.addf %372, %375 : vector<16x1xf32>
    %377 = math.rsqrt %376 : vector<16x1xf32>
    %378 = vector.broadcast %377 : vector<16x1xf32> to vector<16x32xf32>
    %379 = arith.mulf %374, %378 : vector<16x32xf32>
    %380 = vector.broadcast %359 : vector<1x32xf32> to vector<16x32xf32>
    %381 = arith.mulf %379, %380 : vector<16x32xf32>
    %382 = vector.broadcast %361 : vector<1x32xf32> to vector<16x32xf32>
    %383 = arith.addf %381, %382 : vector<16x32xf32>
    %384 = vector.extract_strided_slice %383 {offsets = [0, 0], sizes = [1, 32], strides = [1, 1]} : vector<16x32xf32> to vector<1x32xf32>
    %385 = vector.extract_strided_slice %383 {offsets = [8, 0], sizes = [1, 32], strides = [1, 1]} : vector<16x32xf32> to vector<1x32xf32>
    %386 = tpu.concatenate %384, %385 in 0 : vector<1x32xf32>, vector<1x32xf32> -> vector<2x32xf32>
    %c0_158 = arith.constant 0 : index
    %c0_159 = arith.constant 0 : index
    %387 = vector.load %arg16[%c0_158, %c0_159] : memref<32x1xf32, #tpu.memory_space<vmem>>, vector<32x1xf32>
    %cst_160 = arith.constant dense<0.000000e+00> : vector<2x1xf32>
    %388 = tpu.matmul %386, %387, %cst_160 {dimension_numbers = #tpu.dot_dimension_numbers<[1], [0], [0], [1], [0, 0, 1, 1], [], []>} : vector<2x32xf32>, vector<32x1xf32>, vector<2x1xf32> -> vector<2x1xf32>
    %c0_161 = arith.constant 0 : index
    %c0_162 = arith.constant 0 : index
    %389 = vector.load %arg17[%c0_161, %c0_162] : memref<1x1xf32, #tpu.memory_space<vmem>>, vector<1x1xf32>
    %390 = vector.broadcast %389 : vector<1x1xf32> to vector<2x1xf32>
    %391 = arith.addf %388, %390 : vector<2x1xf32>
    %c0_163 = arith.constant 0 : index
    %c0_164 = arith.constant 0 : index
    %392 = vector.load %arg18[%c0_163, %c0_164] : memref<2x1xf32, #tpu.memory_space<vmem>>, vector<2x1xf32>
    tpu.vector_store %arg18[%c0_163, %c0_164], %391 {strides = array<i32>} : memref<2x1xf32, #tpu.memory_space<vmem>>, vector<2x1xf32>,
    return
  }
}

</mosaic_0001>

<llo_original>
// kernel: regression_model_forward.1
$region0: #{regression_model_forward.1}
  #allocation0 [shape = 'u32[]', space=smem, size = 0x4, offset = 0x4, fixed_abs, tag = 'smem constant byte address 0x4 - core index']
  #allocation1 [shape = 'u32[144,128]{1,0:T(1,128)}', space=vmem, size = 0x12000, scoped, tag = 'internal scratch']
  #allocation2 [shape = 'f32[1,1]{1,0:T(1,128)S(1)}', space=vmem, size = 0x200, scoped, tag = 'scoped memory for regression_model_forward.1']
  %s0 = inlined_call_operand.vmem [shape: f32[16,32], index: 0, kind: input, shape index: {}]
  %s1 = inlined_call_operand.vmem [shape: f32[2,8], index: 1, kind: input, shape index: {}]
  %s2 = inlined_call_operand.vmem [shape: f32[1,32], index: 2, kind: input, shape index: {}]
  %s3 = inlined_call_operand.vmem [shape: f32[1,32], index: 3, kind: input, shape index: {}]
  %s4 = inlined_call_operand.vmem [shape: f32[2,32,96], index: 4, kind: input, shape index: {}]
  %s5 = inlined_call_operand.vmem [shape: f32[2,1,96], index: 5, kind: input, shape index: {}]
  %s6 = inlined_call_operand.vmem [shape: f32[2,32,32], index: 6, kind: input, shape index: {}]
  %s7 = inlined_call_operand.vmem [shape: f32[2,1,32], index: 7, kind: input, shape index: {}]
  %s8 = inlined_call_operand.vmem [shape: f32[2,1,32], index: 8, kind: input, shape index: {}]
  %s9 = inlined_call_operand.vmem [shape: f32[2,1,32], index: 9, kind: input, shape index: {}]
  %s10 = inlined_call_operand.vmem [shape: f32[2,32,64], index: 10, kind: input, shape index: {}]
  %s11 = inlined_call_operand.vmem [shape: f32[2,1,64], index: 11, kind: input, shape index: {}]
  %s12 = inlined_call_operand.vmem [shape: f32[2,64,32], index: 12, kind: input, shape index: {}]
  %s13 = inlined_call_operand.vmem [shape: f32[2,1,32], index: 13, kind: input, shape index: {}]
  %s14 = inlined_call_operand.vmem [shape: f32[2,1,32], index: 14, kind: input, shape index: {}]
  %s15 = inlined_call_operand.vmem [shape: f32[2,1,32], index: 15, kind: input, shape index: {}]
  %s16 = inlined_call_operand.vmem [shape: f32[32,1], index: 16, kind: input, shape index: {}]
  %s17 = inlined_call_operand.<no memory space> [shape: f32[1,1], index: 17, kind: input, shape index: {}]
  %s18 = inlined_call_operand.vmem [shape: f32[2,1], index: 18, kind: output, shape index: {}]
  %s19 = sld [smem:[#allocation0]]
  $region82: #{regression_model_forward.1} parent=0
    _
  %s21 = ssub.s32 1, %s19
  %s22 = scalar_select 0, %s21, %s19
  %v23 = vstv %s17
  %24 = vst [vmem:[#allocation2] sm:$0x1] %v23
  // Predicated region
  $region2: #{regression_model_forward.1} parent=0 // pred_check
    _
  $region3: #{regression_model_forward.1} parent=0 // pred_check_branch
    %26 = sbr.rel (0) target = $region5
  $region4: #{regression_model_forward.1} parent=0 // pred_region
    _
  $region5: #{regression_model_forward.1} parent=0 // pred_fallthru
    _
  // Predicated region
  $region6: #{regression_model_forward.1} parent=0 // pred_check
    _
  $region7: #{regression_model_forward.1} parent=0 // pred_check_branch
    %28 = sbr.rel (0) target = $region9
  $region8: #{regression_model_forward.1} parent=0 // pred_region
    _
  $region9: #{regression_model_forward.1} parent=0 // pred_fallthru
    _
  // Predicated region
  $region10: #{regression_model_forward.1} parent=0 // pred_check
    _
  $region11: #{regression_model_forward.1} parent=0 // pred_check_branch
    %30 = sbr.rel (0) target = $region13
  $region12: #{regression_model_forward.1} parent=0 // pred_region
    _
  $region13: #{regression_model_forward.1} parent=0 // pred_fallthru
    _
  // Predicated region
  $region14: #{regression_model_forward.1} parent=0 // pred_check
    _
  $region15: #{regression_model_forward.1} parent=0 // pred_check_branch
    %32 = sbr.rel (0) target = $region17
  $region16: #{regression_model_forward.1} parent=0 // pred_region
    _
  $region17: #{regression_model_forward.1} parent=0 // pred_fallthru
    _
  // Predicated region
  $region18: #{regression_model_forward.1} parent=0 // pred_check
    _
  $region19: #{regression_model_forward.1} parent=0 // pred_check_branch
    %34 = sbr.rel (0) target = $region21
  $region20: #{regression_model_forward.1} parent=0 // pred_region
    _
  $region21: #{regression_model_forward.1} parent=0 // pred_fallthru
    _
  // Predicated region
  $region22: #{regression_model_forward.1} parent=0 // pred_check
    _
  $region23: #{regression_model_forward.1} parent=0 // pred_check_branch
    %36 = sbr.rel (0) target = $region25
  $region24: #{regression_model_forward.1} parent=0 // pred_region
    _
  $region25: #{regression_model_forward.1} parent=0 // pred_fallthru
    _
  // Predicated region
  $region26: #{regression_model_forward.1} parent=0 // pred_check
    _
  $region27: #{regression_model_forward.1} parent=0 // pred_check_branch
    %38 = sbr.rel (0) target = $region29
  $region28: #{regression_model_forward.1} parent=0 // pred_region
    _
  $region29: #{regression_model_forward.1} parent=0 // pred_fallthru
    _
  // Predicated region
  $region30: #{regression_model_forward.1} parent=0 // pred_check
    _
  $region31: #{regression_model_forward.1} parent=0 // pred_check_branch
    %40 = sbr.rel (0) target = $region33
  $region32: #{regression_model_forward.1} parent=0 // pred_region
    _
  $region33: #{regression_model_forward.1} parent=0 // pred_fallthru
    _
  // Predicated region
  $region34: #{regression_model_forward.1} parent=0 // pred_check
    _
  $region35: #{regression_model_forward.1} parent=0 // pred_check_branch
    %42 = sbr.rel (0) target = $region37
  $region36: #{regression_model_forward.1} parent=0 // pred_region
    _
  $region37: #{regression_model_forward.1} parent=0 // pred_fallthru
    _
  // Predicated region
  $region38: #{regression_model_forward.1} parent=0 // pred_check
    _
  $region39: #{regression_model_forward.1} parent=0 // pred_check_branch
    %44 = sbr.rel (0) target = $region41
  $region40: #{regression_model_forward.1} parent=0 // pred_region
    _
  $region41: #{regression_model_forward.1} parent=0 // pred_fallthru
    _
  // Predicated region
  $region42: #{regression_model_forward.1} parent=0 // pred_check
    _
  $region43: #{regression_model_forward.1} parent=0 // pred_check_branch
    %46 = sbr.rel (0) target = $region45
  $region44: #{regression_model_forward.1} parent=0 // pred_region
    _
  $region45: #{regression_model_forward.1} parent=0 // pred_fallthru
    _
  // Predicated region
  $region46: #{regression_model_forward.1} parent=0 // pred_check
    _
  $region47: #{regression_model_forward.1} parent=0 // pred_check_branch
    %48 = sbr.rel (0) target = $region49
  $region48: #{regression_model_forward.1} parent=0 // pred_region
    _
  $region49: #{regression_model_forward.1} parent=0 // pred_fallthru
    _
  // Predicated region
  $region50: #{regression_model_forward.1} parent=0 // pred_check
    _
  $region51: #{regression_model_forward.1} parent=0 // pred_check_branch
    %50 = sbr.rel (0) target = $region53
  $region52: #{regression_model_forward.1} parent=0 // pred_region
    _
  $region53: #{regression_model_forward.1} parent=0 // pred_fallthru
    _
  // Predicated region
  $region54: #{regression_model_forward.1} parent=0 // pred_check
    _
  $region55: #{regression_model_forward.1} parent=0 // pred_check_branch
    %52 = sbr.rel (0) target = $region57
  $region56: #{regression_model_forward.1} parent=0 // pred_region
    _
  $region57: #{regression_model_forward.1} parent=0 // pred_fallthru
    _
  // Predicated region
  $region58: #{regression_model_forward.1} parent=0 // pred_check
    _
  $region59: #{regression_model_forward.1} parent=0 // pred_check_branch
    %54 = sbr.rel (0) target = $region61
  $region60: #{regression_model_forward.1} parent=0 // pred_region
    _
  $region61: #{regression_model_forward.1} parent=0 // pred_fallthru
    _
  // Predicated region
  $region62: #{regression_model_forward.1} parent=0 // pred_check
    _
  $region63: #{regression_model_forward.1} parent=0 // pred_check_branch
    %56 = sbr.rel (0) target = $region65
  $region64: #{regression_model_forward.1} parent=0 // pred_region
    _
  $region65: #{regression_model_forward.1} parent=0 // pred_fallthru
    _
  // Predicated region
  $region66: #{regression_model_forward.1} parent=0 // pred_check
    _
  $region67: #{regression_model_forward.1} parent=0 // pred_check_branch
    %58 = sbr.rel (0) target = $region69
  $region68: #{regression_model_forward.1} parent=0 // pred_region
    _
  $region69: #{regression_model_forward.1} parent=0 // pred_fallthru
    _
  // Predicated region
  $region70: #{regression_model_forward.1} parent=0 // pred_check
    _
  $region71: #{regression_model_forward.1} parent=0 // pred_check_branch
    %60 = sbr.rel (0) target = $region73
  $region72: #{regression_model_forward.1} parent=0 // pred_region
    _
  $region73: #{regression_model_forward.1} parent=0 // pred_fallthru
    _
  %v61 = vld [vmem:[%s1] sm:$0x3]
  %v62 = vld [vmem:[%s0] sm:$0xff]
  %v63 = vld [vmem:[%s0 + $0x8] sm:$0xff]
  %v64 = vld [vmem:[%s2] sm:$0x1]
  %v65 = vld [vmem:[%s3] sm:$0x1]
  %vm66 = vcmask 261120
  %v67 = vsel %vm66, %v62, 0.0
  %68 = vadd.xlane.f32.xlu0 %v67
  %v69 = vpop.xlane.xlu0 %68
  %v70 = vsel %vm66, %v63, 0.0
  %71 = vadd.xlane.f32.xlu0 %v70
  %v72 = vpop.xlane.xlu0 %71
  %v73 = vrcp.pop 32.0
  %v74 = vmul.f32 %v69, %v73
  %v75 = vmul.f32 %v72, %v73
  %v76 = vsub.f32 %v62, %v74
  %v77 = vsub.f32 %v63, %v75
  %v78 = vmul.f32 %v76, %v76
  %v79 = vmul.f32 %v77, %v77
  %v80 = vsel %vm66, %v78, 0.0
  %81 = vadd.xlane.f32.xlu0 %v80
  %v82 = vpop.xlane.xlu0 %81
  %v83 = vsel %vm66, %v79, 0.0
  %84 = vadd.xlane.f32.xlu0 %v83
  %v85 = vpop.xlane.xlu0 %84
  %v86 = vmul.f32 %v82, %v73
  %v87 = vmul.f32 %v85, %v73
  %v88 = vadd.f32 %v86, 1e-12
  %v89 = vadd.f32 %v87, 1e-12
  %v90 = vrsqrt.pop %v88
  %v91 = vrsqrt.pop %v89
  %v92 = vmul.f32 %v76, %v90
  %v93 = vmul.f32 %v77, %v91
  %v95 = vlaneseq
  %v96 = vshrl.u32 %v95, 7
  %v97 = vsub.s32 0, %v96
  %v98 = vrot.slane %v64, %v97
  %v100 = vmul.f32 %v92, %v98
  %v101 = vmul.f32 %v93, %v98
  %v103 = vlaneseq
  %v104 = vshrl.u32 %v103, 7
  %v105 = vsub.s32 0, %v104
  %v106 = vrot.slane %v65, %v105
  %v108 = vadd.f32 %v100, %v106
  %v109 = vadd.f32 %v101, %v106
  %v110 = vld [vmem:[%s4] sm:$0xff]
  %v111 = vld [vmem:[%s4 + $0x8] sm:$0xff]
  %v112 = vld [vmem:[%s4 + $0x10] sm:$0xff]
  %v113 = vld [vmem:[%s4 + $0x18] sm:$0xff]
  %v114 = vld [vmem:[%s5] sm:$0x1]
  %v116 = vlaneseq
  %v117 = vshrl.u32 %v116, 7
  %v118 = vsub.s32 0, %v117
  %v119 = vrot.slane %v114, %v118
  %v122 = vsel %vm66, %v108, 0
  %v125 = vsel %vm66, %v109, 0
  %127 = vmatprep.subr.mxu0 0.0
  %128 = vmatpush1.msra.mxu0 %v110
  %129 = vmatprep.subr.mxu0 0.0
  %130 = vmatpush1.msra.mxu0 %v111
  %131 = vmatprep.subr.mxu0 0.0
  %132 = vmatpush1.msra.mxu0 %v112
  %133 = vmatprep.subr.mxu0 0.0
  %134 = vmatpush1.msra.mxu0 %v113
  %135 = vmatprep.subr.mxu0 0.0
  %136 = vmatpush1.msra.mxu0 0.0
  %137 = vmatprep.subr.mxu0 0.0
  %138 = vmatpush1.msra.mxu0 0.0
  %139 = vmatprep.subr.mxu0 0.0
  %140 = vmatpush1.msra.mxu0 0.0
  %141 = vmatprep.subr.mxu0 0.0
  %142 = vmatpush1.msra.mxu0 0.0
  %143 = vmatprep.subr.mxu0 0.0
  %144 = vmatpush1.msra.mxu0 0.0
  %145 = vmatprep.subr.mxu0 0.0
  %146 = vmatpush1.msra.mxu0 0.0
  %147 = vmatprep.subr.mxu0 0.0
  %148 = vmatpush1.msra.mxu0 0.0
  %149 = vmatprep.subr.mxu0 0.0
  %150 = vmatpush1.msra.mxu0 0.0
  %151 = vmatprep.subr.mxu0 0.0
  %152 = vmatpush1.msra.mxu0 0.0
  %153 = vmatprep.subr.mxu0 0.0
  %154 = vmatpush1.msra.mxu0 0.0
  %155 = vmatprep.subr.mxu0 0.0
  %156 = vmatpush1.msra.mxu0 0.0
  %157 = vmatprep.subr.mxu0 0.0
  %158 = vmatpush1.msra.mxu0 0.0
  %159 = vmatprep.subr.mxu0 0.0
  %160 = vmatpush1.msra.mxu0 0.0
  %161 = vmatprep.subr.mxu0 0.0
  %162 = vmatpush1.msra.mxu0 0.0
  %163 = vmatprep.subr.mxu0 0.0
  %164 = vmatpush1.msra.mxu0 0.0
  %165 = vmatprep.subr.mxu0 0.0
  %166 = vmatpush1.msra.mxu0 0.0
  %167 = vmatprep.subr.mxu0 0.0
  %168 = vmatpush1.msra.mxu0 0.0
  %169 = vmatprep.subr.mxu0 0.0
  %170 = vmatpush1.msra.mxu0 0.0
  %171 = vmatprep.subr.mxu0 0.0
  %172 = vmatpush1.msra.mxu0 0.0
  %173 = vmatprep.subr.mxu0 0.0
  %174 = vmatpush1.msra.mxu0 0.0
  %175 = vmatprep.subr.mxu0 0.0
  %176 = vmatpush1.msra.mxu0 0.0
  %177 = vmatprep.subr.mxu0 0.0
  %178 = vmatpush1.msra.mxu0 0.0
  %179 = vmatprep.subr.mxu0 0.0
  %180 = vmatpush1.msra.mxu0 0.0
  %181 = vmatprep.subr.mxu0 0.0
  %182 = vmatpush1.msra.mxu0 0.0
  %183 = vmatprep.subr.mxu0 0.0
  %184 = vmatpush1.msra.mxu0 0.0
  %185 = vmatprep.subr.mxu0 0.0
  %186 = vmatpush1.msra.mxu0 0.0
  %187 = vmatprep.subr.mxu0 0.0
  %188 = vmatpush1.msra.mxu0 0.0
  %189 = vmatprep.subr.mxu0 0.0
  %190 = vmatpush1.msra.mxu0 0.0
  %191 = vmatprep.mubr.f32.mxu0 0.0
  %192 = vmatmul.mubr.f32.gmra.mrb[0].mxu0 %v122
  %v193 = vpop.f32.mrb[0].mxu0
  %v194 = vadd.f32 %v119, %v193
  %v195 = vpop.f32.mrb[0].mxu0
  %196 = vmatprep.mubr.f32.mxu0 0.0
  %197 = vmatmul.mubr.f32.gmra.mrb[0].mxu0 %v125
  %v198 = vpop.f32.mrb[0].mxu0
  %v199 = vadd.f32 %v119, %v198
  %v200 = vpop.f32.mrb[0].mxu0
  %201 = vdwg.mxu0
  %203 = vrot.lane.b32.xlu0 %v194, 96
  %v204 = vpop.permute.xlu0 %203
  %vm205 = vcmask 130048
  %v206 = vsel %vm205, %v194, 0
  %v208 = vsel %vm205, %v204, 0
  %210 = vmatprep.subr.mxu0 0.0
  %211 = vmatpush1.xpose.msra.mxu0 %v208
  %212 = vmatprep.subr.mxu0 0.0
  %213 = vmatpush1.xpose.msra.mxu0 0.0
  %214 = vmatprep.subr.mxu0 0.0
  %215 = vmatpush1.xpose.msra.mxu0 0.0
  %216 = vmatprep.subr.mxu0 0.0
  %217 = vmatpush1.xpose.msra.mxu0 0.0
  %218 = vmatprep.subr.mxu0 0.0
  %219 = vmatpush1.xpose.msra.mxu0 0.0
  %220 = vmatprep.subr.mxu0 0.0
  %221 = vmatpush1.xpose.msra.mxu0 0.0
  %222 = vmatprep.subr.mxu0 0.0
  %223 = vmatpush1.xpose.msra.mxu0 0.0
  %224 = vmatprep.subr.mxu0 0.0
  %225 = vmatpush1.xpose.msra.mxu0 0.0
  %226 = vmatprep.subr.mxu0 0.0
  %227 = vmatpush1.xpose.msra.mxu0 0.0
  %228 = vmatprep.subr.mxu0 0.0
  %229 = vmatpush1.xpose.msra.mxu0 0.0
  %230 = vmatprep.subr.mxu0 0.0
  %231 = vmatpush1.xpose.msra.mxu0 0.0
  %232 = vmatprep.subr.mxu0 0.0
  %233 = vmatpush1.xpose.msra.mxu0 0.0
  %234 = vmatprep.subr.mxu0 0.0
  %235 = vmatpush1.xpose.msra.mxu0 0.0
  %236 = vmatprep.subr.mxu0 0.0
  %237 = vmatpush1.xpose.msra.mxu0 0.0
  %238 = vmatprep.subr.mxu0 0.0
  %239 = vmatpush1.xpose.msra.mxu0 0.0
  %240 = vmatprep.subr.mxu0 0.0
  %241 = vmatpush1.xpose.msra.mxu0 0.0
  %242 = vmatprep.subr.mxu0 0.0
  %243 = vmatpush1.xpose.msra.mxu0 0.0
  %244 = vmatprep.subr.mxu0 0.0
  %245 = vmatpush1.xpose.msra.mxu0 0.0
  %246 = vmatprep.subr.mxu0 0.0
  %247 = vmatpush1.xpose.msra.mxu0 0.0
  %248 = vmatprep.subr.mxu0 0.0
  %249 = vmatpush1.xpose.msra.mxu0 0.0
  %250 = vmatprep.subr.mxu0 0.0
  %251 = vmatpush1.xpose.msra.mxu0 0.0
  %252 = vmatprep.subr.mxu0 0.0
  %253 = vmatpush1.xpose.msra.mxu0 0.0
  %254 = vmatprep.subr.mxu0 0.0
  %255 = vmatpush1.xpose.msra.mxu0 0.0
  %256 = vmatprep.subr.mxu0 0.0
  %257 = vmatpush1.xpose.msra.mxu0 0.0
  %258 = vmatprep.subr.mxu0 0.0
  %259 = vmatpush1.xpose.msra.mxu0 0.0
  %260 = vmatprep.subr.mxu0 0.0
  %261 = vmatpush1.xpose.msra.mxu0 0.0
  %262 = vmatprep.subr.mxu0 0.0
  %263 = vmatpush1.xpose.msra.mxu0 0.0
  %264 = vmatprep.subr.mxu0 0.0
  %265 = vmatpush1.xpose.msra.mxu0 0.0
  %266 = vmatprep.subr.mxu0 0.0
  %267 = vmatpush1.xpose.msra.mxu0 0.0
  %268 = vmatprep.subr.mxu0 0.0
  %269 = vmatpush1.xpose.msra.mxu0 0.0
  %270 = vmatprep.subr.mxu0 0.0
  %271 = vmatpush1.xpose.msra.mxu0 0.0
  %272 = vmatprep.subr.mxu0 0.0
  %273 = vmatpush1.xpose.msra.mxu0 0.0
  %274 = vmatprep.mubr.f32.mxu0 0.0
  %275 = vmatmul.mubr.f32.gmra.mrb[0].mxu0 %v206
  %v276 = vpop.f32.mrb[0].mxu0
  %v277 = vadd.f32 0.0, %v276
  %v278 = vpop.f32.mrb[0].mxu0
  %279 = vdwg.mxu0
  %v280 = vmul.f32 %v277, 0.25
  %v281 = vlaneseq
  %v282 = vshrl.u32 %v281, 7
  %v283 = vsub.s32 0, %v282
  %v284 = vrot.slane %v61, %v283
  %v285 = vadd.f32 %v280, %v284
  %vm286 = vcmask 64512
  %v287 = vsel %vm286, %v285, -inf
  %288 = vmax.xlane.f32.xlu0 %v287
  %v289 = vpop.xlane.xlu0 %288
  %v290 = vsub.f32 %v285, %v289
  %v291 = vmul.f32 %v290, 1.442695
  %v292 = vpow.pop %v291
  %v293 = vsel %vm286, %v292, 0.0
  %294 = vadd.xlane.f32.xlu0 %v293
  %v295 = vpop.xlane.xlu0 %294
  %v296 = vrcp.pop %v295
  %v297 = vmul.f32 %v292, %v296
  %298 = vrot.lane.b32.xlu0 %v194, 64
  %v299 = vpop.permute.xlu0 %298
  %v302 = vsel %vm286, %v297, 0
  %304 = vmatprep.subr.mxu0 0.0
  %305 = vmatpush1.msra.mxu0 %v299
  %306 = vmatprep.subr.mxu0 0.0
  %307 = vmatpush1.msra.mxu0 0.0
  %308 = vmatprep.subr.mxu0 0.0
  %309 = vmatpush1.msra.mxu0 0.0
  %310 = vmatprep.subr.mxu0 0.0
  %311 = vmatpush1.msra.mxu0 0.0
  %312 = vmatprep.subr.mxu0 0.0
  %313 = vmatpush1.msra.mxu0 0.0
  %314 = vmatprep.subr.mxu0 0.0
  %315 = vmatpush1.msra.mxu0 0.0
  %316 = vmatprep.subr.mxu0 0.0
  %317 = vmatpush1.msra.mxu0 0.0
  %318 = vmatprep.subr.mxu0 0.0
  %319 = vmatpush1.msra.mxu0 0.0
  %320 = vmatprep.subr.mxu0 0.0
  %321 = vmatpush1.msra.mxu0 0.0
  %322 = vmatprep.subr.mxu0 0.0
  %323 = vmatpush1.msra.mxu0 0.0
  %324 = vmatprep.subr.mxu0 0.0
  %325 = vmatpush1.msra.mxu0 0.0
  %326 = vmatprep.subr.mxu0 0.0
  %327 = vmatpush1.msra.mxu0 0.0
  %328 = vmatprep.subr.mxu0 0.0
  %329 = vmatpush1.msra.mxu0 0.0
  %330 = vmatprep.subr.mxu0 0.0
  %331 = vmatpush1.msra.mxu0 0.0
  %332 = vmatprep.subr.mxu0 0.0
  %333 = vmatpush1.msra.mxu0 0.0
  %334 = vmatprep.subr.mxu0 0.0
  %335 = vmatpush1.msra.mxu0 0.0
  %336 = vmatprep.subr.mxu0 0.0
  %337 = vmatpush1.msra.mxu0 0.0
  %338 = vmatprep.subr.mxu0 0.0
  %339 = vmatpush1.msra.mxu0 0.0
  %340 = vmatprep.subr.mxu0 0.0
  %341 = vmatpush1.msra.mxu0 0.0
  %342 = vmatprep.subr.mxu0 0.0
  %343 = vmatpush1.msra.mxu0 0.0
  %344 = vmatprep.subr.mxu0 0.0
  %345 = vmatpush1.msra.mxu0 0.0
  %346 = vmatprep.subr.mxu0 0.0
  %347 = vmatpush1.msra.mxu0 0.0
  %348 = vmatprep.subr.mxu0 0.0
  %349 = vmatpush1.msra.mxu0 0.0
  %350 = vmatprep.subr.mxu0 0.0
  %351 = vmatpush1.msra.mxu0 0.0
  %352 = vmatprep.subr.mxu0 0.0
  %353 = vmatpush1.msra.mxu0 0.0
  %354 = vmatprep.subr.mxu0 0.0
  %355 = vmatpush1.msra.mxu0 0.0
  %356 = vmatprep.subr.mxu0 0.0
  %357 = vmatpush1.msra.mxu0 0.0
  %358 = vmatprep.subr.mxu0 0.0
  %359 = vmatpush1.msra.mxu0 0.0
  %360 = vmatprep.subr.mxu0 0.0
  %361 = vmatpush1.msra.mxu0 0.0
  %362 = vmatprep.subr.mxu0 0.0
  %363 = vmatpush1.msra.mxu0 0.0
  %364 = vmatprep.subr.mxu0 0.0
  %365 = vmatpush1.msra.mxu0 0.0
  %366 = vmatprep.subr.mxu0 0.0
  %367 = vmatpush1.msra.mxu0 0.0
  %368 = vmatprep.mubr.f32.mxu0 0.0
  %369 = vmatmul.mubr.f32.gmra.mrb[0].mxu0 %v302
  %v370 = vpop.f32.mrb[0].mxu0
  %v371 = vadd.f32 0.0, %v370
  %v372 = vpop.f32.mrb[0].mxu0
  %373 = vdwg.mxu0
  %374 = vrot.lane.b32.xlu0 %v194, 112
  %v375 = vpop.permute.xlu0 %374
  %376 = vrot.lane.b32.xlu0 %v194, 80
  %v377 = vpop.permute.xlu0 %376
  %v378 = vsel %vm205, %v375, 0
  %v380 = vsel %vm205, %v377, 0
  %382 = vmatprep.subr.mxu0 0.0
  %383 = vmatpush1.xpose.msra.mxu0 %v380
  %384 = vmatprep.subr.mxu0 0.0
  %385 = vmatpush1.xpose.msra.mxu0 0.0
  %386 = vmatprep.subr.mxu0 0.0
  %387 = vmatpush1.xpose.msra.mxu0 0.0
  %388 = vmatprep.subr.mxu0 0.0
  %389 = vmatpush1.xpose.msra.mxu0 0.0
  %390 = vmatprep.subr.mxu0 0.0
  %391 = vmatpush1.xpose.msra.mxu0 0.0
  %392 = vmatprep.subr.mxu0 0.0
  %393 = vmatpush1.xpose.msra.mxu0 0.0
  %394 = vmatprep.subr.mxu0 0.0
  %395 = vmatpush1.xpose.msra.mxu0 0.0
  %396 = vmatprep.subr.mxu0 0.0
  %397 = vmatpush1.xpose.msra.mxu0 0.0
  %398 = vmatprep.subr.mxu0 0.0
  %399 = vmatpush1.xpose.msra.mxu0 0.0
  %400 = vmatprep.subr.mxu0 0.0
  %401 = vmatpush1.xpose.msra.mxu0 0.0
  %402 = vmatprep.subr.mxu0 0.0
  %403 = vmatpush1.xpose.msra.mxu0 0.0
  %404 = vmatprep.subr.mxu0 0.0
  %405 = vmatpush1.xpose.msra.mxu0 0.0
  %406 = vmatprep.subr.mxu0 0.0
  %407 = vmatpush1.xpose.msra.mxu0 0.0
  %408 = vmatprep.subr.mxu0 0.0
  %409 = vmatpush1.xpose.msra.mxu0 0.0
  %410 = vmatprep.subr.mxu0 0.0
  %411 = vmatpush1.xpose.msra.mxu0 0.0
  %412 = vmatprep.subr.mxu0 0.0
  %413 = vmatpush1.xpose.msra.mxu0 0.0
  %414 = vmatprep.subr.mxu0 0.0
  %415 = vmatpush1.xpose.msra.mxu0 0.0
  %416 = vmatprep.subr.mxu0 0.0
  %417 = vmatpush1.xpose.msra.mxu0 0.0
  %418 = vmatprep.subr.mxu0 0.0
  %419 = vmatpush1.xpose.msra.mxu0 0.0
  %420 = vmatprep.subr.mxu0 0.0
  %421 = vmatpush1.xpose.msra.mxu0 0.0
  %422 = vmatprep.subr.mxu0 0.0
  %423 = vmatpush1.xpose.msra.mxu0 0.0
  %424 = vmatprep.subr.mxu0 0.0
  %425 = vmatpush1.xpose.msra.mxu0 0.0
  %426 = vmatprep.subr.mxu0 0.0
  %427 = vmatpush1.xpose.msra.mxu0 0.0
  %428 = vmatprep.subr.mxu0 0.0
  %429 = vmatpush1.xpose.msra.mxu0 0.0
  %430 = vmatprep.subr.mxu0 0.0
  %431 = vmatpush1.xpose.msra.mxu0 0.0
  %432 = vmatprep.subr.mxu0 0.0
  %433 = vmatpush1.xpose.msra.mxu0 0.0
  %434 = vmatprep.subr.mxu0 0.0
  %435 = vmatpush1.xpose.msra.mxu0 0.0
  %436 = vmatprep.subr.mxu0 0.0
  %437 = vmatpush1.xpose.msra.mxu0 0.0
  %438 = vmatprep.subr.mxu0 0.0
  %439 = vmatpush1.xpose.msra.mxu0 0.0
  %440 = vmatprep.subr.mxu0 0.0
  %441 = vmatpush1.xpose.msra.mxu0 0.0
  %442 = vmatprep.subr.mxu0 0.0
  %443 = vmatpush1.xpose.msra.mxu0 0.0
  %444 = vmatprep.subr.mxu0 0.0
  %445 = vmatpush1.xpose.msra.mxu0 0.0
  %446 = vmatprep.mubr.f32.mxu0 0.0
  %447 = vmatmul.mubr.f32.gmra.mrb[0].mxu0 %v378
  %v448 = vpop.f32.mrb[0].mxu0
  %v449 = vadd.f32 0.0, %v448
  %v450 = vpop.f32.mrb[0].mxu0
  %451 = vdwg.mxu0
  %v452 = vmul.f32 %v449, 0.25
  %v453 = vadd.f32 %v452, %v284
  %v454 = vsel %vm286, %v453, -inf
  %455 = vmax.xlane.f32.xlu0 %v454
  %v456 = vpop.xlane.xlu0 %455
  %v457 = vsub.f32 %v453, %v456
  %v458 = vmul.f32 %v457, 1.442695
  %v459 = vpow.pop %v458
  %v460 = vsel %vm286, %v459, 0.0
  %461 = vadd.xlane.f32.xlu0 %v460
  %v462 = vpop.xlane.xlu0 %461
  %v463 = vrcp.pop %v462
  %v464 = vmul.f32 %v459, %v463
  %465 = vrot.lane.b32.xlu0 %v194, 48
  %v466 = vpop.permute.xlu0 %465
  %v469 = vsel %vm286, %v464, 0
  %471 = vmatprep.subr.mxu0 0.0
  %472 = vmatpush1.msra.mxu0 %v466
  %473 = vmatprep.subr.mxu0 0.0
  %474 = vmatpush1.msra.mxu0 0.0
  %475 = vmatprep.subr.mxu0 0.0
  %476 = vmatpush1.msra.mxu0 0.0
  %477 = vmatprep.subr.mxu0 0.0
  %478 = vmatpush1.msra.mxu0 0.0
  %479 = vmatprep.subr.mxu0 0.0
  %480 = vmatpush1.msra.mxu0 0.0
  %481 = vmatprep.subr.mxu0 0.0
  %482 = vmatpush1.msra.mxu0 0.0
  %483 = vmatprep.subr.mxu0 0.0
  %484 = vmatpush1.msra.mxu0 0.0
  %485 = vmatprep.subr.mxu0 0.0
  %486 = vmatpush1.msra.mxu0 0.0
  %487 = vmatprep.subr.mxu0 0.0
  %488 = vmatpush1.msra.mxu0 0.0
  %489 = vmatprep.subr.mxu0 0.0
  %490 = vmatpush1.msra.mxu0 0.0
  %491 = vmatprep.subr.mxu0 0.0
  %492 = vmatpush1.msra.mxu0 0.0
  %493 = vmatprep.subr.mxu0 0.0
  %494 = vmatpush1.msra.mxu0 0.0
  %495 = vmatprep.subr.mxu0 0.0
  %496 = vmatpush1.msra.mxu0 0.0
  %497 = vmatprep.subr.mxu0 0.0
  %498 = vmatpush1.msra.mxu0 0.0
  %499 = vmatprep.subr.mxu0 0.0
  %500 = vmatpush1.msra.mxu0 0.0
  %501 = vmatprep.subr.mxu0 0.0
  %502 = vmatpush1.msra.mxu0 0.0
  %503 = vmatprep.subr.mxu0 0.0
  %504 = vmatpush1.msra.mxu0 0.0
  %505 = vmatprep.subr.mxu0 0.0
  %506 = vmatpush1.msra.mxu0 0.0
  %507 = vmatprep.subr.mxu0 0.0
  %508 = vmatpush1.msra.mxu0 0.0
  %509 = vmatprep.subr.mxu0 0.0
  %510 = vmatpush1.msra.mxu0 0.0
  %511 = vmatprep.subr.mxu0 0.0
  %512 = vmatpush1.msra.mxu0 0.0
  %513 = vmatprep.subr.mxu0 0.0
  %514 = vmatpush1.msra.mxu0 0.0
  %515 = vmatprep.subr.mxu0 0.0
  %516 = vmatpush1.msra.mxu0 0.0
  %517 = vmatprep.subr.mxu0 0.0
  %518 = vmatpush1.msra.mxu0 0.0
  %519 = vmatprep.subr.mxu0 0.0
  %520 = vmatpush1.msra.mxu0 0.0
  %521 = vmatprep.subr.mxu0 0.0
  %522 = vmatpush1.msra.mxu0 0.0
  %523 = vmatprep.subr.mxu0 0.0
  %524 = vmatpush1.msra.mxu0 0.0
  %525 = vmatprep.subr.mxu0 0.0
  %526 = vmatpush1.msra.mxu0 0.0
  %527 = vmatprep.subr.mxu0 0.0
  %528 = vmatpush1.msra.mxu0 0.0
  %529 = vmatprep.subr.mxu0 0.0
  %530 = vmatpush1.msra.mxu0 0.0
  %531 = vmatprep.subr.mxu0 0.0
  %532 = vmatpush1.msra.mxu0 0.0
  %533 = vmatprep.subr.mxu0 0.0
  %534 = vmatpush1.msra.mxu0 0.0
  %535 = vmatprep.mubr.f32.mxu0 0.0
  %536 = vmatmul.mubr.f32.gmra.mrb[0].mxu0 %v469
  %v537 = vpop.f32.mrb[0].mxu0
  %v538 = vadd.f32 0.0, %v537
  %v539 = vpop.f32.mrb[0].mxu0
  %540 = vdwg.mxu0
  %542 = vrot.lane.b32.xlu0 %v538, 16
  %v543 = vpop.permute.xlu0 %542
  %v545 = vsel %vm205, %v371, %v543
  %547 = vrot.lane.b32.xlu0 %v199, 96
  %v548 = vpop.permute.xlu0 %547
  %v549 = vsel %vm205, %v199, 0
  %v551 = vsel %vm205, %v548, 0
  %553 = vmatprep.subr.mxu0 0.0
  %554 = vmatpush1.xpose.msra.mxu0 %v551
  %555 = vmatprep.subr.mxu0 0.0
  %556 = vmatpush1.xpose.msra.mxu0 0.0
  %557 = vmatprep.subr.mxu0 0.0
  %558 = vmatpush1.xpose.msra.mxu0 0.0
  %559 = vmatprep.subr.mxu0 0.0
  %560 = vmatpush1.xpose.msra.mxu0 0.0
  %561 = vmatprep.subr.mxu0 0.0
  %562 = vmatpush1.xpose.msra.mxu0 0.0
  %563 = vmatprep.subr.mxu0 0.0
  %564 = vmatpush1.xpose.msra.mxu0 0.0
  %565 = vmatprep.subr.mxu0 0.0
  %566 = vmatpush1.xpose.msra.mxu0 0.0
  %567 = vmatprep.subr.mxu0 0.0
  %568 = vmatpush1.xpose.msra.mxu0 0.0
  %569 = vmatprep.subr.mxu0 0.0
  %570 = vmatpush1.xpose.msra.mxu0 0.0
  %571 = vmatprep.subr.mxu0 0.0
  %572 = vmatpush1.xpose.msra.mxu0 0.0
  %573 = vmatprep.subr.mxu0 0.0
  %574 = vmatpush1.xpose.msra.mxu0 0.0
  %575 = vmatprep.subr.mxu0 0.0
  %576 = vmatpush1.xpose.msra.mxu0 0.0
  %577 = vmatprep.subr.mxu0 0.0
  %578 = vmatpush1.xpose.msra.mxu0 0.0
  %579 = vmatprep.subr.mxu0 0.0
  %580 = vmatpush1.xpose.msra.mxu0 0.0
  %581 = vmatprep.subr.mxu0 0.0
  %582 = vmatpush1.xpose.msra.mxu0 0.0
  %583 = vmatprep.subr.mxu0 0.0
  %584 = vmatpush1.xpose.msra.mxu0 0.0
  %585 = vmatprep.subr.mxu0 0.0
  %586 = vmatpush1.xpose.msra.mxu0 0.0
  %587 = vmatprep.subr.mxu0 0.0
  %588 = vmatpush1.xpose.msra.mxu0 0.0
  %589 = vmatprep.subr.mxu0 0.0
  %590 = vmatpush1.xpose.msra.mxu0 0.0
  %591 = vmatprep.subr.mxu0 0.0
  %592 = vmatpush1.xpose.msra.mxu0 0.0
  %593 = vmatprep.subr.mxu0 0.0
  %594 = vmatpush1.xpose.msra.mxu0 0.0
  %595 = vmatprep.subr.mxu0 0.0
  %596 = vmatpush1.xpose.msra.mxu0 0.0
  %597 = vmatprep.subr.mxu0 0.0
  %598 = vmatpush1.xpose.msra.mxu0 0.0
  %599 = vmatprep.subr.mxu0 0.0
  %600 = vmatpush1.xpose.msra.mxu0 0.0
  %601 = vmatprep.subr.mxu0 0.0
  %602 = vmatpush1.xpose.msra.mxu0 0.0
  %603 = vmatprep.subr.mxu0 0.0
  %604 = vmatpush1.xpose.msra.mxu0 0.0
  %605 = vmatprep.subr.mxu0 0.0
  %606 = vmatpush1.xpose.msra.mxu0 0.0
  %607 = vmatprep.subr.mxu0 0.0
  %608 = vmatpush1.xpose.msra.mxu0 0.0
  %609 = vmatprep.subr.mxu0 0.0
  %610 = vmatpush1.xpose.msra.mxu0 0.0
  %611 = vmatprep.subr.mxu0 0.0
  %612 = vmatpush1.xpose.msra.mxu0 0.0
  %613 = vmatprep.subr.mxu0 0.0
  %614 = vmatpush1.xpose.msra.mxu0 0.0
  %615 = vmatprep.subr.mxu0 0.0
  %616 = vmatpush1.xpose.msra.mxu0 0.0
  %617 = vmatprep.mubr.f32.mxu0 0.0
  %618 = vmatmul.mubr.f32.gmra.mrb[0].mxu0 %v549
  %v619 = vpop.f32.mrb[0].mxu0
  %v620 = vadd.f32 0.0, %v619
  %v621 = vpop.f32.mrb[0].mxu0
  %622 = vdwg.mxu0
  %v623 = vmul.f32 %v620, 0.25
  %v624 = vlaneseq
  %v625 = vshrl.u32 %v624, 7
  %v626 = vsub.s32 1, %v625
  %v627 = vrot.slane %v61, %v626
  %v628 = vadd.f32 %v623, %v627
  %v629 = vsel %vm286, %v628, -inf
  %630 = vmax.xlane.f32.xlu0 %v629
  %v631 = vpop.xlane.xlu0 %630
  %v632 = vsub.f32 %v628, %v631
  %v633 = vmul.f32 %v632, 1.442695
  %v634 = vpow.pop %v633
  %v635 = vsel %vm286, %v634, 0.0
  %636 = vadd.xlane.f32.xlu0 %v635
  %v637 = vpop.xlane.xlu0 %636
  %v638 = vrcp.pop %v637
  %v639 = vmul.f32 %v634, %v638
  %640 = vrot.lane.b32.xlu0 %v199, 64
  %v641 = vpop.permute.xlu0 %640
  %v644 = vsel %vm286, %v639, 0
  %646 = vmatprep.subr.mxu0 0.0
  %647 = vmatpush1.msra.mxu0 %v641
  %648 = vmatprep.subr.mxu0 0.0
  %649 = vmatpush1.msra.mxu0 0.0
  %650 = vmatprep.subr.mxu0 0.0
  %651 = vmatpush1.msra.mxu0 0.0
  %652 = vmatprep.subr.mxu0 0.0
  %653 = vmatpush1.msra.mxu0 0.0
  %654 = vmatprep.subr.mxu0 0.0
  %655 = vmatpush1.msra.mxu0 0.0
  %656 = vmatprep.subr.mxu0 0.0
  %657 = vmatpush1.msra.mxu0 0.0
  %658 = vmatprep.subr.mxu0 0.0
  %659 = vmatpush1.msra.mxu0 0.0
  %660 = vmatprep.subr.mxu0 0.0
  %661 = vmatpush1.msra.mxu0 0.0
  %662 = vmatprep.subr.mxu0 0.0
  %663 = vmatpush1.msra.mxu0 0.0
  %664 = vmatprep.subr.mxu0 0.0
  %665 = vmatpush1.msra.mxu0 0.0
  %666 = vmatprep.subr.mxu0 0.0
  %667 = vmatpush1.msra.mxu0 0.0
  %668 = vmatprep.subr.mxu0 0.0
  %669 = vmatpush1.msra.mxu0 0.0
  %670 = vmatprep.subr.mxu0 0.0
  %671 = vmatpush1.msra.mxu0 0.0
  %672 = vmatprep.subr.mxu0 0.0
  %673 = vmatpush1.msra.mxu0 0.0
  %674 = vmatprep.subr.mxu0 0.0
  %675 = vmatpush1.msra.mxu0 0.0
  %676 = vmatprep.subr.mxu0 0.0
  %677 = vmatpush1.msra.mxu0 0.0
  %678 = vmatprep.subr.mxu0 0.0
  %679 = vmatpush1.msra.mxu0 0.0
  %680 = vmatprep.subr.mxu0 0.0
  %681 = vmatpush1.msra.mxu0 0.0
  %682 = vmatprep.subr.mxu0 0.0
  %683 = vmatpush1.msra.mxu0 0.0
  %684 = vmatprep.subr.mxu0 0.0
  %685 = vmatpush1.msra.mxu0 0.0
  %686 = vmatprep.subr.mxu0 0.0
  %687 = vmatpush1.msra.mxu0 0.0
  %688 = vmatprep.subr.mxu0 0.0
  %689 = vmatpush1.msra.mxu0 0.0
  %690 = vmatprep.subr.mxu0 0.0
  %691 = vmatpush1.msra.mxu0 0.0
  %692 = vmatprep.subr.mxu0 0.0
  %693 = vmatpush1.msra.mxu0 0.0
  %694 = vmatprep.subr.mxu0 0.0
  %695 = vmatpush1.msra.mxu0 0.0
  %696 = vmatprep.subr.mxu0 0.0
  %697 = vmatpush1.msra.mxu0 0.0
  %698 = vmatprep.subr.mxu0 0.0
  %699 = vmatpush1.msra.mxu0 0.0
  %700 = vmatprep.subr.mxu0 0.0
  %701 = vmatpush1.msra.mxu0 0.0
  %702 = vmatprep.subr.mxu0 0.0
  %703 = vmatpush1.msra.mxu0 0.0
  %704 = vmatprep.subr.mxu0 0.0
  %705 = vmatpush1.msra.mxu0 0.0
  %706 = vmatprep.subr.mxu0 0.0
  %707 = vmatpush1.msra.mxu0 0.0
  %708 = vmatprep.subr.mxu0 0.0
  %709 = vmatpush1.msra.mxu0 0.0
  %710 = vmatprep.mubr.f32.mxu0 0.0
  %711 = vmatmul.mubr.f32.gmra.mrb[0].mxu0 %v644
  %v712 = vpop.f32.mrb[0].mxu0
  %v713 = vadd.f32 0.0, %v712
  %v714 = vpop.f32.mrb[0].mxu0
  %715 = vdwg.mxu0
  %716 = vrot.lane.b32.xlu0 %v199, 112
  %v717 = vpop.permute.xlu0 %716
  %718 = vrot.lane.b32.xlu0 %v199, 80
  %v719 = vpop.permute.xlu0 %718
  %v720 = vsel %vm205, %v717, 0
  %v722 = vsel %vm205, %v719, 0
  %724 = vmatprep.subr.mxu0 0.0
  %725 = vmatpush1.xpose.msra.mxu0 %v722
  %726 = vmatprep.subr.mxu0 0.0
  %727 = vmatpush1.xpose.msra.mxu0 0.0
  %728 = vmatprep.subr.mxu0 0.0
  %729 = vmatpush1.xpose.msra.mxu0 0.0
  %730 = vmatprep.subr.mxu0 0.0
  %731 = vmatpush1.xpose.msra.mxu0 0.0
  %732 = vmatprep.subr.mxu0 0.0
  %733 = vmatpush1.xpose.msra.mxu0 0.0
  %734 = vmatprep.subr.mxu0 0.0
  %735 = vmatpush1.xpose.msra.mxu0 0.0
  %736 = vmatprep.subr.mxu0 0.0
  %737 = vmatpush1.xpose.msra.mxu0 0.0
  %738 = vmatprep.subr.mxu0 0.0
  %739 = vmatpush1.xpose.msra.mxu0 0.0
  %740 = vmatprep.subr.mxu0 0.0
  %741 = vmatpush1.xpose.msra.mxu0 0.0
  %742 = vmatprep.subr.mxu0 0.0
  %743 = vmatpush1.xpose.msra.mxu0 0.0
  %744 = vmatprep.subr.mxu0 0.0
  %745 = vmatpush1.xpose.msra.mxu0 0.0
  %746 = vmatprep.subr.mxu0 0.0
  %747 = vmatpush1.xpose.msra.mxu0 0.0
  %748 = vmatprep.subr.mxu0 0.0
  %749 = vmatpush1.xpose.msra.mxu0 0.0
  %750 = vmatprep.subr.mxu0 0.0
  %751 = vmatpush1.xpose.msra.mxu0 0.0
  %752 = vmatprep.subr.mxu0 0.0
  %753 = vmatpush1.xpose.msra.mxu0 0.0
  %754 = vmatprep.subr.mxu0 0.0
  %755 = vmatpush1.xpose.msra.mxu0 0.0
  %756 = vmatprep.subr.mxu0 0.0
  %757 = vmatpush1.xpose.msra.mxu0 0.0
  %758 = vmatprep.subr.mxu0 0.0
  %759 = vmatpush1.xpose.msra.mxu0 0.0
  %760 = vmatprep.subr.mxu0 0.0
  %761 = vmatpush1.xpose.msra.mxu0 0.0
  %762 = vmatprep.subr.mxu0 0.0
  %763 = vmatpush1.xpose.msra.mxu0 0.0
  %764 = vmatprep.subr.mxu0 0.0
  %765 = vmatpush1.xpose.msra.mxu0 0.0
  %766 = vmatprep.subr.mxu0 0.0
  %767 = vmatpush1.xpose.msra.mxu0 0.0
  %768 = vmatprep.subr.mxu0 0.0
  %769 = vmatpush1.xpose.msra.mxu0 0.0
  %770 = vmatprep.subr.mxu0 0.0
  %771 = vmatpush1.xpose.msra.mxu0 0.0
  %772 = vmatprep.subr.mxu0 0.0
  %773 = vmatpush1.xpose.msra.mxu0 0.0
  %774 = vmatprep.subr.mxu0 0.0
  %775 = vmatpush1.xpose.msra.mxu0 0.0
  %776 = vmatprep.subr.mxu0 0.0
  %777 = vmatpush1.xpose.msra.mxu0 0.0
  %778 = vmatprep.subr.mxu0 0.0
  %779 = vmatpush1.xpose.msra.mxu0 0.0
  %780 = vmatprep.subr.mxu0 0.0
  %781 = vmatpush1.xpose.msra.mxu0 0.0
  %782 = vmatprep.subr.mxu0 0.0
  %783 = vmatpush1.xpose.msra.mxu0 0.0
  %784 = vmatprep.subr.mxu0 0.0
  %785 = vmatpush1.xpose.msra.mxu0 0.0
  %786 = vmatprep.subr.mxu0 0.0
  %787 = vmatpush1.xpose.msra.mxu0 0.0
  %788 = vmatprep.mubr.f32.mxu0 0.0
  %789 = vmatmul.mubr.f32.gmra.mrb[0].mxu0 %v720
  %v790 = vpop.f32.mrb[0].mxu0
  %v791 = vadd.f32 0.0, %v790
  %v792 = vpop.f32.mrb[0].mxu0
  %793 = vdwg.mxu0
  %v794 = vmul.f32 %v791, 0.25
  %v795 = vadd.f32 %v794, %v627
  %v796 = vsel %vm286, %v795, -inf
  %797 = vmax.xlane.f32.xlu0 %v796
  %v798 = vpop.xlane.xlu0 %797
  %v799 = vsub.f32 %v795, %v798
  %v800 = vmul.f32 %v799, 1.442695
  %v801 = vpow.pop %v800
  %v802 = vsel %vm286, %v801, 0.0
  %803 = vadd.xlane.f32.xlu0 %v802
  %v804 = vpop.xlane.xlu0 %803
  %v805 = vrcp.pop %v804
  %v806 = vmul.f32 %v801, %v805
  %807 = vrot.lane.b32.xlu0 %v199, 48
  %v808 = vpop.permute.xlu0 %807
  %v811 = vsel %vm286, %v806, 0
  %813 = vmatprep.subr.mxu0 0.0
  %814 = vmatpush1.msra.mxu0 %v808
  %815 = vmatprep.subr.mxu0 0.0
  %816 = vmatpush1.msra.mxu0 0.0
  %817 = vmatprep.subr.mxu0 0.0
  %818 = vmatpush1.msra.mxu0 0.0
  %819 = vmatprep.subr.mxu0 0.0
  %820 = vmatpush1.msra.mxu0 0.0
  %821 = vmatprep.subr.mxu0 0.0
  %822 = vmatpush1.msra.mxu0 0.0
  %823 = vmatprep.subr.mxu0 0.0
  %824 = vmatpush1.msra.mxu0 0.0
  %825 = vmatprep.subr.mxu0 0.0
  %826 = vmatpush1.msra.mxu0 0.0
  %827 = vmatprep.subr.mxu0 0.0
  %828 = vmatpush1.msra.mxu0 0.0
  %829 = vmatprep.subr.mxu0 0.0
  %830 = vmatpush1.msra.mxu0 0.0
  %831 = vmatprep.subr.mxu0 0.0
  %832 = vmatpush1.msra.mxu0 0.0
  %833 = vmatprep.subr.mxu0 0.0
  %834 = vmatpush1.msra.mxu0 0.0
  %835 = vmatprep.subr.mxu0 0.0
  %836 = vmatpush1.msra.mxu0 0.0
  %837 = vmatprep.subr.mxu0 0.0
  %838 = vmatpush1.msra.mxu0 0.0
  %839 = vmatprep.subr.mxu0 0.0
  %840 = vmatpush1.msra.mxu0 0.0
  %841 = vmatprep.subr.mxu0 0.0
  %842 = vmatpush1.msra.mxu0 0.0
  %843 = vmatprep.subr.mxu0 0.0
  %844 = vmatpush1.msra.mxu0 0.0
  %845 = vmatprep.subr.mxu0 0.0
  %846 = vmatpush1.msra.mxu0 0.0
  %847 = vmatprep.subr.mxu0 0.0
  %848 = vmatpush1.msra.mxu0 0.0
  %849 = vmatprep.subr.mxu0 0.0
  %850 = vmatpush1.msra.mxu0 0.0
  %851 = vmatprep.subr.mxu0 0.0
  %852 = vmatpush1.msra.mxu0 0.0
  %853 = vmatprep.subr.mxu0 0.0
  %854 = vmatpush1.msra.mxu0 0.0
  %855 = vmatprep.subr.mxu0 0.0
  %856 = vmatpush1.msra.mxu0 0.0
  %857 = vmatprep.subr.mxu0 0.0
  %858 = vmatpush1.msra.mxu0 0.0
  %859 = vmatprep.subr.mxu0 0.0
  %860 = vmatpush1.msra.mxu0 0.0
  %861 = vmatprep.subr.mxu0 0.0
  %862 = vmatpush1.msra.mxu0 0.0
  %863 = vmatprep.subr.mxu0 0.0
  %864 = vmatpush1.msra.mxu0 0.0
  %865 = vmatprep.subr.mxu0 0.0
  %866 = vmatpush1.msra.mxu0 0.0
  %867 = vmatprep.subr.mxu0 0.0
  %868 = vmatpush1.msra.mxu0 0.0
  %869 = vmatprep.subr.mxu0 0.0
  %870 = vmatpush1.msra.mxu0 0.0
  %871 = vmatprep.subr.mxu0 0.0
  %872 = vmatpush1.msra.mxu0 0.0
  %873 = vmatprep.subr.mxu0 0.0
  %874 = vmatpush1.msra.mxu0 0.0
  %875 = vmatprep.subr.mxu0 0.0
  %876 = vmatpush1.msra.mxu0 0.0
  %877 = vmatprep.mubr.f32.mxu0 0.0
  %878 = vmatmul.mubr.f32.gmra.mrb[0].mxu0 %v811
  %v879 = vpop.f32.mrb[0].mxu0
  %v880 = vadd.f32 0.0, %v879
  %v881 = vpop.f32.mrb[0].mxu0
  %882 = vdwg.mxu0
  %884 = vrot.lane.b32.xlu0 %v880, 16
  %v885 = vpop.permute.xlu0 %884
  %v887 = vsel %vm205, %v713, %v885
  %v888 = vld [vmem:[%s6] sm:$0xff]
  %v889 = vld [vmem:[%s6 + $0x8] sm:$0xff]
  %v890 = vld [vmem:[%s6 + $0x10] sm:$0xff]
  %v891 = vld [vmem:[%s6 + $0x18] sm:$0xff]
  %v892 = vld [vmem:[%s7] sm:$0x1]
  %v894 = vlaneseq
  %v895 = vshrl.u32 %v894, 7
  %v896 = vsub.s32 0, %v895
  %v897 = vrot.slane %v892, %v896
  %v900 = vsel %vm66, %v545, 0
  %v903 = vsel %vm66, %v887, 0
  %905 = vmatprep.subr.mxu0 0.0
  %906 = vmatpush1.msra.mxu0 %v888
  %907 = vmatprep.subr.mxu0 0.0
  %908 = vmatpush1.msra.mxu0 %v889
  %909 = vmatprep.subr.mxu0 0.0
  %910 = vmatpush1.msra.mxu0 %v890
  %911 = vmatprep.subr.mxu0 0.0
  %912 = vmatpush1.msra.mxu0 %v891
  %913 = vmatprep.subr.mxu0 0.0
  %914 = vmatpush1.msra.mxu0 0.0
  %915 = vmatprep.subr.mxu0 0.0
  %916 = vmatpush1.msra.mxu0 0.0
  %917 = vmatprep.subr.mxu0 0.0
  %918 = vmatpush1.msra.mxu0 0.0
  %919 = vmatprep.subr.mxu0 0.0
  %920 = vmatpush1.msra.mxu0 0.0
  %921 = vmatprep.subr.mxu0 0.0
  %922 = vmatpush1.msra.mxu0 0.0
  %923 = vmatprep.subr.mxu0 0.0
  %924 = vmatpush1.msra.mxu0 0.0
  %925 = vmatprep.subr.mxu0 0.0
  %926 = vmatpush1.msra.mxu0 0.0
  %927 = vmatprep.subr.mxu0 0.0
  %928 = vmatpush1.msra.mxu0 0.0
  %929 = vmatprep.subr.mxu0 0.0
  %930 = vmatpush1.msra.mxu0 0.0
  %931 = vmatprep.subr.mxu0 0.0
  %932 = vmatpush1.msra.mxu0 0.0
  %933 = vmatprep.subr.mxu0 0.0
  %934 = vmatpush1.msra.mxu0 0.0
  %935 = vmatprep.subr.mxu0 0.0
  %936 = vmatpush1.msra.mxu0 0.0
  %937 = vmatprep.subr.mxu0 0.0
  %938 = vmatpush1.msra.mxu0 0.0
  %939 = vmatprep.subr.mxu0 0.0
  %940 = vmatpush1.msra.mxu0 0.0
  %941 = vmatprep.subr.mxu0 0.0
  %942 = vmatpush1.msra.mxu0 0.0
  %943 = vmatprep.subr.mxu0 0.0
  %944 = vmatpush1.msra.mxu0 0.0
  %945 = vmatprep.subr.mxu0 0.0
  %946 = vmatpush1.msra.mxu0 0.0
  %947 = vmatprep.subr.mxu0 0.0
  %948 = vmatpush1.msra.mxu0 0.0
  %949 = vmatprep.subr.mxu0 0.0
  %950 = vmatpush1.msra.mxu0 0.0
  %951 = vmatprep.subr.mxu0 0.0
  %952 = vmatpush1.msra.mxu0 0.0
  %953 = vmatprep.subr.mxu0 0.0
  %954 = vmatpush1.msra.mxu0 0.0
  %955 = vmatprep.subr.mxu0 0.0
  %956 = vmatpush1.msra.mxu0 0.0
  %957 = vmatprep.subr.mxu0 0.0
  %958 = vmatpush1.msra.mxu0 0.0
  %959 = vmatprep.subr.mxu0 0.0
  %960 = vmatpush1.msra.mxu0 0.0
  %961 = vmatprep.subr.mxu0 0.0
  %962 = vmatpush1.msra.mxu0 0.0
  %963 = vmatprep.subr.mxu0 0.0
  %964 = vmatpush1.msra.mxu0 0.0
  %965 = vmatprep.subr.mxu0 0.0
  %966 = vmatpush1.msra.mxu0 0.0
  %967 = vmatprep.subr.mxu0 0.0
  %968 = vmatpush1.msra.mxu0 0.0
  %969 = vmatprep.mubr.f32.mxu0 0.0
  %970 = vmatmul.mubr.f32.gmra.mrb[0].mxu0 %v900
  %v971 = vpop.f32.mrb[0].mxu0
  %v972 = vadd.f32 %v897, %v971
  %v973 = vpop.f32.mrb[0].mxu0
  %974 = vmatprep.mubr.f32.mxu0 0.0
  %975 = vmatmul.mubr.f32.gmra.mrb[0].mxu0 %v903
  %v976 = vpop.f32.mrb[0].mxu0
  %v977 = vadd.f32 %v897, %v976
  %v978 = vpop.f32.mrb[0].mxu0
  %979 = vdwg.mxu0
  %v980 = vadd.f32 %v108, %v972
  %v981 = vadd.f32 %v109, %v977
  %v982 = vld [vmem:[%s8] sm:$0x1]
  %v983 = vld [vmem:[%s9] sm:$0x1]
  %v984 = vsel %vm66, %v980, 0.0
  %985 = vadd.xlane.f32.xlu0 %v984
  %v986 = vpop.xlane.xlu0 %985
  %v987 = vsel %vm66, %v981, 0.0
  %988 = vadd.xlane.f32.xlu0 %v987
  %v989 = vpop.xlane.xlu0 %988
  %v990 = vmul.f32 %v986, %v73
  %v991 = vmul.f32 %v989, %v73
  %v992 = vsub.f32 %v980, %v990
  %v993 = vsub.f32 %v981, %v991
  %v994 = vmul.f32 %v992, %v992
  %v995 = vmul.f32 %v993, %v993
  %v996 = vsel %vm66, %v994, 0.0
  %997 = vadd.xlane.f32.xlu0 %v996
  %v998 = vpop.xlane.xlu0 %997
  %v999 = vsel %vm66, %v995, 0.0
  %1000 = vadd.xlane.f32.xlu0 %v999
  %v1001 = vpop.xlane.xlu0 %1000
  %v1002 = vmul.f32 %v998, %v73
  %v1003 = vmul.f32 %v1001, %v73
  %v1004 = vadd.f32 %v1002, 1e-12
  %v1005 = vadd.f32 %v1003, 1e-12
  %v1006 = vrsqrt.pop %v1004
  %v1007 = vrsqrt.pop %v1005
  %v1008 = vmul.f32 %v992, %v1006
  %v1009 = vmul.f32 %v993, %v1007
  %v1011 = vlaneseq
  %v1012 = vshrl.u32 %v1011, 7
  %v1013 = vsub.s32 0, %v1012
  %v1014 = vrot.slane %v982, %v1013
  %v1016 = vmul.f32 %v1008, %v1014
  %v1017 = vmul.f32 %v1009, %v1014
  %v1019 = vlaneseq
  %v1020 = vshrl.u32 %v1019, 7
  %v1021 = vsub.s32 0, %v1020
  %v1022 = vrot.slane %v983, %v1021
  %v1024 = vadd.f32 %v1016, %v1022
  %v1025 = vadd.f32 %v1017, %v1022
  %v1026 = vld [vmem:[%s10] sm:$0xff]
  %v1027 = vld [vmem:[%s10 + $0x8] sm:$0xff]
  %v1028 = vld [vmem:[%s10 + $0x10] sm:$0xff]
  %v1029 = vld [vmem:[%s10 + $0x18] sm:$0xff]
  %v1030 = vld [vmem:[%s11] sm:$0x1]
  %v1032 = vlaneseq
  %v1033 = vshrl.u32 %v1032, 7
  %v1034 = vsub.s32 0, %v1033
  %v1035 = vrot.slane %v1030, %v1034
  %v1038 = vsel %vm66, %v1024, 0
  %v1041 = vsel %vm66, %v1025, 0
  %1043 = vmatprep.subr.mxu0 0.0
  %1044 = vmatpush1.msra.mxu0 %v1026
  %1045 = vmatprep.subr.mxu0 0.0
  %1046 = vmatpush1.msra.mxu0 %v1027
  %1047 = vmatprep.subr.mxu0 0.0
  %1048 = vmatpush1.msra.mxu0 %v1028
  %1049 = vmatprep.subr.mxu0 0.0
  %1050 = vmatpush1.msra.mxu0 %v1029
  %1051 = vmatprep.subr.mxu0 0.0
  %1052 = vmatpush1.msra.mxu0 0.0
  %1053 = vmatprep.subr.mxu0 0.0
  %1054 = vmatpush1.msra.mxu0 0.0
  %1055 = vmatprep.subr.mxu0 0.0
  %1056 = vmatpush1.msra.mxu0 0.0
  %1057 = vmatprep.subr.mxu0 0.0
  %1058 = vmatpush1.msra.mxu0 0.0
  %1059 = vmatprep.subr.mxu0 0.0
  %1060 = vmatpush1.msra.mxu0 0.0
  %1061 = vmatprep.subr.mxu0 0.0
  %1062 = vmatpush1.msra.mxu0 0.0
  %1063 = vmatprep.subr.mxu0 0.0
  %1064 = vmatpush1.msra.mxu0 0.0
  %1065 = vmatprep.subr.mxu0 0.0
  %1066 = vmatpush1.msra.mxu0 0.0
  %1067 = vmatprep.subr.mxu0 0.0
  %1068 = vmatpush1.msra.mxu0 0.0
  %1069 = vmatprep.subr.mxu0 0.0
  %1070 = vmatpush1.msra.mxu0 0.0
  %1071 = vmatprep.subr.mxu0 0.0
  %1072 = vmatpush1.msra.mxu0 0.0
  %1073 = vmatprep.subr.mxu0 0.0
  %1074 = vmatpush1.msra.mxu0 0.0
  %1075 = vmatprep.subr.mxu0 0.0
  %1076 = vmatpush1.msra.mxu0 0.0
  %1077 = vmatprep.subr.mxu0 0.0
  %1078 = vmatpush1.msra.mxu0 0.0
  %1079 = vmatprep.subr.mxu0 0.0
  %1080 = vmatpush1.msra.mxu0 0.0
  %1081 = vmatprep.subr.mxu0 0.0
  %1082 = vmatpush1.msra.mxu0 0.0
  %1083 = vmatprep.subr.mxu0 0.0
  %1084 = vmatpush1.msra.mxu0 0.0
  %1085 = vmatprep.subr.mxu0 0.0
  %1086 = vmatpush1.msra.mxu0 0.0
  %1087 = vmatprep.subr.mxu0 0.0
  %1088 = vmatpush1.msra.mxu0 0.0
  %1089 = vmatprep.subr.mxu0 0.0
  %1090 = vmatpush1.msra.mxu0 0.0
  %1091 = vmatprep.subr.mxu0 0.0
  %1092 = vmatpush1.msra.mxu0 0.0
  %1093 = vmatprep.subr.mxu0 0.0
  %1094 = vmatpush1.msra.mxu0 0.0
  %1095 = vmatprep.subr.mxu0 0.0
  %1096 = vmatpush1.msra.mxu0 0.0
  %1097 = vmatprep.subr.mxu0 0.0
  %1098 = vmatpush1.msra.mxu0 0.0
  %1099 = vmatprep.subr.mxu0 0.0
  %1100 = vmatpush1.msra.mxu0 0.0
  %1101 = vmatprep.subr.mxu0 0.0
  %1102 = vmatpush1.msra.mxu0 0.0
  %1103 = vmatprep.subr.mxu0 0.0
  %1104 = vmatpush1.msra.mxu0 0.0
  %1105 = vmatprep.subr.mxu0 0.0
  %1106 = vmatpush1.msra.mxu0 0.0
  %1107 = vmatprep.mubr.f32.mxu0 0.0
  %1108 = vmatmul.mubr.f32.gmra.mrb[0].mxu0 %v1038
  %v1109 = vpop.f32.mrb[0].mxu0
  %v1110 = vadd.f32 %v1035, %v1109
  %v1111 = vpop.f32.mrb[0].mxu0
  %1112 = vmatprep.mubr.f32.mxu0 0.0
  %1113 = vmatmul.mubr.f32.gmra.mrb[0].mxu0 %v1041
  %v1114 = vpop.f32.mrb[0].mxu0
  %v1115 = vadd.f32 %v1035, %v1114
  %v1116 = vpop.f32.mrb[0].mxu0
  %1117 = vdwg.mxu0
  %v1118 = vmul.f32 %v1110, 0.5
  %v1119 = vmul.f32 %v1115, 0.5
  %v1120 = vmul.f32 %v1110, 0.044715
  %v1121 = vmul.f32 %v1115, 0.044715
  %v1122 = vmul.f32 %v1120, %v1110
  %v1123 = vmul.f32 %v1121, %v1115
  %v1124 = vmul.f32 %v1122, %v1110
  %v1125 = vmul.f32 %v1123, %v1115
  %v1126 = vadd.f32 %v1110, %v1124
  %v1127 = vadd.f32 %v1115, %v1125
  %v1128 = vmul.f32 %v1126, 0.7978846
  %v1129 = vmul.f32 %v1127, 0.7978846
  %v1130 = vtanh.pop %v1128
  %v1131 = vtanh.pop %v1129
  %v1132 = vadd.f32 %v1130, 1.0
  %v1133 = vadd.f32 %v1131, 1.0
  %v1134 = vmul.f32 %v1118, %v1132
  %v1135 = vmul.f32 %v1119, %v1133
  %v1136 = vld [vmem:[%s12] sm:$0xff]
  %v1137 = vld [vmem:[%s12 + $0x8] sm:$0xff]
  %v1138 = vld [vmem:[%s12 + $0x10] sm:$0xff]
  %v1139 = vld [vmem:[%s12 + $0x18] sm:$0xff]
  %v1140 = vld [vmem:[%s12 + $0x20] sm:$0xff]
  %v1141 = vld [vmem:[%s12 + $0x28] sm:$0xff]
  %v1142 = vld [vmem:[%s12 + $0x30] sm:$0xff]
  %v1143 = vld [vmem:[%s12 + $0x38] sm:$0xff]
  %v1144 = vld [vmem:[%s13] sm:$0x1]
  %v1146 = vlaneseq
  %v1147 = vshrl.u32 %v1146, 7
  %v1148 = vsub.s32 0, %v1147
  %v1149 = vrot.slane %v1144, %v1148
  %vm1151 = vcmask 523264
  %v1153 = vsel %vm1151, %v1134, 0
  %v1156 = vsel %vm1151, %v1135, 0
  %1158 = vmatprep.subr.mxu0 0.0
  %1159 = vmatpush1.msra.mxu0 %v1136
  %1160 = vmatprep.subr.mxu0 0.0
  %1161 = vmatpush1.msra.mxu0 %v1137
  %1162 = vmatprep.subr.mxu0 0.0
  %1163 = vmatpush1.msra.mxu0 %v1138
  %1164 = vmatprep.subr.mxu0 0.0
  %1165 = vmatpush1.msra.mxu0 %v1139
  %1166 = vmatprep.subr.mxu0 0.0
  %1167 = vmatpush1.msra.mxu0 %v1140
  %1168 = vmatprep.subr.mxu0 0.0
  %1169 = vmatpush1.msra.mxu0 %v1141
  %1170 = vmatprep.subr.mxu0 0.0
  %1171 = vmatpush1.msra.mxu0 %v1142
  %1172 = vmatprep.subr.mxu0 0.0
  %1173 = vmatpush1.msra.mxu0 %v1143
  %1174 = vmatprep.subr.mxu0 0.0
  %1175 = vmatpush1.msra.mxu0 0.0
  %1176 = vmatprep.subr.mxu0 0.0
  %1177 = vmatpush1.msra.mxu0 0.0
  %1178 = vmatprep.subr.mxu0 0.0
  %1179 = vmatpush1.msra.mxu0 0.0
  %1180 = vmatprep.subr.mxu0 0.0
  %1181 = vmatpush1.msra.mxu0 0.0
  %1182 = vmatprep.subr.mxu0 0.0
  %1183 = vmatpush1.msra.mxu0 0.0
  %1184 = vmatprep.subr.mxu0 0.0
  %1185 = vmatpush1.msra.mxu0 0.0
  %1186 = vmatprep.subr.mxu0 0.0
  %1187 = vmatpush1.msra.mxu0 0.0
  %1188 = vmatprep.subr.mxu0 0.0
  %1189 = vmatpush1.msra.mxu0 0.0
  %1190 = vmatprep.subr.mxu0 0.0
  %1191 = vmatpush1.msra.mxu0 0.0
  %1192 = vmatprep.subr.mxu0 0.0
  %1193 = vmatpush1.msra.mxu0 0.0
  %1194 = vmatprep.subr.mxu0 0.0
  %1195 = vmatpush1.msra.mxu0 0.0
  %1196 = vmatprep.subr.mxu0 0.0
  %1197 = vmatpush1.msra.mxu0 0.0
  %1198 = vmatprep.subr.mxu0 0.0
  %1199 = vmatpush1.msra.mxu0 0.0
  %1200 = vmatprep.subr.mxu0 0.0
  %1201 = vmatpush1.msra.mxu0 0.0
  %1202 = vmatprep.subr.mxu0 0.0
  %1203 = vmatpush1.msra.mxu0 0.0
  %1204 = vmatprep.subr.mxu0 0.0
  %1205 = vmatpush1.msra.mxu0 0.0
  %1206 = vmatprep.subr.mxu0 0.0
  %1207 = vmatpush1.msra.mxu0 0.0
  %1208 = vmatprep.subr.mxu0 0.0
  %1209 = vmatpush1.msra.mxu0 0.0
  %1210 = vmatprep.subr.mxu0 0.0
  %1211 = vmatpush1.msra.mxu0 0.0
  %1212 = vmatprep.subr.mxu0 0.0
  %1213 = vmatpush1.msra.mxu0 0.0
  %1214 = vmatprep.subr.mxu0 0.0
  %1215 = vmatpush1.msra.mxu0 0.0
  %1216 = vmatprep.subr.mxu0 0.0
  %1217 = vmatpush1.msra.mxu0 0.0
  %1218 = vmatprep.subr.mxu0 0.0
  %1219 = vmatpush1.msra.mxu0 0.0
  %1220 = vmatprep.subr.mxu0 0.0
  %1221 = vmatpush1.msra.mxu0 0.0
  %1222 = vmatprep.mubr.f32.mxu0 0.0
  %1223 = vmatmul.mubr.f32.gmra.mrb[0].mxu0 %v1153
  %v1224 = vpop.f32.mrb[0].mxu0
  %v1225 = vadd.f32 %v1149, %v1224
  %v1226 = vpop.f32.mrb[0].mxu0
  %1227 = vmatprep.mubr.f32.mxu0 0.0
  %1228 = vmatmul.mubr.f32.gmra.mrb[0].mxu0 %v1156
  %v1229 = vpop.f32.mrb[0].mxu0
  %v1230 = vadd.f32 %v1149, %v1229
  %v1231 = vpop.f32.mrb[0].mxu0
  %1232 = vdwg.mxu0
  %v1233 = vadd.f32 %v1024, %v1225
  %v1234 = vadd.f32 %v1025, %v1230
  %v1235 = vld [vmem:[%s14] sm:$0x1]
  %v1236 = vld [vmem:[%s15] sm:$0x1]
  %v1237 = vsel %vm66, %v1233, 0.0
  %1238 = vadd.xlane.f32.xlu0 %v1237
  %v1239 = vpop.xlane.xlu0 %1238
  %v1240 = vsel %vm66, %v1234, 0.0
  %1241 = vadd.xlane.f32.xlu0 %v1240
  %v1242 = vpop.xlane.xlu0 %1241
  %v1243 = vmul.f32 %v1239, %v73
  %v1244 = vmul.f32 %v1242, %v73
  %v1245 = vsub.f32 %v1233, %v1243
  %v1246 = vsub.f32 %v1234, %v1244
  %v1247 = vmul.f32 %v1245, %v1245
  %v1248 = vmul.f32 %v1246, %v1246
  %v1249 = vsel %vm66, %v1247, 0.0
  %1250 = vadd.xlane.f32.xlu0 %v1249
  %v1251 = vpop.xlane.xlu0 %1250
  %v1252 = vsel %vm66, %v1248, 0.0
  %1253 = vadd.xlane.f32.xlu0 %v1252
  %v1254 = vpop.xlane.xlu0 %1253
  %v1255 = vmul.f32 %v1251, %v73
  %v1256 = vmul.f32 %v1254, %v73
  %v1257 = vadd.f32 %v1255, 1e-12
  %v1258 = vadd.f32 %v1256, 1e-12
  %v1259 = vrsqrt.pop %v1257
  %v1260 = vrsqrt.pop %v1258
  %v1261 = vmul.f32 %v1245, %v1259
  %v1262 = vmul.f32 %v1246, %v1260
  %v1264 = vlaneseq
  %v1265 = vshrl.u32 %v1264, 7
  %v1266 = vsub.s32 0, %v1265
  %v1267 = vrot.slane %v1235, %v1266
  %v1269 = vmul.f32 %v1261, %v1267
  %v1270 = vmul.f32 %v1262, %v1267
  %v1272 = vlaneseq
  %v1273 = vshrl.u32 %v1272, 7
  %v1274 = vsub.s32 0, %v1273
  %v1275 = vrot.slane %v1236, %v1274
  %v1277 = vadd.f32 %v1269, %v1275
  %v1278 = vadd.f32 %v1270, %v1275
  %s1279 = scalar_lea.vmem %s4, 32
  %v1280 = vld [vmem:[%s1279] sm:$0xff]
  %v1281 = vld [vmem:[%s1279 + $0x8] sm:$0xff]
  %v1282 = vld [vmem:[%s1279 + $0x10] sm:$0xff]
  %v1283 = vld [vmem:[%s1279 + $0x18] sm:$0xff]
  %s1284 = scalar_lea.vmem %s5, 1
  %v1285 = vld [vmem:[%s1284] sm:$0x1]
  %v1287 = vlaneseq
  %v1288 = vshrl.u32 %v1287, 7
  %v1289 = vsub.s32 0, %v1288
  %v1290 = vrot.slane %v1285, %v1289
  %v1293 = vsel %vm66, %v1277, 0
  %v1296 = vsel %vm66, %v1278, 0
  %1298 = vmatprep.subr.mxu0 0.0
  %1299 = vmatpush1.msra.mxu0 %v1280
  %1300 = vmatprep.subr.mxu0 0.0
  %1301 = vmatpush1.msra.mxu0 %v1281
  %1302 = vmatprep.subr.mxu0 0.0
  %1303 = vmatpush1.msra.mxu0 %v1282
  %1304 = vmatprep.subr.mxu0 0.0
  %1305 = vmatpush1.msra.mxu0 %v1283
  %1306 = vmatprep.subr.mxu0 0.0
  %1307 = vmatpush1.msra.mxu0 0.0
  %1308 = vmatprep.subr.mxu0 0.0
  %1309 = vmatpush1.msra.mxu0 0.0
  %1310 = vmatprep.subr.mxu0 0.0
  %1311 = vmatpush1.msra.mxu0 0.0
  %1312 = vmatprep.subr.mxu0 0.0
  %1313 = vmatpush1.msra.mxu0 0.0
  %1314 = vmatprep.subr.mxu0 0.0
  %1315 = vmatpush1.msra.mxu0 0.0
  %1316 = vmatprep.subr.mxu0 0.0
  %1317 = vmatpush1.msra.mxu0 0.0
  %1318 = vmatprep.subr.mxu0 0.0
  %1319 = vmatpush1.msra.mxu0 0.0
  %1320 = vmatprep.subr.mxu0 0.0
  %1321 = vmatpush1.msra.mxu0 0.0
  %1322 = vmatprep.subr.mxu0 0.0
  %1323 = vmatpush1.msra.mxu0 0.0
  %1324 = vmatprep.subr.mxu0 0.0
  %1325 = vmatpush1.msra.mxu0 0.0
  %1326 = vmatprep.subr.mxu0 0.0
  %1327 = vmatpush1.msra.mxu0 0.0
  %1328 = vmatprep.subr.mxu0 0.0
  %1329 = vmatpush1.msra.mxu0 0.0
  %1330 = vmatprep.subr.mxu0 0.0
  %1331 = vmatpush1.msra.mxu0 0.0
  %1332 = vmatprep.subr.mxu0 0.0
  %1333 = vmatpush1.msra.mxu0 0.0
  %1334 = vmatprep.subr.mxu0 0.0
  %1335 = vmatpush1.msra.mxu0 0.0
  %1336 = vmatprep.subr.mxu0 0.0
  %1337 = vmatpush1.msra.mxu0 0.0
  %1338 = vmatprep.subr.mxu0 0.0
  %1339 = vmatpush1.msra.mxu0 0.0
  %1340 = vmatprep.subr.mxu0 0.0
  %1341 = vmatpush1.msra.mxu0 0.0
  %1342 = vmatprep.subr.mxu0 0.0
  %1343 = vmatpush1.msra.mxu0 0.0
  %1344 = vmatprep.subr.mxu0 0.0
  %1345 = vmatpush1.msra.mxu0 0.0
  %1346 = vmatprep.subr.mxu0 0.0
  %1347 = vmatpush1.msra.mxu0 0.0
  %1348 = vmatprep.subr.mxu0 0.0
  %1349 = vmatpush1.msra.mxu0 0.0
  %1350 = vmatprep.subr.mxu0 0.0
  %1351 = vmatpush1.msra.mxu0 0.0
  %1352 = vmatprep.subr.mxu0 0.0
  %1353 = vmatpush1.msra.mxu0 0.0
  %1354 = vmatprep.subr.mxu0 0.0
  %1355 = vmatpush1.msra.mxu0 0.0
  %1356 = vmatprep.subr.mxu0 0.0
  %1357 = vmatpush1.msra.mxu0 0.0
  %1358 = vmatprep.subr.mxu0 0.0
  %1359 = vmatpush1.msra.mxu0 0.0
  %1360 = vmatprep.subr.mxu0 0.0
  %1361 = vmatpush1.msra.mxu0 0.0
  %1362 = vmatprep.mubr.f32.mxu0 0.0
  %1363 = vmatmul.mubr.f32.gmra.mrb[0].mxu0 %v1293
  %v1364 = vpop.f32.mrb[0].mxu0
  %v1365 = vadd.f32 %v1290, %v1364
  %v1366 = vpop.f32.mrb[0].mxu0
  %1367 = vmatprep.mubr.f32.mxu0 0.0
  %1368 = vmatmul.mubr.f32.gmra.mrb[0].mxu0 %v1296
  %v1369 = vpop.f32.mrb[0].mxu0
  %v1370 = vadd.f32 %v1290, %v1369
  %v1371 = vpop.f32.mrb[0].mxu0
  %1372 = vdwg.mxu0
  %1374 = vrot.lane.b32.xlu0 %v1365, 96
  %v1375 = vpop.permute.xlu0 %1374
  %v1376 = vsel %vm205, %v1365, 0
  %v1378 = vsel %vm205, %v1375, 0
  %1380 = vmatprep.subr.mxu0 0.0
  %1381 = vmatpush1.xpose.msra.mxu0 %v1378
  %1382 = vmatprep.subr.mxu0 0.0
  %1383 = vmatpush1.xpose.msra.mxu0 0.0
  %1384 = vmatprep.subr.mxu0 0.0
  %1385 = vmatpush1.xpose.msra.mxu0 0.0
  %1386 = vmatprep.subr.mxu0 0.0
  %1387 = vmatpush1.xpose.msra.mxu0 0.0
  %1388 = vmatprep.subr.mxu0 0.0
  %1389 = vmatpush1.xpose.msra.mxu0 0.0
  %1390 = vmatprep.subr.mxu0 0.0
  %1391 = vmatpush1.xpose.msra.mxu0 0.0
  %1392 = vmatprep.subr.mxu0 0.0
  %1393 = vmatpush1.xpose.msra.mxu0 0.0
  %1394 = vmatprep.subr.mxu0 0.0
  %1395 = vmatpush1.xpose.msra.mxu0 0.0
  %1396 = vmatprep.subr.mxu0 0.0
  %1397 = vmatpush1.xpose.msra.mxu0 0.0
  %1398 = vmatprep.subr.mxu0 0.0
  %1399 = vmatpush1.xpose.msra.mxu0 0.0
  %1400 = vmatprep.subr.mxu0 0.0
  %1401 = vmatpush1.xpose.msra.mxu0 0.0
  %1402 = vmatprep.subr.mxu0 0.0
  %1403 = vmatpush1.xpose.msra.mxu0 0.0
  %1404 = vmatprep.subr.mxu0 0.0
  %1405 = vmatpush1.xpose.msra.mxu0 0.0
  %1406 = vmatprep.subr.mxu0 0.0
  %1407 = vmatpush1.xpose.msra.mxu0 0.0
  %1408 = vmatprep.subr.mxu0 0.0
  %1409 = vmatpush1.xpose.msra.mxu0 0.0
  %1410 = vmatprep.subr.mxu0 0.0
  %1411 = vmatpush1.xpose.msra.mxu0 0.0
  %1412 = vmatprep.subr.mxu0 0.0
  %1413 = vmatpush1.xpose.msra.mxu0 0.0
  %1414 = vmatprep.subr.mxu0 0.0
  %1415 = vmatpush1.xpose.msra.mxu0 0.0
  %1416 = vmatprep.subr.mxu0 0.0
  %1417 = vmatpush1.xpose.msra.mxu0 0.0
  %1418 = vmatprep.subr.mxu0 0.0
  %1419 = vmatpush1.xpose.msra.mxu0 0.0
  %1420 = vmatprep.subr.mxu0 0.0
  %1421 = vmatpush1.xpose.msra.mxu0 0.0
  %1422 = vmatprep.subr.mxu0 0.0
  %1423 = vmatpush1.xpose.msra.mxu0 0.0
  %1424 = vmatprep.subr.mxu0 0.0
  %1425 = vmatpush1.xpose.msra.mxu0 0.0
  %1426 = vmatprep.subr.mxu0 0.0
  %1427 = vmatpush1.xpose.msra.mxu0 0.0
  %1428 = vmatprep.subr.mxu0 0.0
  %1429 = vmatpush1.xpose.msra.mxu0 0.0
  %1430 = vmatprep.subr.mxu0 0.0
  %1431 = vmatpush1.xpose.msra.mxu0 0.0
  %1432 = vmatprep.subr.mxu0 0.0
  %1433 = vmatpush1.xpose.msra.mxu0 0.0
  %1434 = vmatprep.subr.mxu0 0.0
  %1435 = vmatpush1.xpose.msra.mxu0 0.0
  %1436 = vmatprep.subr.mxu0 0.0
  %1437 = vmatpush1.xpose.msra.mxu0 0.0
  %1438 = vmatprep.subr.mxu0 0.0
  %1439 = vmatpush1.xpose.msra.mxu0 0.0
  %1440 = vmatprep.subr.mxu0 0.0
  %1441 = vmatpush1.xpose.msra.mxu0 0.0
  %1442 = vmatprep.subr.mxu0 0.0
  %1443 = vmatpush1.xpose.msra.mxu0 0.0
  %1444 = vmatprep.mubr.f32.mxu0 0.0
  %1445 = vmatmul.mubr.f32.gmra.mrb[0].mxu0 %v1376
  %v1446 = vpop.f32.mrb[0].mxu0
  %v1447 = vadd.f32 0.0, %v1446
  %v1448 = vpop.f32.mrb[0].mxu0
  %1449 = vdwg.mxu0
  %v1450 = vmul.f32 %v1447, 0.25
  %v1451 = vadd.f32 %v1450, %v284
  %v1452 = vsel %vm286, %v1451, -inf
  %1453 = vmax.xlane.f32.xlu0 %v1452
  %v1454 = vpop.xlane.xlu0 %1453
  %v1455 = vsub.f32 %v1451, %v1454
  %v1456 = vmul.f32 %v1455, 1.442695
  %v1457 = vpow.pop %v1456
  %v1458 = vsel %vm286, %v1457, 0.0
  %1459 = vadd.xlane.f32.xlu0 %v1458
  %v1460 = vpop.xlane.xlu0 %1459
  %v1461 = vrcp.pop %v1460
  %v1462 = vmul.f32 %v1457, %v1461
  %1463 = vrot.lane.b32.xlu0 %v1365, 64
  %v1464 = vpop.permute.xlu0 %1463
  %v1467 = vsel %vm286, %v1462, 0
  %1469 = vmatprep.subr.mxu0 0.0
  %1470 = vmatpush1.msra.mxu0 %v1464
  %1471 = vmatprep.subr.mxu0 0.0
  %1472 = vmatpush1.msra.mxu0 0.0
  %1473 = vmatprep.subr.mxu0 0.0
  %1474 = vmatpush1.msra.mxu0 0.0
  %1475 = vmatprep.subr.mxu0 0.0
  %1476 = vmatpush1.msra.mxu0 0.0
  %1477 = vmatprep.subr.mxu0 0.0
  %1478 = vmatpush1.msra.mxu0 0.0
  %1479 = vmatprep.subr.mxu0 0.0
  %1480 = vmatpush1.msra.mxu0 0.0
  %1481 = vmatprep.subr.mxu0 0.0
  %1482 = vmatpush1.msra.mxu0 0.0
  %1483 = vmatprep.subr.mxu0 0.0
  %1484 = vmatpush1.msra.mxu0 0.0
  %1485 = vmatprep.subr.mxu0 0.0
  %1486 = vmatpush1.msra.mxu0 0.0
  %1487 = vmatprep.subr.mxu0 0.0
  %1488 = vmatpush1.msra.mxu0 0.0
  %1489 = vmatprep.subr.mxu0 0.0
  %1490 = vmatpush1.msra.mxu0 0.0
  %1491 = vmatprep.subr.mxu0 0.0
  %1492 = vmatpush1.msra.mxu0 0.0
  %1493 = vmatprep.subr.mxu0 0.0
  %1494 = vmatpush1.msra.mxu0 0.0
  %1495 = vmatprep.subr.mxu0 0.0
  %1496 = vmatpush1.msra.mxu0 0.0
  %1497 = vmatprep.subr.mxu0 0.0
  %1498 = vmatpush1.msra.mxu0 0.0
  %1499 = vmatprep.subr.mxu0 0.0
  %1500 = vmatpush1.msra.mxu0 0.0
  %1501 = vmatprep.subr.mxu0 0.0
  %1502 = vmatpush1.msra.mxu0 0.0
  %1503 = vmatprep.subr.mxu0 0.0
  %1504 = vmatpush1.msra.mxu0 0.0
  %1505 = vmatprep.subr.mxu0 0.0
  %1506 = vmatpush1.msra.mxu0 0.0
  %1507 = vmatprep.subr.mxu0 0.0
  %1508 = vmatpush1.msra.mxu0 0.0
  %1509 = vmatprep.subr.mxu0 0.0
  %1510 = vmatpush1.msra.mxu0 0.0
  %1511 = vmatprep.subr.mxu0 0.0
  %1512 = vmatpush1.msra.mxu0 0.0
  %1513 = vmatprep.subr.mxu0 0.0
  %1514 = vmatpush1.msra.mxu0 0.0
  %1515 = vmatprep.subr.mxu0 0.0
  %1516 = vmatpush1.msra.mxu0 0.0
  %1517 = vmatprep.subr.mxu0 0.0
  %1518 = vmatpush1.msra.mxu0 0.0
  %1519 = vmatprep.subr.mxu0 0.0
  %1520 = vmatpush1.msra.mxu0 0.0
  %1521 = vmatprep.subr.mxu0 0.0
  %1522 = vmatpush1.msra.mxu0 0.0
  %1523 = vmatprep.subr.mxu0 0.0
  %1524 = vmatpush1.msra.mxu0 0.0
  %1525 = vmatprep.subr.mxu0 0.0
  %1526 = vmatpush1.msra.mxu0 0.0
  %1527 = vmatprep.subr.mxu0 0.0
  %1528 = vmatpush1.msra.mxu0 0.0
  %1529 = vmatprep.subr.mxu0 0.0
  %1530 = vmatpush1.msra.mxu0 0.0
  %1531 = vmatprep.subr.mxu0 0.0
  %1532 = vmatpush1.msra.mxu0 0.0
  %1533 = vmatprep.mubr.f32.mxu0 0.0
  %1534 = vmatmul.mubr.f32.gmra.mrb[0].mxu0 %v1467
  %v1535 = vpop.f32.mrb[0].mxu0
  %v1536 = vadd.f32 0.0, %v1535
  %v1537 = vpop.f32.mrb[0].mxu0
  %1538 = vdwg.mxu0
  %1539 = vrot.lane.b32.xlu0 %v1365, 112
  %v1540 = vpop.permute.xlu0 %1539
  %1541 = vrot.lane.b32.xlu0 %v1365, 80
  %v1542 = vpop.permute.xlu0 %1541
  %v1543 = vsel %vm205, %v1540, 0
  %v1545 = vsel %vm205, %v1542, 0
  %1547 = vmatprep.subr.mxu0 0.0
  %1548 = vmatpush1.xpose.msra.mxu0 %v1545
  %1549 = vmatprep.subr.mxu0 0.0
  %1550 = vmatpush1.xpose.msra.mxu0 0.0
  %1551 = vmatprep.subr.mxu0 0.0
  %1552 = vmatpush1.xpose.msra.mxu0 0.0
  %1553 = vmatprep.subr.mxu0 0.0
  %1554 = vmatpush1.xpose.msra.mxu0 0.0
  %1555 = vmatprep.subr.mxu0 0.0
  %1556 = vmatpush1.xpose.msra.mxu0 0.0
  %1557 = vmatprep.subr.mxu0 0.0
  %1558 = vmatpush1.xpose.msra.mxu0 0.0
  %1559 = vmatprep.subr.mxu0 0.0
  %1560 = vmatpush1.xpose.msra.mxu0 0.0
  %1561 = vmatprep.subr.mxu0 0.0
  %1562 = vmatpush1.xpose.msra.mxu0 0.0
  %1563 = vmatprep.subr.mxu0 0.0
  %1564 = vmatpush1.xpose.msra.mxu0 0.0
  %1565 = vmatprep.subr.mxu0 0.0
  %1566 = vmatpush1.xpose.msra.mxu0 0.0
  %1567 = vmatprep.subr.mxu0 0.0
  %1568 = vmatpush1.xpose.msra.mxu0 0.0
  %1569 = vmatprep.subr.mxu0 0.0
  %1570 = vmatpush1.xpose.msra.mxu0 0.0
  %1571 = vmatprep.subr.mxu0 0.0
  %1572 = vmatpush1.xpose.msra.mxu0 0.0
  %1573 = vmatprep.subr.mxu0 0.0
  %1574 = vmatpush1.xpose.msra.mxu0 0.0
  %1575 = vmatprep.subr.mxu0 0.0
  %1576 = vmatpush1.xpose.msra.mxu0 0.0
  %1577 = vmatprep.subr.mxu0 0.0
  %1578 = vmatpush1.xpose.msra.mxu0 0.0
  %1579 = vmatprep.subr.mxu0 0.0
  %1580 = vmatpush1.xpose.msra.mxu0 0.0
  %1581 = vmatprep.subr.mxu0 0.0
  %1582 = vmatpush1.xpose.msra.mxu0 0.0
  %1583 = vmatprep.subr.mxu0 0.0
  %1584 = vmatpush1.xpose.msra.mxu0 0.0
  %1585 = vmatprep.subr.mxu0 0.0
  %1586 = vmatpush1.xpose.msra.mxu0 0.0
  %1587 = vmatprep.subr.mxu0 0.0
  %1588 = vmatpush1.xpose.msra.mxu0 0.0
  %1589 = vmatprep.subr.mxu0 0.0
  %1590 = vmatpush1.xpose.msra.mxu0 0.0
  %1591 = vmatprep.subr.mxu0 0.0
  %1592 = vmatpush1.xpose.msra.mxu0 0.0
  %1593 = vmatprep.subr.mxu0 0.0
  %1594 = vmatpush1.xpose.msra.mxu0 0.0
  %1595 = vmatprep.subr.mxu0 0.0
  %1596 = vmatpush1.xpose.msra.mxu0 0.0
  %1597 = vmatprep.subr.mxu0 0.0
  %1598 = vmatpush1.xpose.msra.mxu0 0.0
  %1599 = vmatprep.subr.mxu0 0.0
  %1600 = vmatpush1.xpose.msra.mxu0 0.0
  %1601 = vmatprep.subr.mxu0 0.0
  %1602 = vmatpush1.xpose.msra.mxu0 0.0
  %1603 = vmatprep.subr.mxu0 0.0
  %1604 = vmatpush1.xpose.msra.mxu0 0.0
  %1605 = vmatprep.subr.mxu0 0.0
  %1606 = vmatpush1.xpose.msra.mxu0 0.0
  %1607 = vmatprep.subr.mxu0 0.0
  %1608 = vmatpush1.xpose.msra.mxu0 0.0
  %1609 = vmatprep.subr.mxu0 0.0
  %1610 = vmatpush1.xpose.msra.mxu0 0.0
  %1611 = vmatprep.mubr.f32.mxu0 0.0
  %1612 = vmatmul.mubr.f32.gmra.mrb[0].mxu0 %v1543
  %v1613 = vpop.f32.mrb[0].mxu0
  %v1614 = vadd.f32 0.0, %v1613
  %v1615 = vpop.f32.mrb[0].mxu0
  %1616 = vdwg.mxu0
  %v1617 = vmul.f32 %v1614, 0.25
  %v1618 = vadd.f32 %v1617, %v284
  %v1619 = vsel %vm286, %v1618, -inf
  %1620 = vmax.xlane.f32.xlu0 %v1619
  %v1621 = vpop.xlane.xlu0 %1620
  %v1622 = vsub.f32 %v1618, %v1621
  %v1623 = vmul.f32 %v1622, 1.442695
  %v1624 = vpow.pop %v1623
  %v1625 = vsel %vm286, %v1624, 0.0
  %1626 = vadd.xlane.f32.xlu0 %v1625
  %v1627 = vpop.xlane.xlu0 %1626
  %v1628 = vrcp.pop %v1627
  %v1629 = vmul.f32 %v1624, %v1628
  %1630 = vrot.lane.b32.xlu0 %v1365, 48
  %v1631 = vpop.permute.xlu0 %1630
  %v1634 = vsel %vm286, %v1629, 0
  %1636 = vmatprep.subr.mxu0 0.0
  %1637 = vmatpush1.msra.mxu0 %v1631
  %1638 = vmatprep.subr.mxu0 0.0
  %1639 = vmatpush1.msra.mxu0 0.0
  %1640 = vmatprep.subr.mxu0 0.0
  %1641 = vmatpush1.msra.mxu0 0.0
  %1642 = vmatprep.subr.mxu0 0.0
  %1643 = vmatpush1.msra.mxu0 0.0
  %1644 = vmatprep.subr.mxu0 0.0
  %1645 = vmatpush1.msra.mxu0 0.0
  %1646 = vmatprep.subr.mxu0 0.0
  %1647 = vmatpush1.msra.mxu0 0.0
  %1648 = vmatprep.subr.mxu0 0.0
  %1649 = vmatpush1.msra.mxu0 0.0
  %1650 = vmatprep.subr.mxu0 0.0
  %1651 = vmatpush1.msra.mxu0 0.0
  %1652 = vmatprep.subr.mxu0 0.0
  %1653 = vmatpush1.msra.mxu0 0.0
  %1654 = vmatprep.subr.mxu0 0.0
  %1655 = vmatpush1.msra.mxu0 0.0
  %1656 = vmatprep.subr.mxu0 0.0
  %1657 = vmatpush1.msra.mxu0 0.0
  %1658 = vmatprep.subr.mxu0 0.0
  %1659 = vmatpush1.msra.mxu0 0.0
  %1660 = vmatprep.subr.mxu0 0.0
  %1661 = vmatpush1.msra.mxu0 0.0
  %1662 = vmatprep.subr.mxu0 0.0
  %1663 = vmatpush1.msra.mxu0 0.0
  %1664 = vmatprep.subr.mxu0 0.0
  %1665 = vmatpush1.msra.mxu0 0.0
  %1666 = vmatprep.subr.mxu0 0.0
  %1667 = vmatpush1.msra.mxu0 0.0
  %1668 = vmatprep.subr.mxu0 0.0
  %1669 = vmatpush1.msra.mxu0 0.0
  %1670 = vmatprep.subr.mxu0 0.0
  %1671 = vmatpush1.msra.mxu0 0.0
  %1672 = vmatprep.subr.mxu0 0.0
  %1673 = vmatpush1.msra.mxu0 0.0
  %1674 = vmatprep.subr.mxu0 0.0
  %1675 = vmatpush1.msra.mxu0 0.0
  %1676 = vmatprep.subr.mxu0 0.0
  %1677 = vmatpush1.msra.mxu0 0.0
  %1678 = vmatprep.subr.mxu0 0.0
  %1679 = vmatpush1.msra.mxu0 0.0
  %1680 = vmatprep.subr.mxu0 0.0
  %1681 = vmatpush1.msra.mxu0 0.0
  %1682 = vmatprep.subr.mxu0 0.0
  %1683 = vmatpush1.msra.mxu0 0.0
  %1684 = vmatprep.subr.mxu0 0.0
  %1685 = vmatpush1.msra.mxu0 0.0
  %1686 = vmatprep.subr.mxu0 0.0
  %1687 = vmatpush1.msra.mxu0 0.0
  %1688 = vmatprep.subr.mxu0 0.0
  %1689 = vmatpush1.msra.mxu0 0.0
  %1690 = vmatprep.subr.mxu0 0.0
  %1691 = vmatpush1.msra.mxu0 0.0
  %1692 = vmatprep.subr.mxu0 0.0
  %1693 = vmatpush1.msra.mxu0 0.0
  %1694 = vmatprep.subr.mxu0 0.0
  %1695 = vmatpush1.msra.mxu0 0.0
  %1696 = vmatprep.subr.mxu0 0.0
  %1697 = vmatpush1.msra.mxu0 0.0
  %1698 = vmatprep.subr.mxu0 0.0
  %1699 = vmatpush1.msra.mxu0 0.0
  %1700 = vmatprep.mubr.f32.mxu0 0.0
  %1701 = vmatmul.mubr.f32.gmra.mrb[0].mxu0 %v1634
  %v1702 = vpop.f32.mrb[0].mxu0
  %v1703 = vadd.f32 0.0, %v1702
  %v1704 = vpop.f32.mrb[0].mxu0
  %1705 = vdwg.mxu0
  %1707 = vrot.lane.b32.xlu0 %v1703, 16
  %v1708 = vpop.permute.xlu0 %1707
  %v1710 = vsel %vm205, %v1536, %v1708
  %1712 = vrot.lane.b32.xlu0 %v1370, 96
  %v1713 = vpop.permute.xlu0 %1712
  %v1714 = vsel %vm205, %v1370, 0
  %v1716 = vsel %vm205, %v1713, 0
  %1718 = vmatprep.subr.mxu0 0.0
  %1719 = vmatpush1.xpose.msra.mxu0 %v1716
  %1720 = vmatprep.subr.mxu0 0.0
  %1721 = vmatpush1.xpose.msra.mxu0 0.0
  %1722 = vmatprep.subr.mxu0 0.0
  %1723 = vmatpush1.xpose.msra.mxu0 0.0
  %1724 = vmatprep.subr.mxu0 0.0
  %1725 = vmatpush1.xpose.msra.mxu0 0.0
  %1726 = vmatprep.subr.mxu0 0.0
  %1727 = vmatpush1.xpose.msra.mxu0 0.0
  %1728 = vmatprep.subr.mxu0 0.0
  %1729 = vmatpush1.xpose.msra.mxu0 0.0
  %1730 = vmatprep.subr.mxu0 0.0
  %1731 = vmatpush1.xpose.msra.mxu0 0.0
  %1732 = vmatprep.subr.mxu0 0.0
  %1733 = vmatpush1.xpose.msra.mxu0 0.0
  %1734 = vmatprep.subr.mxu0 0.0
  %1735 = vmatpush1.xpose.msra.mxu0 0.0
  %1736 = vmatprep.subr.mxu0 0.0
  %1737 = vmatpush1.xpose.msra.mxu0 0.0
  %1738 = vmatprep.subr.mxu0 0.0
  %1739 = vmatpush1.xpose.msra.mxu0 0.0
  %1740 = vmatprep.subr.mxu0 0.0
  %1741 = vmatpush1.xpose.msra.mxu0 0.0
  %1742 = vmatprep.subr.mxu0 0.0
  %1743 = vmatpush1.xpose.msra.mxu0 0.0
  %1744 = vmatprep.subr.mxu0 0.0
  %1745 = vmatpush1.xpose.msra.mxu0 0.0
  %1746 = vmatprep.subr.mxu0 0.0
  %1747 = vmatpush1.xpose.msra.mxu0 0.0
  %1748 = vmatprep.subr.mxu0 0.0
  %1749 = vmatpush1.xpose.msra.mxu0 0.0
  %1750 = vmatprep.subr.mxu0 0.0
  %1751 = vmatpush1.xpose.msra.mxu0 0.0
  %1752 = vmatprep.subr.mxu0 0.0
  %1753 = vmatpush1.xpose.msra.mxu0 0.0
  %1754 = vmatprep.subr.mxu0 0.0
  %1755 = vmatpush1.xpose.msra.mxu0 0.0
  %1756 = vmatprep.subr.mxu0 0.0
  %1757 = vmatpush1.xpose.msra.mxu0 0.0
  %1758 = vmatprep.subr.mxu0 0.0
  %1759 = vmatpush1.xpose.msra.mxu0 0.0
  %1760 = vmatprep.subr.mxu0 0.0
  %1761 = vmatpush1.xpose.msra.mxu0 0.0
  %1762 = vmatprep.subr.mxu0 0.0
  %1763 = vmatpush1.xpose.msra.mxu0 0.0
  %1764 = vmatprep.subr.mxu0 0.0
  %1765 = vmatpush1.xpose.msra.mxu0 0.0
  %1766 = vmatprep.subr.mxu0 0.0
  %1767 = vmatpush1.xpose.msra.mxu0 0.0
  %1768 = vmatprep.subr.mxu0 0.0
  %1769 = vmatpush1.xpose.msra.mxu0 0.0
  %1770 = vmatprep.subr.mxu0 0.0
  %1771 = vmatpush1.xpose.msra.mxu0 0.0
  %1772 = vmatprep.subr.mxu0 0.0
  %1773 = vmatpush1.xpose.msra.mxu0 0.0
  %1774 = vmatprep.subr.mxu0 0.0
  %1775 = vmatpush1.xpose.msra.mxu0 0.0
  %1776 = vmatprep.subr.mxu0 0.0
  %1777 = vmatpush1.xpose.msra.mxu0 0.0
  %1778 = vmatprep.subr.mxu0 0.0
  %1779 = vmatpush1.xpose.msra.mxu0 0.0
  %1780 = vmatprep.subr.mxu0 0.0
  %1781 = vmatpush1.xpose.msra.mxu0 0.0
  %1782 = vmatprep.mubr.f32.mxu0 0.0
  %1783 = vmatmul.mubr.f32.gmra.mrb[0].mxu0 %v1714
  %v1784 = vpop.f32.mrb[0].mxu0
  %v1785 = vadd.f32 0.0, %v1784
  %v1786 = vpop.f32.mrb[0].mxu0
  %1787 = vdwg.mxu0
  %v1788 = vmul.f32 %v1785, 0.25
  %v1789 = vadd.f32 %v1788, %v627
  %v1790 = vsel %vm286, %v1789, -inf
  %1791 = vmax.xlane.f32.xlu0 %v1790
  %v1792 = vpop.xlane.xlu0 %1791
  %v1793 = vsub.f32 %v1789, %v1792
  %v1794 = vmul.f32 %v1793, 1.442695
  %v1795 = vpow.pop %v1794
  %v1796 = vsel %vm286, %v1795, 0.0
  %1797 = vadd.xlane.f32.xlu0 %v1796
  %v1798 = vpop.xlane.xlu0 %1797
  %v1799 = vrcp.pop %v1798
  %v1800 = vmul.f32 %v1795, %v1799
  %1801 = vrot.lane.b32.xlu0 %v1370, 64
  %v1802 = vpop.permute.xlu0 %1801
  %v1805 = vsel %vm286, %v1800, 0
  %1807 = vmatprep.subr.mxu0 0.0
  %1808 = vmatpush1.msra.mxu0 %v1802
  %1809 = vmatprep.subr.mxu0 0.0
  %1810 = vmatpush1.msra.mxu0 0.0
  %1811 = vmatprep.subr.mxu0 0.0
  %1812 = vmatpush1.msra.mxu0 0.0
  %1813 = vmatprep.subr.mxu0 0.0
  %1814 = vmatpush1.msra.mxu0 0.0
  %1815 = vmatprep.subr.mxu0 0.0
  %1816 = vmatpush1.msra.mxu0 0.0
  %1817 = vmatprep.subr.mxu0 0.0
  %1818 = vmatpush1.msra.mxu0 0.0
  %1819 = vmatprep.subr.mxu0 0.0
  %1820 = vmatpush1.msra.mxu0 0.0
  %1821 = vmatprep.subr.mxu0 0.0
  %1822 = vmatpush1.msra.mxu0 0.0
  %1823 = vmatprep.subr.mxu0 0.0
  %1824 = vmatpush1.msra.mxu0 0.0
  %1825 = vmatprep.subr.mxu0 0.0
  %1826 = vmatpush1.msra.mxu0 0.0
  %1827 = vmatprep.subr.mxu0 0.0
  %1828 = vmatpush1.msra.mxu0 0.0
  %1829 = vmatprep.subr.mxu0 0.0
  %1830 = vmatpush1.msra.mxu0 0.0
  %1831 = vmatprep.subr.mxu0 0.0
  %1832 = vmatpush1.msra.mxu0 0.0
  %1833 = vmatprep.subr.mxu0 0.0
  %1834 = vmatpush1.msra.mxu0 0.0
  %1835 = vmatprep.subr.mxu0 0.0
  %1836 = vmatpush1.msra.mxu0 0.0
  %1837 = vmatprep.subr.mxu0 0.0
  %1838 = vmatpush1.msra.mxu0 0.0
  %1839 = vmatprep.subr.mxu0 0.0
  %1840 = vmatpush1.msra.mxu0 0.0
  %1841 = vmatprep.subr.mxu0 0.0
  %1842 = vmatpush1.msra.mxu0 0.0
  %1843 = vmatprep.subr.mxu0 0.0
  %1844 = vmatpush1.msra.mxu0 0.0
  %1845 = vmatprep.subr.mxu0 0.0
  %1846 = vmatpush1.msra.mxu0 0.0
  %1847 = vmatprep.subr.mxu0 0.0
  %1848 = vmatpush1.msra.mxu0 0.0
  %1849 = vmatprep.subr.mxu0 0.0
  %1850 = vmatpush1.msra.mxu0 0.0
  %1851 = vmatprep.subr.mxu0 0.0
  %1852 = vmatpush1.msra.mxu0 0.0
  %1853 = vmatprep.subr.mxu0 0.0
  %1854 = vmatpush1.msra.mxu0 0.0
  %1855 = vmatprep.subr.mxu0 0.0
  %1856 = vmatpush1.msra.mxu0 0.0
  %1857 = vmatprep.subr.mxu0 0.0
  %1858 = vmatpush1.msra.mxu0 0.0
  %1859 = vmatprep.subr.mxu0 0.0
  %1860 = vmatpush1.msra.mxu0 0.0
  %1861 = vmatprep.subr.mxu0 0.0
  %1862 = vmatpush1.msra.mxu0 0.0
  %1863 = vmatprep.subr.mxu0 0.0
  %1864 = vmatpush1.msra.mxu0 0.0
  %1865 = vmatprep.subr.mxu0 0.0
  %1866 = vmatpush1.msra.mxu0 0.0
  %1867 = vmatprep.subr.mxu0 0.0
  %1868 = vmatpush1.msra.mxu0 0.0
  %1869 = vmatprep.subr.mxu0 0.0
  %1870 = vmatpush1.msra.mxu0 0.0
  %1871 = vmatprep.mubr.f32.mxu0 0.0
  %1872 = vmatmul.mubr.f32.gmra.mrb[0].mxu0 %v1805
  %v1873 = vpop.f32.mrb[0].mxu0
  %v1874 = vadd.f32 0.0, %v1873
  %v1875 = vpop.f32.mrb[0].mxu0
  %1876 = vdwg.mxu0
  %1877 = vrot.lane.b32.xlu0 %v1370, 112
  %v1878 = vpop.permute.xlu0 %1877
  %1879 = vrot.lane.b32.xlu0 %v1370, 80
  %v1880 = vpop.permute.xlu0 %1879
  %v1881 = vsel %vm205, %v1878, 0
  %v1883 = vsel %vm205, %v1880, 0
  %1885 = vmatprep.subr.mxu0 0.0
  %1886 = vmatpush1.xpose.msra.mxu0 %v1883
  %1887 = vmatprep.subr.mxu0 0.0
  %1888 = vmatpush1.xpose.msra.mxu0 0.0
  %1889 = vmatprep.subr.mxu0 0.0
  %1890 = vmatpush1.xpose.msra.mxu0 0.0
  %1891 = vmatprep.subr.mxu0 0.0
  %1892 = vmatpush1.xpose.msra.mxu0 0.0
  %1893 = vmatprep.subr.mxu0 0.0
  %1894 = vmatpush1.xpose.msra.mxu0 0.0
  %1895 = vmatprep.subr.mxu0 0.0
  %1896 = vmatpush1.xpose.msra.mxu0 0.0
  %1897 = vmatprep.subr.mxu0 0.0
  %1898 = vmatpush1.xpose.msra.mxu0 0.0
  %1899 = vmatprep.subr.mxu0 0.0
  %1900 = vmatpush1.xpose.msra.mxu0 0.0
  %1901 = vmatprep.subr.mxu0 0.0
  %1902 = vmatpush1.xpose.msra.mxu0 0.0
  %1903 = vmatprep.subr.mxu0 0.0
  %1904 = vmatpush1.xpose.msra.mxu0 0.0
  %1905 = vmatprep.subr.mxu0 0.0
  %1906 = vmatpush1.xpose.msra.mxu0 0.0
  %1907 = vmatprep.subr.mxu0 0.0
  %1908 = vmatpush1.xpose.msra.mxu0 0.0
  %1909 = vmatprep.subr.mxu0 0.0
  %1910 = vmatpush1.xpose.msra.mxu0 0.0
  %1911 = vmatprep.subr.mxu0 0.0
  %1912 = vmatpush1.xpose.msra.mxu0 0.0
  %1913 = vmatprep.subr.mxu0 0.0
  %1914 = vmatpush1.xpose.msra.mxu0 0.0
  %1915 = vmatprep.subr.mxu0 0.0
  %1916 = vmatpush1.xpose.msra.mxu0 0.0
  %1917 = vmatprep.subr.mxu0 0.0
  %1918 = vmatpush1.xpose.msra.mxu0 0.0
  %1919 = vmatprep.subr.mxu0 0.0
  %1920 = vmatpush1.xpose.msra.mxu0 0.0
  %1921 = vmatprep.subr.mxu0 0.0
  %1922 = vmatpush1.xpose.msra.mxu0 0.0
  %1923 = vmatprep.subr.mxu0 0.0
  %1924 = vmatpush1.xpose.msra.mxu0 0.0
  %1925 = vmatprep.subr.mxu0 0.0
  %1926 = vmatpush1.xpose.msra.mxu0 0.0
  %1927 = vmatprep.subr.mxu0 0.0
  %1928 = vmatpush1.xpose.msra.mxu0 0.0
  %1929 = vmatprep.subr.mxu0 0.0
  %1930 = vmatpush1.xpose.msra.mxu0 0.0
  %1931 = vmatprep.subr.mxu0 0.0
  %1932 = vmatpush1.xpose.msra.mxu0 0.0
  %1933 = vmatprep.subr.mxu0 0.0
  %1934 = vmatpush1.xpose.msra.mxu0 0.0
  %1935 = vmatprep.subr.mxu0 0.0
  %1936 = vmatpush1.xpose.msra.mxu0 0.0
  %1937 = vmatprep.subr.mxu0 0.0
  %1938 = vmatpush1.xpose.msra.mxu0 0.0
  %1939 = vmatprep.subr.mxu0 0.0
  %1940 = vmatpush1.xpose.msra.mxu0 0.0
  %1941 = vmatprep.subr.mxu0 0.0
  %1942 = vmatpush1.xpose.msra.mxu0 0.0
  %1943 = vmatprep.subr.mxu0 0.0
  %1944 = vmatpush1.xpose.msra.mxu0 0.0
  %1945 = vmatprep.subr.mxu0 0.0
  %1946 = vmatpush1.xpose.msra.mxu0 0.0
  %1947 = vmatprep.subr.mxu0 0.0
  %1948 = vmatpush1.xpose.msra.mxu0 0.0
  %1949 = vmatprep.mubr.f32.mxu0 0.0
  %1950 = vmatmul.mubr.f32.gmra.mrb[0].mxu0 %v1881
  %v1951 = vpop.f32.mrb[0].mxu0
  %v1952 = vadd.f32 0.0, %v1951
  %v1953 = vpop.f32.mrb[0].mxu0
  %1954 = vdwg.mxu0
  %v1955 = vmul.f32 %v1952, 0.25
  %v1956 = vadd.f32 %v1955, %v627
  %v1957 = vsel %vm286, %v1956, -inf
  %1958 = vmax.xlane.f32.xlu0 %v1957
  %v1959 = vpop.xlane.xlu0 %1958
  %v1960 = vsub.f32 %v1956, %v1959
  %v1961 = vmul.f32 %v1960, 1.442695
  %v1962 = vpow.pop %v1961
  %v1963 = vsel %vm286, %v1962, 0.0
  %1964 = vadd.xlane.f32.xlu0 %v1963
  %v1965 = vpop.xlane.xlu0 %1964
  %v1966 = vrcp.pop %v1965
  %v1967 = vmul.f32 %v1962, %v1966
  %1968 = vrot.lane.b32.xlu0 %v1370, 48
  %v1969 = vpop.permute.xlu0 %1968
  %v1972 = vsel %vm286, %v1967, 0
  %1974 = vmatprep.subr.mxu0 0.0
  %1975 = vmatpush1.msra.mxu0 %v1969
  %1976 = vmatprep.subr.mxu0 0.0
  %1977 = vmatpush1.msra.mxu0 0.0
  %1978 = vmatprep.subr.mxu0 0.0
  %1979 = vmatpush1.msra.mxu0 0.0
  %1980 = vmatprep.subr.mxu0 0.0
  %1981 = vmatpush1.msra.mxu0 0.0
  %1982 = vmatprep.subr.mxu0 0.0
  %1983 = vmatpush1.msra.mxu0 0.0
  %1984 = vmatprep.subr.mxu0 0.0
  %1985 = vmatpush1.msra.mxu0 0.0
  %1986 = vmatprep.subr.mxu0 0.0
  %1987 = vmatpush1.msra.mxu0 0.0
  %1988 = vmatprep.subr.mxu0 0.0
  %1989 = vmatpush1.msra.mxu0 0.0
  %1990 = vmatprep.subr.mxu0 0.0
  %1991 = vmatpush1.msra.mxu0 0.0
  %1992 = vmatprep.subr.mxu0 0.0
  %1993 = vmatpush1.msra.mxu0 0.0
  %1994 = vmatprep.subr.mxu0 0.0
  %1995 = vmatpush1.msra.mxu0 0.0
  %1996 = vmatprep.subr.mxu0 0.0
  %1997 = vmatpush1.msra.mxu0 0.0
  %1998 = vmatprep.subr.mxu0 0.0
  %1999 = vmatpush1.msra.mxu0 0.0
  %2000 = vmatprep.subr.mxu0 0.0
  %2001 = vmatpush1.msra.mxu0 0.0
  %2002 = vmatprep.subr.mxu0 0.0
  %2003 = vmatpush1.msra.mxu0 0.0
  %2004 = vmatprep.subr.mxu0 0.0
  %2005 = vmatpush1.msra.mxu0 0.0
  %2006 = vmatprep.subr.mxu0 0.0
  %2007 = vmatpush1.msra.mxu0 0.0
  %2008 = vmatprep.subr.mxu0 0.0
  %2009 = vmatpush1.msra.mxu0 0.0
  %2010 = vmatprep.subr.mxu0 0.0
  %2011 = vmatpush1.msra.mxu0 0.0
  %2012 = vmatprep.subr.mxu0 0.0
  %2013 = vmatpush1.msra.mxu0 0.0
  %2014 = vmatprep.subr.mxu0 0.0
  %2015 = vmatpush1.msra.mxu0 0.0
  %2016 = vmatprep.subr.mxu0 0.0
  %2017 = vmatpush1.msra.mxu0 0.0
  %2018 = vmatprep.subr.mxu0 0.0
  %2019 = vmatpush1.msra.mxu0 0.0
  %2020 = vmatprep.subr.mxu0 0.0
  %2021 = vmatpush1.msra.mxu0 0.0
  %2022 = vmatprep.subr.mxu0 0.0
  %2023 = vmatpush1.msra.mxu0 0.0
  %2024 = vmatprep.subr.mxu0 0.0
  %2025 = vmatpush1.msra.mxu0 0.0
  %2026 = vmatprep.subr.mxu0 0.0
  %2027 = vmatpush1.msra.mxu0 0.0
  %2028 = vmatprep.subr.mxu0 0.0
  %2029 = vmatpush1.msra.mxu0 0.0
  %2030 = vmatprep.subr.mxu0 0.0
  %2031 = vmatpush1.msra.mxu0 0.0
  %2032 = vmatprep.subr.mxu0 0.0
  %2033 = vmatpush1.msra.mxu0 0.0
  %2034 = vmatprep.subr.mxu0 0.0
  %2035 = vmatpush1.msra.mxu0 0.0
  %2036 = vmatprep.subr.mxu0 0.0
  %2037 = vmatpush1.msra.mxu0 0.0
  %2038 = vmatprep.mubr.f32.mxu0 0.0
  %2039 = vmatmul.mubr.f32.gmra.mrb[0].mxu0 %v1972
  %v2040 = vpop.f32.mrb[0].mxu0
  %v2041 = vadd.f32 0.0, %v2040
  %v2042 = vpop.f32.mrb[0].mxu0
  %2043 = vdwg.mxu0
  %2045 = vrot.lane.b32.xlu0 %v2041, 16
  %v2046 = vpop.permute.xlu0 %2045
  %v2048 = vsel %vm205, %v1874, %v2046
  %s2049 = scalar_lea.vmem %s6, 32
  %v2050 = vld [vmem:[%s2049] sm:$0xff]
  %v2051 = vld [vmem:[%s2049 + $0x8] sm:$0xff]
  %v2052 = vld [vmem:[%s2049 + $0x10] sm:$0xff]
  %v2053 = vld [vmem:[%s2049 + $0x18] sm:$0xff]
  %s2054 = scalar_lea.vmem %s7, 1
  %v2055 = vld [vmem:[%s2054] sm:$0x1]
  %v2057 = vlaneseq
  %v2058 = vshrl.u32 %v2057, 7
  %v2059 = vsub.s32 0, %v2058
  %v2060 = vrot.slane %v2055, %v2059
  %v2063 = vsel %vm66, %v1710, 0
  %v2066 = vsel %vm66, %v2048, 0
  %2068 = vmatprep.subr.mxu0 0.0
  %2069 = vmatpush1.msra.mxu0 %v2050
  %2070 = vmatprep.subr.mxu0 0.0
  %2071 = vmatpush1.msra.mxu0 %v2051
  %2072 = vmatprep.subr.mxu0 0.0
  %2073 = vmatpush1.msra.mxu0 %v2052
  %2074 = vmatprep.subr.mxu0 0.0
  %2075 = vmatpush1.msra.mxu0 %v2053
  %2076 = vmatprep.subr.mxu0 0.0
  %2077 = vmatpush1.msra.mxu0 0.0
  %2078 = vmatprep.subr.mxu0 0.0
  %2079 = vmatpush1.msra.mxu0 0.0
  %2080 = vmatprep.subr.mxu0 0.0
  %2081 = vmatpush1.msra.mxu0 0.0
  %2082 = vmatprep.subr.mxu0 0.0
  %2083 = vmatpush1.msra.mxu0 0.0
  %2084 = vmatprep.subr.mxu0 0.0
  %2085 = vmatpush1.msra.mxu0 0.0
  %2086 = vmatprep.subr.mxu0 0.0
  %2087 = vmatpush1.msra.mxu0 0.0
  %2088 = vmatprep.subr.mxu0 0.0
  %2089 = vmatpush1.msra.mxu0 0.0
  %2090 = vmatprep.subr.mxu0 0.0
  %2091 = vmatpush1.msra.mxu0 0.0
  %2092 = vmatprep.subr.mxu0 0.0
  %2093 = vmatpush1.msra.mxu0 0.0
  %2094 = vmatprep.subr.mxu0 0.0
  %2095 = vmatpush1.msra.mxu0 0.0
  %2096 = vmatprep.subr.mxu0 0.0
  %2097 = vmatpush1.msra.mxu0 0.0
  %2098 = vmatprep.subr.mxu0 0.0
  %2099 = vmatpush1.msra.mxu0 0.0
  %2100 = vmatprep.subr.mxu0 0.0
  %2101 = vmatpush1.msra.mxu0 0.0
  %2102 = vmatprep.subr.mxu0 0.0
  %2103 = vmatpush1.msra.mxu0 0.0
  %2104 = vmatprep.subr.mxu0 0.0
  %2105 = vmatpush1.msra.mxu0 0.0
  %2106 = vmatprep.subr.mxu0 0.0
  %2107 = vmatpush1.msra.mxu0 0.0
  %2108 = vmatprep.subr.mxu0 0.0
  %2109 = vmatpush1.msra.mxu0 0.0
  %2110 = vmatprep.subr.mxu0 0.0
  %2111 = vmatpush1.msra.mxu0 0.0
  %2112 = vmatprep.subr.mxu0 0.0
  %2113 = vmatpush1.msra.mxu0 0.0
  %2114 = vmatprep.subr.mxu0 0.0
  %2115 = vmatpush1.msra.mxu0 0.0
  %2116 = vmatprep.subr.mxu0 0.0
  %2117 = vmatpush1.msra.mxu0 0.0
  %2118 = vmatprep.subr.mxu0 0.0
  %2119 = vmatpush1.msra.mxu0 0.0
  %2120 = vmatprep.subr.mxu0 0.0
  %2121 = vmatpush1.msra.mxu0 0.0
  %2122 = vmatprep.subr.mxu0 0.0
  %2123 = vmatpush1.msra.mxu0 0.0
  %2124 = vmatprep.subr.mxu0 0.0
  %2125 = vmatpush1.msra.mxu0 0.0
  %2126 = vmatprep.subr.mxu0 0.0
  %2127 = vmatpush1.msra.mxu0 0.0
  %2128 = vmatprep.subr.mxu0 0.0
  %2129 = vmatpush1.msra.mxu0 0.0
  %2130 = vmatprep.subr.mxu0 0.0
  %2131 = vmatpush1.msra.mxu0 0.0
  %2132 = vmatprep.mubr.f32.mxu0 0.0
  %2133 = vmatmul.mubr.f32.gmra.mrb[0].mxu0 %v2063
  %v2134 = vpop.f32.mrb[0].mxu0
  %v2135 = vadd.f32 %v2060, %v2134
  %v2136 = vpop.f32.mrb[0].mxu0
  %2137 = vmatprep.mubr.f32.mxu0 0.0
  %2138 = vmatmul.mubr.f32.gmra.mrb[0].mxu0 %v2066
  %v2139 = vpop.f32.mrb[0].mxu0
  %v2140 = vadd.f32 %v2060, %v2139
  %v2141 = vpop.f32.mrb[0].mxu0
  %2142 = vdwg.mxu0
  %v2143 = vadd.f32 %v1277, %v2135
  %v2144 = vadd.f32 %v1278, %v2140
  %s2145 = scalar_lea.vmem %s8, 1
  %v2146 = vld [vmem:[%s2145] sm:$0x1]
  %s2147 = scalar_lea.vmem %s9, 1
  %v2148 = vld [vmem:[%s2147] sm:$0x1]
  %v2149 = vsel %vm66, %v2143, 0.0
  %2150 = vadd.xlane.f32.xlu0 %v2149
  %v2151 = vpop.xlane.xlu0 %2150
  %v2152 = vsel %vm66, %v2144, 0.0
  %2153 = vadd.xlane.f32.xlu0 %v2152
  %v2154 = vpop.xlane.xlu0 %2153
  %v2155 = vmul.f32 %v2151, %v73
  %v2156 = vmul.f32 %v2154, %v73
  %v2157 = vsub.f32 %v2143, %v2155
  %v2158 = vsub.f32 %v2144, %v2156
  %v2159 = vmul.f32 %v2157, %v2157
  %v2160 = vmul.f32 %v2158, %v2158
  %v2161 = vsel %vm66, %v2159, 0.0
  %2162 = vadd.xlane.f32.xlu0 %v2161
  %v2163 = vpop.xlane.xlu0 %2162
  %v2164 = vsel %vm66, %v2160, 0.0
  %2165 = vadd.xlane.f32.xlu0 %v2164
  %v2166 = vpop.xlane.xlu0 %2165
  %v2167 = vmul.f32 %v2163, %v73
  %v2168 = vmul.f32 %v2166, %v73
  %v2169 = vadd.f32 %v2167, 1e-12
  %v2170 = vadd.f32 %v2168, 1e-12
  %v2171 = vrsqrt.pop %v2169
  %v2172 = vrsqrt.pop %v2170
  %v2173 = vmul.f32 %v2157, %v2171
  %v2174 = vmul.f32 %v2158, %v2172
  %v2176 = vlaneseq
  %v2177 = vshrl.u32 %v2176, 7
  %v2178 = vsub.s32 0, %v2177
  %v2179 = vrot.slane %v2146, %v2178
  %v2181 = vmul.f32 %v2173, %v2179
  %v2182 = vmul.f32 %v2174, %v2179
  %v2184 = vlaneseq
  %v2185 = vshrl.u32 %v2184, 7
  %v2186 = vsub.s32 0, %v2185
  %v2187 = vrot.slane %v2148, %v2186
  %v2189 = vadd.f32 %v2181, %v2187
  %v2190 = vadd.f32 %v2182, %v2187
  %s2191 = scalar_lea.vmem %s10, 32
  %v2192 = vld [vmem:[%s2191] sm:$0xff]
  %v2193 = vld [vmem:[%s2191 + $0x8] sm:$0xff]
  %v2194 = vld [vmem:[%s2191 + $0x10] sm:$0xff]
  %v2195 = vld [vmem:[%s2191 + $0x18] sm:$0xff]
  %s2196 = scalar_lea.vmem %s11, 1
  %v2197 = vld [vmem:[%s2196] sm:$0x1]
  %v2199 = vlaneseq
  %v2200 = vshrl.u32 %v2199, 7
  %v2201 = vsub.s32 0, %v2200
  %v2202 = vrot.slane %v2197, %v2201
  %v2205 = vsel %vm66, %v2189, 0
  %v2208 = vsel %vm66, %v2190, 0
  %2210 = vmatprep.subr.mxu0 0.0
  %2211 = vmatpush1.msra.mxu0 %v2192
  %2212 = vmatprep.subr.mxu0 0.0
  %2213 = vmatpush1.msra.mxu0 %v2193
  %2214 = vmatprep.subr.mxu0 0.0
  %2215 = vmatpush1.msra.mxu0 %v2194
  %2216 = vmatprep.subr.mxu0 0.0
  %2217 = vmatpush1.msra.mxu0 %v2195
  %2218 = vmatprep.subr.mxu0 0.0
  %2219 = vmatpush1.msra.mxu0 0.0
  %2220 = vmatprep.subr.mxu0 0.0
  %2221 = vmatpush1.msra.mxu0 0.0
  %2222 = vmatprep.subr.mxu0 0.0
  %2223 = vmatpush1.msra.mxu0 0.0
  %2224 = vmatprep.subr.mxu0 0.0
  %2225 = vmatpush1.msra.mxu0 0.0
  %2226 = vmatprep.subr.mxu0 0.0
  %2227 = vmatpush1.msra.mxu0 0.0
  %2228 = vmatprep.subr.mxu0 0.0
  %2229 = vmatpush1.msra.mxu0 0.0
  %2230 = vmatprep.subr.mxu0 0.0
  %2231 = vmatpush1.msra.mxu0 0.0
  %2232 = vmatprep.subr.mxu0 0.0
  %2233 = vmatpush1.msra.mxu0 0.0
  %2234 = vmatprep.subr.mxu0 0.0
  %2235 = vmatpush1.msra.mxu0 0.0
  %2236 = vmatprep.subr.mxu0 0.0
  %2237 = vmatpush1.msra.mxu0 0.0
  %2238 = vmatprep.subr.mxu0 0.0
  %2239 = vmatpush1.msra.mxu0 0.0
  %2240 = vmatprep.subr.mxu0 0.0
  %2241 = vmatpush1.msra.mxu0 0.0
  %2242 = vmatprep.subr.mxu0 0.0
  %2243 = vmatpush1.msra.mxu0 0.0
  %2244 = vmatprep.subr.mxu0 0.0
  %2245 = vmatpush1.msra.mxu0 0.0
  %2246 = vmatprep.subr.mxu0 0.0
  %2247 = vmatpush1.msra.mxu0 0.0
  %2248 = vmatprep.subr.mxu0 0.0
  %2249 = vmatpush1.msra.mxu0 0.0
  %2250 = vmatprep.subr.mxu0 0.0
  %2251 = vmatpush1.msra.mxu0 0.0
  %2252 = vmatprep.subr.mxu0 0.0
  %2253 = vmatpush1.msra.mxu0 0.0
  %2254 = vmatprep.subr.mxu0 0.0
  %2255 = vmatpush1.msra.mxu0 0.0
  %2256 = vmatprep.subr.mxu0 0.0
  %2257 = vmatpush1.msra.mxu0 0.0
  %2258 = vmatprep.subr.mxu0 0.0
  %2259 = vmatpush1.msra.mxu0 0.0
  %2260 = vmatprep.subr.mxu0 0.0
  %2261 = vmatpush1.msra.mxu0 0.0
  %2262 = vmatprep.subr.mxu0 0.0
  %2263 = vmatpush1.msra.mxu0 0.0
  %2264 = vmatprep.subr.mxu0 0.0
  %2265 = vmatpush1.msra.mxu0 0.0
  %2266 = vmatprep.subr.mxu0 0.0
  %2267 = vmatpush1.msra.mxu0 0.0
  %2268 = vmatprep.subr.mxu0 0.0
  %2269 = vmatpush1.msra.mxu0 0.0
  %2270 = vmatprep.subr.mxu0 0.0
  %2271 = vmatpush1.msra.mxu0 0.0
  %2272 = vmatprep.subr.mxu0 0.0
  %2273 = vmatpush1.msra.mxu0 0.0
  %2274 = vmatprep.mubr.f32.mxu0 0.0
  %2275 = vmatmul.mubr.f32.gmra.mrb[0].mxu0 %v2205
  %v2276 = vpop.f32.mrb[0].mxu0
  %v2277 = vadd.f32 %v2202, %v2276
  %v2278 = vpop.f32.mrb[0].mxu0
  %2279 = vmatprep.mubr.f32.mxu0 0.0
  %2280 = vmatmul.mubr.f32.gmra.mrb[0].mxu0 %v2208
  %v2281 = vpop.f32.mrb[0].mxu0
  %v2282 = vadd.f32 %v2202, %v2281
  %v2283 = vpop.f32.mrb[0].mxu0
  %2284 = vdwg.mxu0
  %v2285 = vmul.f32 %v2277, 0.5
  %v2286 = vmul.f32 %v2282, 0.5
  %v2287 = vmul.f32 %v2277, 0.044715
  %v2288 = vmul.f32 %v2282, 0.044715
  %v2289 = vmul.f32 %v2287, %v2277
  %v2290 = vmul.f32 %v2288, %v2282
  %v2291 = vmul.f32 %v2289, %v2277
  %v2292 = vmul.f32 %v2290, %v2282
  %v2293 = vadd.f32 %v2277, %v2291
  %v2294 = vadd.f32 %v2282, %v2292
  %v2295 = vmul.f32 %v2293, 0.7978846
  %v2296 = vmul.f32 %v2294, 0.7978846
  %v2297 = vtanh.pop %v2295
  %v2298 = vtanh.pop %v2296
  %v2299 = vadd.f32 %v2297, 1.0
  %v2300 = vadd.f32 %v2298, 1.0
  %v2301 = vmul.f32 %v2285, %v2299
  %v2302 = vmul.f32 %v2286, %v2300
  %s2303 = scalar_lea.vmem %s12, 64
  %v2304 = vld [vmem:[%s2303] sm:$0xff]
  %v2305 = vld [vmem:[%s2303 + $0x8] sm:$0xff]
  %v2306 = vld [vmem:[%s2303 + $0x10] sm:$0xff]
  %v2307 = vld [vmem:[%s2303 + $0x18] sm:$0xff]
  %v2308 = vld [vmem:[%s2303 + $0x20] sm:$0xff]
  %v2309 = vld [vmem:[%s2303 + $0x28] sm:$0xff]
  %v2310 = vld [vmem:[%s2303 + $0x30] sm:$0xff]
  %v2311 = vld [vmem:[%s2303 + $0x38] sm:$0xff]
  %s2312 = scalar_lea.vmem %s13, 1
  %v2313 = vld [vmem:[%s2312] sm:$0x1]
  %v2315 = vlaneseq
  %v2316 = vshrl.u32 %v2315, 7
  %v2317 = vsub.s32 0, %v2316
  %v2318 = vrot.slane %v2313, %v2317
  %v2321 = vsel %vm1151, %v2301, 0
  %v2324 = vsel %vm1151, %v2302, 0
  %2326 = vmatprep.subr.mxu0 0.0
  %2327 = vmatpush1.msra.mxu0 %v2304
  %2328 = vmatprep.subr.mxu0 0.0
  %2329 = vmatpush1.msra.mxu0 %v2305
  %2330 = vmatprep.subr.mxu0 0.0
  %2331 = vmatpush1.msra.mxu0 %v2306
  %2332 = vmatprep.subr.mxu0 0.0
  %2333 = vmatpush1.msra.mxu0 %v2307
  %2334 = vmatprep.subr.mxu0 0.0
  %2335 = vmatpush1.msra.mxu0 %v2308
  %2336 = vmatprep.subr.mxu0 0.0
  %2337 = vmatpush1.msra.mxu0 %v2309
  %2338 = vmatprep.subr.mxu0 0.0
  %2339 = vmatpush1.msra.mxu0 %v2310
  %2340 = vmatprep.subr.mxu0 0.0
  %2341 = vmatpush1.msra.mxu0 %v2311
  %2342 = vmatprep.subr.mxu0 0.0
  %2343 = vmatpush1.msra.mxu0 0.0
  %2344 = vmatprep.subr.mxu0 0.0
  %2345 = vmatpush1.msra.mxu0 0.0
  %2346 = vmatprep.subr.mxu0 0.0
  %2347 = vmatpush1.msra.mxu0 0.0
  %2348 = vmatprep.subr.mxu0 0.0
  %2349 = vmatpush1.msra.mxu0 0.0
  %2350 = vmatprep.subr.mxu0 0.0
  %2351 = vmatpush1.msra.mxu0 0.0
  %2352 = vmatprep.subr.mxu0 0.0
  %2353 = vmatpush1.msra.mxu0 0.0
  %2354 = vmatprep.subr.mxu0 0.0
  %2355 = vmatpush1.msra.mxu0 0.0
  %2356 = vmatprep.subr.mxu0 0.0
  %2357 = vmatpush1.msra.mxu0 0.0
  %2358 = vmatprep.subr.mxu0 0.0
  %2359 = vmatpush1.msra.mxu0 0.0
  %2360 = vmatprep.subr.mxu0 0.0
  %2361 = vmatpush1.msra.mxu0 0.0
  %2362 = vmatprep.subr.mxu0 0.0
  %2363 = vmatpush1.msra.mxu0 0.0
  %2364 = vmatprep.subr.mxu0 0.0
  %2365 = vmatpush1.msra.mxu0 0.0
  %2366 = vmatprep.subr.mxu0 0.0
  %2367 = vmatpush1.msra.mxu0 0.0
  %2368 = vmatprep.subr.mxu0 0.0
  %2369 = vmatpush1.msra.mxu0 0.0
  %2370 = vmatprep.subr.mxu0 0.0
  %2371 = vmatpush1.msra.mxu0 0.0
  %2372 = vmatprep.subr.mxu0 0.0
  %2373 = vmatpush1.msra.mxu0 0.0
  %2374 = vmatprep.subr.mxu0 0.0
  %2375 = vmatpush1.msra.mxu0 0.0
  %2376 = vmatprep.subr.mxu0 0.0
  %2377 = vmatpush1.msra.mxu0 0.0
  %2378 = vmatprep.subr.mxu0 0.0
  %2379 = vmatpush1.msra.mxu0 0.0
  %2380 = vmatprep.subr.mxu0 0.0
  %2381 = vmatpush1.msra.mxu0 0.0
  %2382 = vmatprep.subr.mxu0 0.0
  %2383 = vmatpush1.msra.mxu0 0.0
  %2384 = vmatprep.subr.mxu0 0.0
  %2385 = vmatpush1.msra.mxu0 0.0
  %2386 = vmatprep.subr.mxu0 0.0
  %2387 = vmatpush1.msra.mxu0 0.0
  %2388 = vmatprep.subr.mxu0 0.0
  %2389 = vmatpush1.msra.mxu0 0.0
  %2390 = vmatprep.mubr.f32.mxu0 0.0
  %2391 = vmatmul.mubr.f32.gmra.mrb[0].mxu0 %v2321
  %v2392 = vpop.f32.mrb[0].mxu0
  %v2393 = vadd.f32 %v2318, %v2392
  %v2394 = vpop.f32.mrb[0].mxu0
  %2395 = vmatprep.mubr.f32.mxu0 0.0
  %2396 = vmatmul.mubr.f32.gmra.mrb[0].mxu0 %v2324
  %v2397 = vpop.f32.mrb[0].mxu0
  %v2398 = vadd.f32 %v2318, %v2397
  %v2399 = vpop.f32.mrb[0].mxu0
  %2400 = vdwg.mxu0
  %v2401 = vadd.f32 %v2189, %v2393
  %v2402 = vadd.f32 %v2190, %v2398
  %s2403 = scalar_lea.vmem %s14, 1
  %v2404 = vld [vmem:[%s2403] sm:$0x1]
  %s2405 = scalar_lea.vmem %s15, 1
  %v2406 = vld [vmem:[%s2405] sm:$0x1]
  %v2407 = vsel %vm66, %v2401, 0.0
  %2408 = vadd.xlane.f32.xlu0 %v2407
  %v2409 = vpop.xlane.xlu0 %2408
  %v2410 = vsel %vm66, %v2402, 0.0
  %2411 = vadd.xlane.f32.xlu0 %v2410
  %v2412 = vpop.xlane.xlu0 %2411
  %v2413 = vmul.f32 %v2409, %v73
  %v2414 = vmul.f32 %v2412, %v73
  %v2415 = vsub.f32 %v2401, %v2413
  %v2416 = vsub.f32 %v2402, %v2414
  %v2417 = vmul.f32 %v2415, %v2415
  %v2418 = vmul.f32 %v2416, %v2416
  %v2419 = vsel %vm66, %v2417, 0.0
  %2420 = vadd.xlane.f32.xlu0 %v2419
  %v2421 = vpop.xlane.xlu0 %2420
  %v2422 = vsel %vm66, %v2418, 0.0
  %2423 = vadd.xlane.f32.xlu0 %v2422
  %v2424 = vpop.xlane.xlu0 %2423
  %v2425 = vmul.f32 %v2421, %v73
  %v2426 = vmul.f32 %v2424, %v73
  %v2427 = vadd.f32 %v2425, 1e-12
  %v2428 = vadd.f32 %v2426, 1e-12
  %v2429 = vrsqrt.pop %v2427
  %v2430 = vrsqrt.pop %v2428
  %v2431 = vmul.f32 %v2415, %v2429
  %v2432 = vmul.f32 %v2416, %v2430
  %v2434 = vlaneseq
  %v2435 = vshrl.u32 %v2434, 7
  %v2436 = vsub.s32 0, %v2435
  %v2437 = vrot.slane %v2404, %v2436
  %v2439 = vmul.f32 %v2431, %v2437
  %v2440 = vmul.f32 %v2432, %v2437
  %v2442 = vlaneseq
  %v2443 = vshrl.u32 %v2442, 7
  %v2444 = vsub.s32 0, %v2443
  %v2445 = vrot.slane %v2406, %v2444
  %v2447 = vadd.f32 %v2439, %v2445
  %v2448 = vadd.f32 %v2440, %v2445
  %v2450 = vrot.slane %v2448, 7
  %vm2452 = vcmask 1040384
  %v2453 = vsel %vm2452, %v2447, %v2450
  %v2454 = vld [vmem:[%s16] sm:$0xff]
  %v2455 = vld [vmem:[%s16 + $0x8] sm:$0xff]
  %v2456 = vld [vmem:[%s16 + $0x10] sm:$0xff]
  %v2457 = vld [vmem:[%s16 + $0x18] sm:$0xff]
  %v2458 = vld [vmem:[#allocation2] sm:$0x1]
  %v2460 = vlaneseq
  %v2461 = vshrl.u32 %v2460, 7
  %v2462 = vsub.s32 0, %v2461
  %v2463 = vrot.slane %v2458, %v2462
  %v2466 = vsel %vm66, %v2453, 0
  %2468 = vmatprep.subr.mxu0 0.0
  %2469 = vmatpush1.msra.mxu0 %v2454
  %2470 = vmatprep.subr.mxu0 0.0
  %2471 = vmatpush1.msra.mxu0 %v2455
  %2472 = vmatprep.subr.mxu0 0.0
  %2473 = vmatpush1.msra.mxu0 %v2456
  %2474 = vmatprep.subr.mxu0 0.0
  %2475 = vmatpush1.msra.mxu0 %v2457
  %2476 = vmatprep.subr.mxu0 0.0
  %2477 = vmatpush1.msra.mxu0 0.0
  %2478 = vmatprep.subr.mxu0 0.0
  %2479 = vmatpush1.msra.mxu0 0.0
  %2480 = vmatprep.subr.mxu0 0.0
  %2481 = vmatpush1.msra.mxu0 0.0
  %2482 = vmatprep.subr.mxu0 0.0
  %2483 = vmatpush1.msra.mxu0 0.0
  %2484 = vmatprep.subr.mxu0 0.0
  %2485 = vmatpush1.msra.mxu0 0.0
  %2486 = vmatprep.subr.mxu0 0.0
  %2487 = vmatpush1.msra.mxu0 0.0
  %2488 = vmatprep.subr.mxu0 0.0
  %2489 = vmatpush1.msra.mxu0 0.0
  %2490 = vmatprep.subr.mxu0 0.0
  %2491 = vmatpush1.msra.mxu0 0.0
  %2492 = vmatprep.subr.mxu0 0.0
  %2493 = vmatpush1.msra.mxu0 0.0
  %2494 = vmatprep.subr.mxu0 0.0
  %2495 = vmatpush1.msra.mxu0 0.0
  %2496 = vmatprep.subr.mxu0 0.0
  %2497 = vmatpush1.msra.mxu0 0.0
  %2498 = vmatprep.subr.mxu0 0.0
  %2499 = vmatpush1.msra.mxu0 0.0
  %2500 = vmatprep.subr.mxu0 0.0
  %2501 = vmatpush1.msra.mxu0 0.0
  %2502 = vmatprep.subr.mxu0 0.0
  %2503 = vmatpush1.msra.mxu0 0.0
  %2504 = vmatprep.subr.mxu0 0.0
  %2505 = vmatpush1.msra.mxu0 0.0
  %2506 = vmatprep.subr.mxu0 0.0
  %2507 = vmatpush1.msra.mxu0 0.0
  %2508 = vmatprep.subr.mxu0 0.0
  %2509 = vmatpush1.msra.mxu0 0.0
  %2510 = vmatprep.subr.mxu0 0.0
  %2511 = vmatpush1.msra.mxu0 0.0
  %2512 = vmatprep.subr.mxu0 0.0
  %2513 = vmatpush1.msra.mxu0 0.0
  %2514 = vmatprep.subr.mxu0 0.0
  %2515 = vmatpush1.msra.mxu0 0.0
  %2516 = vmatprep.subr.mxu0 0.0
  %2517 = vmatpush1.msra.mxu0 0.0
  %2518 = vmatprep.subr.mxu0 0.0
  %2519 = vmatpush1.msra.mxu0 0.0
  %2520 = vmatprep.subr.mxu0 0.0
  %2521 = vmatpush1.msra.mxu0 0.0
  %2522 = vmatprep.subr.mxu0 0.0
  %2523 = vmatpush1.msra.mxu0 0.0
  %2524 = vmatprep.subr.mxu0 0.0
  %2525 = vmatpush1.msra.mxu0 0.0
  %2526 = vmatprep.subr.mxu0 0.0
  %2527 = vmatpush1.msra.mxu0 0.0
  %2528 = vmatprep.subr.mxu0 0.0
  %2529 = vmatpush1.msra.mxu0 0.0
  %2530 = vmatprep.subr.mxu0 0.0
  %2531 = vmatpush1.msra.mxu0 0.0
  %2532 = vmatprep.mubr.f32.mxu0 0.0
  %2533 = vmatmul.mubr.f32.gmra.mrb[0].mxu0 %v2466
  %v2534 = vpop.f32.mrb[0].mxu0
  %v2535 = vadd.f32 %v2463, %v2534
  %v2536 = vpop.f32.mrb[0].mxu0
  %2537 = vdwg.mxu0
  %vm2538 = vcmask 1024
  %2539 = vst.msk [vmem:[%s18] sm:$0x3] %vm2538, %v2535
  // Predicated region
  $region74: #{regression_model_forward.1} parent=0 // pred_check
    _
  $region75: #{regression_model_forward.1} parent=0 // pred_check_branch
    %2541 = sbr.rel (0) target = $region77
  $region76: #{regression_model_forward.1} parent=0 // pred_region
    _
  $region77: #{regression_model_forward.1} parent=0 // pred_fallthru
    _
  // Predicated region
  $region78: #{regression_model_forward.1} parent=0 // pred_check
    _
  $region79: #{regression_model_forward.1} parent=0 // pred_check_branch
    %2543 = sbr.rel (0) target = $region81
  $region80: #{regression_model_forward.1} parent=0 // pred_region
    _
  $region81: #{regression_model_forward.1} parent=0 // pred_fallthru
    _

</llo_original>
